<compile_context>
chip_gen: v7x
topology: tpu7x:2x2x1
jax: 0.10.0
libtpu: 0.0.40
codegen_flags: <defaults>
</compile_context>

<pallas_src>
import functools

import jax
import jax.numpy as jnp
from jax.experimental import pallas as pl
from jax.experimental.pallas import tpu as pltpu


def bottleneck_transformer_kernel(x_ref, w1_ref, b1_ref, wqkv_ref, bqkv_ref,
                                  o_ref, *, heads, n_valid):
    """One image per grid step.  Lane axis = Np (= H*W padded to a 128 multiple)."""
    x = x_ref[0]                                           # (C1, Np) bf16
    _, Np = x.shape

    # ---- cv1: folded 1x1 conv + BN (bf16 MXU inputs, f32 accum) + SiLU (f32)
    y = jnp.dot(w1_ref[...], x, preferred_element_type=jnp.float32) + b1_ref[...]
    y = y * jax.nn.sigmoid(y)                              # (C_, Np) f32

    # ---- fused q/k/v 1x1 projections: one (3*C2, C_) x (C_, Np) matmul
    qkv = jnp.dot(wqkv_ref[...], y.astype(jnp.bfloat16),
                  preferred_element_type=jnp.float32) + bqkv_ref[...]   # (3C2, Np)
    C2 = wqkv_ref.shape[0] // 3
    d = C2 // heads

    # per-head split: leading-dim reshapes only (lane layout untouched)
    q = qkv[0 * C2:1 * C2].reshape(heads, d, Np)
    k = qkv[1 * C2:2 * C2].reshape(heads, d, Np)
    v = qkv[2 * C2:3 * C2].reshape(heads, d, Np)

    # ---- energy on the MXU, batched over heads: e[h,i,j] = sum_d q[h,d,i]*k[h,d,j]
    qT = jnp.swapaxes(q, 1, 2).astype(jnp.bfloat16)        # (heads, Np, d)
    e = jnp.einsum('hid,hdj->hij', qT, k.astype(jnp.bfloat16),
                   preferred_element_type=jnp.float32)     # (heads, Np, Np) f32

    if n_valid < Np:
        # padded key columns must not receive any attention mass
        col = jax.lax.broadcasted_iota(jnp.int32, (1, 1, Np), 2)
        e = jnp.where(col < n_valid, e, jnp.float32(-1e30))

    # ---- softmax over keys (f32); EUP approx reciprocal instead of a VALU divide
    e = e - jnp.max(e, axis=-1, keepdims=True)
    p = jnp.exp(e)
    attn = p * pl.reciprocal(jnp.sum(p, axis=-1, keepdims=True), approx=True)

    # ---- out[h,d,i] = sum_j v[h,d,j] * attn[h,i,j]       (MXU, K = Np)
    out = jnp.einsum('hdj,hij->hdi', v.astype(jnp.bfloat16),
                     attn.astype(jnp.bfloat16),
                     preferred_element_type=jnp.float32)   # (heads, d, Np)
    out = out.reshape(C2, Np)

    # ---- residual shortcut (c1 == c2, stride == 1); single lane-dense f32 store
    o_ref[0] = x.astype(jnp.float32) + out
    # TODO(synk): for large N (when heads*N*N f32 scores approach v7x's 64 MiB
    # VMEM) tile the query axis flash-style with online-softmax scratch.


def bottleneck_transformer(x, params, *, heads=4):
    """x: (B, C1, H, W) float32 NCHW (PyTorch layout). Returns (B, C2, H, W) f32."""
    B, C1, H, W = x.shape
    N = H * W
    C2 = params['wqkv'].shape[0] // 3
    assert C1 == C2, "this config uses the plain residual shortcut (c1 == c2)"
    assert C2 % heads == 0

    # Lane axis = N, padded to a multiple of 128 (full vregs, unmasked stores).
    Np = ((N + 127) // 128) * 128
    x_l = x.reshape(B, C1, N).astype(jnp.bfloat16)         # free reshape, bf16 DMA
    if Np != N:
        x_l = jnp.pad(x_l, ((0, 0), (0, 0), (0, Np - N)))

    w1 = params['w1'].astype(jnp.bfloat16)
    wqkv = params['wqkv'].astype(jnp.bfloat16)
    b1 = params['b1'].astype(jnp.float32)
    bqkv = params['bqkv'].astype(jnp.float32)

    kernel = functools.partial(bottleneck_transformer_kernel,
                               heads=heads, n_valid=N)

    # advisory cost estimate so XLA can schedule neighbours around the call
    flops = B * (2 * C2 * C1 * Np + 2 * (3 * C2) * C2 * Np + 4 * C2 * Np * Np)
    transcendentals = B * (C2 * Np + heads * Np * Np)
    bytes_accessed = (x_l.size * 2 + B * C2 * Np * 4
                      + w1.size * 2 + wqkv.size * 2 + b1.size * 4 + bqkv.size * 4)

    out_l = pl.pallas_call(
        kernel,
        out_shape=jax.ShapeDtypeStruct((B, C2, Np), jnp.float32),
        grid_spec=pltpu.PrefetchScalarGridSpec(
            num_scalar_prefetch=0,
            grid=(B,),                                     # >= 2 parallel steps (v7x)
            in_specs=[
                pl.BlockSpec((1, C1, Np), lambda b: (b, 0, 0)),   # one image / step
                pl.BlockSpec(w1.shape, lambda b: (0, 0)),         # resident weights
                pl.BlockSpec(b1.shape, lambda b: (0, 0)),
                pl.BlockSpec(wqkv.shape, lambda b: (0, 0)),
                pl.BlockSpec(bqkv.shape, lambda b: (0, 0)),
            ],
            out_specs=pl.BlockSpec((1, C2, Np), lambda b: (b, 0, 0)),
        ),
        compiler_params=pltpu.CompilerParams(
            dimension_semantics=("parallel",),
            vmem_limit_bytes=64 * 1024 * 1024,   # headroom over 16/32 MiB defaults
        ),
        cost_estimate=pl.CostEstimate(flops=flops,
                                      transcendentals=transcendentals,
                                      bytes_accessed=bytes_accessed),
    )(x_l, w1, b1, wqkv, bqkv)

    out = out_l[:, :, :N].reshape(B, C2, H, W)
    return out
    # TODO(synk): for very small C and N (kernel work << 0.35us/step) several
    # images could be lane-folded into one grid step; kept at one image/step so
    # the batch axis stays >= 2 parallel steps on v7x with no static unroll.


def make_params(key, c1, c2, eps=1e-5):
    """Deterministic synthetic parameters; BN (inference mode) folded into cv1."""
    ks = jax.random.split(key, 10)
    conv_w = 0.2 * jax.random.normal(ks[0], (c2, c1), jnp.float32)      # cv1.conv (1x1, no bias)
    gamma = 1.0 + 0.1 * jax.random.normal(ks[1], (c2,), jnp.float32)    # cv1.bn weight
    beta = 0.1 * jax.random.normal(ks[2], (c2,), jnp.float32)           # cv1.bn bias
    mean = 0.1 * jax.random.normal(ks[3], (c2,), jnp.float32)           # running_mean
    var = jnp.abs(jax.random.normal(ks[4], (c2,), jnp.float32)) + 0.5   # running_var

    wq = 0.2 * jax.random.normal(ks[5], (c2, c2), jnp.float32)
    wk = 0.2 * jax.random.normal(ks[6], (c2, c2), jnp.float32)
    wv = 0.2 * jax.random.normal(ks[7], (c2, c2), jnp.float32)
    bq = 0.1 * jax.random.normal(ks[8], (c2,), jnp.float32)
    bk = 0.1 * jax.random.normal(ks[9], (c2,), jnp.float32)
    bv = jnp.zeros((c2,), jnp.float32)

    # fold BN into the 1x1 conv: y = scale * (W x) + (beta - scale * mean)
    scale = gamma / jnp.sqrt(var + eps)
    w1 = scale[:, None] * conv_w
    b1 = (beta - scale * mean)[:, None]

    # fuse q/k/v projections into a single matmul (per-head channel order preserved)
    wqkv = jnp.concatenate([wq, wk, wv], axis=0)              # (3*c2, c2)
    bqkv = jnp.concatenate([bq, bk, bv], axis=0)[:, None]     # (3*c2, 1)

    raw = dict(conv_w=conv_w, gamma=gamma, beta=beta, mean=mean, var=var,
               wq=wq, wk=wk, wv=wv, bq=bq, bk=bk, bv=bv, eps=eps)
    folded = dict(w1=w1, b1=b1, wqkv=wqkv, bqkv=bqkv)
    return folded, raw


def reference(x, raw, *, heads=4):
    """Pure-JAX f32 reproduction of the PyTorch forward (BN in eval mode)."""
    B, C1, H, W = x.shape
    N = H * W
    xf = x.reshape(B, C1, N)
    y = jnp.einsum('oc,bcn->bon', raw['conv_w'], xf, precision='highest')
    y = (y - raw['mean'][None, :, None]) / jnp.sqrt(raw['var'] + raw['eps'])[None, :, None]
    y = y * raw['gamma'][None, :, None] + raw['beta'][None, :, None]
    y = y * jax.nn.sigmoid(y)
    q = jnp.einsum('oc,bcn->bon', raw['wq'], y, precision='highest') + raw['bq'][None, :, None]
    k = jnp.einsum('oc,bcn->bon', raw['wk'], y, precision='highest') + raw['bk'][None, :, None]
    v = jnp.einsum('oc,bcn->bon', raw['wv'], y, precision='highest') + raw['bv'][None, :, None]
    C = q.shape[1]
    d = C // heads
    q = q.reshape(B, heads, d, N)
    k = k.reshape(B, heads, d, N)
    v = v.reshape(B, heads, d, N)
    energy = jnp.einsum('bhdi,bhdj->bhij', q, k, precision='highest')
    attn = jax.nn.softmax(energy, axis=-1)
    out = jnp.einsum('bhdj,bhij->bhdi', v, attn, precision='highest').reshape(B, C, N)
    return x + out.reshape(B, C, H, W)


if __name__ == "__main__":
    heads = 4
    C = 32                                     # c1 == c2 == 32, d = 8

    key = jax.random.PRNGKey(0)
    kx1, kx2, kp = jax.random.split(key, 3)
    params, raw = make_params(kp, C, C)

    # Primary path: N = H*W = 256 is a multiple of 128 -> no padding, grid over batch.
    x1 = jax.random.normal(kx1, (4, C, 16, 16), jnp.float32)
    out1 = jax.block_until_ready(bottleneck_transformer(x1, params, heads=heads))
    ref1 = reference(x1, raw, heads=heads)
    assert out1.shape == x1.shape
    err1 = jnp.max(jnp.abs(out1 - ref1))
    # tolerance loosened (bf16 matmul inputs / bf16 x DMA, approx reciprocal softmax)
    assert jnp.allclose(out1, ref1, atol=5e-2, rtol=5e-2), f"max err {err1}"

    # Lane-sparse path: N = 64 -> padded to 128 lanes with masked softmax key columns.
    x2 = jax.random.normal(kx2, (2, C, 8, 8), jnp.float32)
    out2 = jax.block_until_ready(bottleneck_transformer(x2, params, heads=heads))
    ref2 = reference(x2, raw, heads=heads)
    assert out2.shape == x2.shape
    err2 = jnp.max(jnp.abs(out2 - ref2))
    assert jnp.allclose(out2, ref2, atol=5e-2, rtol=5e-2), f"max err {err2}"

    print("KERNEL_OK")
</pallas_src>

<mosaic_0001>
module attributes {stable_mosaic.version = 11 : i64} {
  func.func @bottleneck_transformer_kernel(%arg0: i32, %arg1: memref<1x32x256xbf16, #tpu.memory_space<vmem>>, %arg2: memref<32x32xbf16, #tpu.memory_space<vmem>>, %arg3: memref<32x1xf32, #tpu.memory_space<vmem>>, %arg4: memref<96x32xbf16, #tpu.memory_space<vmem>>, %arg5: memref<96x1xf32, #tpu.memory_space<vmem>>, %arg6: memref<1x32x256xf32, #tpu.memory_space<vmem>>) attributes {dimension_semantics = [#tpu.dimension_semantics<parallel>], iteration_bounds = array<i64: 4>, scalar_prefetch = 0 : i64, scratch_operands = 0 : i64, tpu.core_type = #tpu.core_type<tc>, window_params = [{transform_indices = @transform_0, window_bounds = array<i64: 1, 32, 256>}, {pipeline_mode = #tpu.pipeline_mode<synchronous>, transform_indices = @transform_1, window_bounds = array<i64: 32, 32>}, {pipeline_mode = #tpu.pipeline_mode<synchronous>, transform_indices = @transform_2, window_bounds = array<i64: 32, 1>}, {pipeline_mode = #tpu.pipeline_mode<synchronous>, transform_indices = @transform_3, window_bounds = array<i64: 96, 32>}, {pipeline_mode = #tpu.pipeline_mode<synchronous>, transform_indices = @transform_4, window_bounds = array<i64: 96, 1>}, {transform_indices = @transform_5, window_bounds = array<i64: 1, 32, 256>}]} {
    %c0 = arith.constant 0 : index
    %c0_0 = arith.constant 0 : index
    %c0_1 = arith.constant 0 : index
    %0 = vector.load %arg1[%c0, %c0_0, %c0_1] : memref<1x32x256xbf16, #tpu.memory_space<vmem>>, vector<1x32x256xbf16>
    %1 = vector.shape_cast %0 : vector<1x32x256xbf16> to vector<32x256xbf16>
    %c0_2 = arith.constant 0 : index
    %c0_3 = arith.constant 0 : index
    %2 = vector.load %arg2[%c0_2, %c0_3] : memref<32x32xbf16, #tpu.memory_space<vmem>>, vector<32x32xbf16>
    %cst = arith.constant dense<0.000000e+00> : vector<32x256xf32>
    %3 = tpu.matmul %2, %1, %cst {dimension_numbers = #tpu.dot_dimension_numbers<[1], [0], [0], [1], [0, 0, 1, 1], [], []>} : vector<32x32xbf16>, vector<32x256xbf16>, vector<32x256xf32> -> vector<32x256xf32>
    %c0_4 = arith.constant 0 : index
    %c0_5 = arith.constant 0 : index
    %4 = vector.load %arg3[%c0_4, %c0_5] : memref<32x1xf32, #tpu.memory_space<vmem>>, vector<32x1xf32>
    %5 = vector.broadcast %4 : vector<32x1xf32> to vector<32x256xf32>
    %6 = arith.addf %3, %5 : vector<32x256xf32>
    %7 = arith.negf %6 : vector<32x256xf32>
    %8 = math.exp %7 : vector<32x256xf32>
    %cst_6 = arith.constant 1.000000e+00 : f32
    %9 = vector.broadcast %cst_6 : f32 to vector<32x256xf32>
    %10 = arith.addf %9, %8 : vector<32x256xf32>
    %11 = arith.divf %9, %10 : vector<32x256xf32>
    %12 = arith.mulf %6, %11 : vector<32x256xf32>
    %c0_7 = arith.constant 0 : index
    %c0_8 = arith.constant 0 : index
    %13 = vector.load %arg4[%c0_7, %c0_8] : memref<96x32xbf16, #tpu.memory_space<vmem>>, vector<96x32xbf16>
    %14 = arith.truncf %12 : vector<32x256xf32> to vector<32x256xbf16>
    %cst_9 = arith.constant dense<0.000000e+00> : vector<96x256xf32>
    %15 = tpu.matmul %13, %14, %cst_9 {dimension_numbers = #tpu.dot_dimension_numbers<[1], [0], [0], [1], [0, 0, 1, 1], [], []>} : vector<96x32xbf16>, vector<32x256xbf16>, vector<96x256xf32> -> vector<96x256xf32>
    %c0_10 = arith.constant 0 : index
    %c0_11 = arith.constant 0 : index
    %16 = vector.load %arg5[%c0_10, %c0_11] : memref<96x1xf32, #tpu.memory_space<vmem>>, vector<96x1xf32>
    %17 = vector.broadcast %16 : vector<96x1xf32> to vector<96x256xf32>
    %18 = arith.addf %15, %17 : vector<96x256xf32>
    %19 = vector.extract_strided_slice %18 {offsets = [0, 0], sizes = [32, 256], strides = [1, 1]} : vector<96x256xf32> to vector<32x256xf32>
    %20 = vector.shape_cast %19 : vector<32x256xf32> to vector<4x8x256xf32>
    %21 = vector.extract_strided_slice %18 {offsets = [32, 0], sizes = [32, 256], strides = [1, 1]} : vector<96x256xf32> to vector<32x256xf32>
    %22 = vector.shape_cast %21 : vector<32x256xf32> to vector<4x8x256xf32>
    %23 = vector.extract_strided_slice %18 {offsets = [64, 0], sizes = [32, 256], strides = [1, 1]} : vector<96x256xf32> to vector<32x256xf32>
    %24 = vector.shape_cast %23 : vector<32x256xf32> to vector<4x8x256xf32>
    %25 = tpu.transpose %20, [0, 2, 1] : vector<4x8x256xf32> -> vector<4x256x8xf32>
    %26 = arith.truncf %25 : vector<4x256x8xf32> to vector<4x256x8xbf16>
    %27 = arith.truncf %22 : vector<4x8x256xf32> to vector<4x8x256xbf16>
    "tpu.trace_start"() <{level = 10 : i32, message = "hid,hdj->hij"}> : () -> ()
    %cst_12 = arith.constant dense<0.000000e+00> : vector<4x256x256xf32>
    %28 = tpu.matmul %26, %27, %cst_12 {dimension_numbers = #tpu.dot_dimension_numbers<[2], [1], [1], [2], [0, 0, 0, 1, 1, 2], [0], [0]>} : vector<4x256x8xbf16>, vector<4x8x256xbf16>, vector<4x256x256xf32> -> vector<4x256x256xf32>
    "tpu.trace_stop"() : () -> ()
    %cst_13 = arith.constant dense<0xFF800000> : vector<4x256xf32>
    %29 = vector.multi_reduction <maximumf>, %28, %cst_13 [2] : vector<4x256x256xf32> to vector<4x256xf32>
    %30 = vector.shape_cast %29 : vector<4x256xf32> to vector<4x256x1xf32>
    %31 = vector.broadcast %30 : vector<4x256x1xf32> to vector<4x256x256xf32>
    %32 = arith.subf %28, %31 : vector<4x256x256xf32>
    %33 = math.exp %32 : vector<4x256x256xf32>
    %cst_14 = arith.constant dense<0.000000e+00> : vector<4x256xf32>
    %34 = vector.multi_reduction <add>, %33, %cst_14 [2] : vector<4x256x256xf32> to vector<4x256xf32>
    %35 = vector.shape_cast %34 : vector<4x256xf32> to vector<4x256x1xf32>
    %36 = tpu.reciprocal %35 {approx = true} : vector<4x256x1xf32> -> vector<4x256x1xf32>
    %37 = vector.broadcast %36 : vector<4x256x1xf32> to vector<4x256x256xf32>
    %38 = arith.mulf %33, %37 : vector<4x256x256xf32>
    %39 = arith.truncf %24 : vector<4x8x256xf32> to vector<4x8x256xbf16>
    %40 = arith.truncf %38 : vector<4x256x256xf32> to vector<4x256x256xbf16>
    "tpu.trace_start"() <{level = 10 : i32, message = "hdj,hij->hdi"}> : () -> ()
    %cst_15 = arith.constant dense<0.000000e+00> : vector<4x8x256xf32>
    %41 = tpu.matmul %39, %40, %cst_15 {dimension_numbers = #tpu.dot_dimension_numbers<[2], [2], [1], [1], [0, 0, 0, 1, 1, 1], [0], [0]>} : vector<4x8x256xbf16>, vector<4x256x256xbf16>, vector<4x8x256xf32> -> vector<4x8x256xf32>
    "tpu.trace_stop"() : () -> ()
    %42 = vector.shape_cast %41 : vector<4x8x256xf32> to vector<32x256xf32>
    %43 = arith.extf %1 : vector<32x256xbf16> to vector<32x256xf32>
    %44 = arith.addf %43, %42 : vector<32x256xf32>
    %c0_16 = arith.constant 0 : index
    %c0_17 = arith.constant 0 : index
    %c0_18 = arith.constant 0 : index
    %45 = vector.load %arg6[%c0_16, %c0_17, %c0_18] : memref<1x32x256xf32, #tpu.memory_space<vmem>>, vector<1x32x256xf32>
    %46 = vector.shape_cast %45 : vector<1x32x256xf32> to vector<32x256xf32>
    %47 = vector.shape_cast %44 : vector<32x256xf32> to vector<1x32x256xf32>
    tpu.vector_store %arg6[%c0_16, %c0_17, %c0_18], %47 {strides = array<i32>} : memref<1x32x256xf32, #tpu.memory_space<vmem>>, vector<1x32x256xf32>,
    return
  }
  func.func @transform_0(%arg0: i32) -> (i32, i32, i32) {
    %c0_i32 = arith.constant 0 : i32
    %c0_i32_0 = arith.constant 0 : i32
    %c0_i32_1 = arith.constant 0 : i32
    return %arg0, %c0_i32, %c0_i32_0 : i32, i32, i32
  }
  func.func @transform_1(%arg0: i32) -> (i32, i32) {
    %c0_i32 = arith.constant 0 : i32
    %c0_i32_0 = arith.constant 0 : i32
    %c0_i32_1 = arith.constant 0 : i32
    return %c0_i32, %c0_i32_0 : i32, i32
  }
  func.func @transform_2(%arg0: i32) -> (i32, i32) {
    %c0_i32 = arith.constant 0 : i32
    %c0_i32_0 = arith.constant 0 : i32
    %c0_i32_1 = arith.constant 0 : i32
    return %c0_i32, %c0_i32_0 : i32, i32
  }
  func.func @transform_3(%arg0: i32) -> (i32, i32) {
    %c0_i32 = arith.constant 0 : i32
    %c0_i32_0 = arith.constant 0 : i32
    %c0_i32_1 = arith.constant 0 : i32
    return %c0_i32, %c0_i32_0 : i32, i32
  }
  func.func @transform_4(%arg0: i32) -> (i32, i32) {
    %c0_i32 = arith.constant 0 : i32
    %c0_i32_0 = arith.constant 0 : i32
    %c0_i32_1 = arith.constant 0 : i32
    return %c0_i32, %c0_i32_0 : i32, i32
  }
  func.func @transform_5(%arg0: i32) -> (i32, i32, i32) {
    %c0_i32 = arith.constant 0 : i32
    %c0_i32_0 = arith.constant 0 : i32
    %c0_i32_1 = arith.constant 0 : i32
    return %arg0, %c0_i32, %c0_i32_0 : i32, i32, i32
  }
}

</mosaic_0001>

<llo_original>
// kernel: tpu_custom_call.1
$region0: #{tpu_custom_call.1}
  #allocation0 [shape = 'u32[]', space=smem, size = 0x4, offset = 0x4, fixed_abs, tag = 'smem constant byte address 0x4 - core index']
  #allocation1 [shape = 'u32[144,128]{1,0:T(1,128)}', space=vmem, size = 0x12000, scoped, tag = 'internal scratch']
  %s0 = inlined_call_operand.hbm [shape: bf16[4,32,256], index: 0, kind: input, shape index: {}]
  %s1 = inlined_call_operand.hbm [shape: bf16[32,32], index: 1, kind: input, shape index: {}]
  %s2 = inlined_call_operand.hbm [shape: f32[32,1], index: 2, kind: input, shape index: {}]
  %s3 = inlined_call_operand.hbm [shape: bf16[96,32], index: 3, kind: input, shape index: {}]
  %s4 = inlined_call_operand.hbm [shape: f32[96,1], index: 4, kind: input, shape index: {}]
  %s5 = inlined_call_operand.hbm [shape: f32[4,32,256], index: 5, kind: output, shape index: {}]
  %s6 = sld [smem:[#allocation0]]
  $region73: #{tpu_custom_call.1} parent=0
    _
  %s8 = ssub.s32 1, %s6
  %s9 = scalar_select 0, %s8, %s6
  $region1: #{tpu_custom_call.1} parent=0
    #allocation2 [shape = 'u8[32768]{0}', space=vmem, size = 0x8000, scoped, tag = 'input window, operand 0']
    #allocation3 [shape = 's32[2]{0}', space=sflag, size = 0x8, scoped, tag = 'scoped memory for tpu_custom_call.1']
    #allocation4 [shape = 's32[2]{0}', space=sflag, size = 0x8, scoped, tag = 'scoped memory for tpu_custom_call.1']
    #allocation5 [shape = 'u8[8192]{0}', space=vmem, size = 0x2000, scoped, tag = 'input window, operand 1, single buffered']
    #allocation6 [shape = 's32[1]{0}', space=sflag, size = 0x4, scoped, tag = 'scoped memory for tpu_custom_call.1']
    #allocation7 [shape = 'u8[16384]{0}', space=vmem, size = 0x4000, scoped, tag = 'input window, operand 2, single buffered']
    #allocation8 [shape = 'u8[24576]{0}', space=vmem, size = 0x6000, scoped, tag = 'input window, operand 3, single buffered']
    #allocation9 [shape = 's32[1]{0}', space=sflag, size = 0x4, scoped, tag = 'scoped memory for tpu_custom_call.1']
    #allocation10 [shape = 'u8[49152]{0}', space=vmem, size = 0xc000, scoped, tag = 'input window, operand 4, single buffered']
    #allocation11 [shape = 'u8[65536]{0}', space=vmem, size = 0x10000, scoped, tag = 'output window, operand 0']
    %10 = vsyncpa [#allocation3], 0
    %s11 = scalar_lea.sflag [#allocation3], 1
    %12 = vsyncpa %s11, 0
    %13 = vsyncpa [#allocation6], 0
    %14 = vsyncpa [#allocation9], 0
    %15 = vsyncpa [#allocation4], 0
    %s16 = scalar_lea.sflag [#allocation4], 1
    %17 = vsyncpa %s16, 0
    loop: start=0, step=1, limit=6
    $region2: #{tpu_custom_call.1} parent=1 // loop_pre_header
      _
    $region3: #{tpu_custom_call.1} parent=1 // loop_header
      %s19 = sphi 0, %s23
      %p20 = scmp.ge.s32.totalorder %s19, 6
      %s29 = sphi 0, %s31
      %s32 = sphi 0, %s29
      %s33 = sphi 0, %s32
      %s49 = sphi 0, %s33
      %s53 = sphi 0, %s53
      %s55 = sphi 0, %s53
      %s56 = sphi 0, %s55
      %s70 = sphi 0, %s56
      %s74 = sphi 0, %s74
      %s76 = sphi 0, %s74
      %s77 = sphi 0, %s76
      %s91 = sphi 0, %s77
      %s95 = sphi 0, %s95
      %s97 = sphi 0, %s95
      %s98 = sphi 0, %s97
      %s112 = sphi 0, %s98
      %s116 = sphi 0, %s116
      %s118 = sphi 0, %s116
      %s119 = sphi 0, %s118
      %s133 = sphi 0, %s119
      %s139 = sphi 0, %s141
      %s142 = sphi 0, %s139
      %s143 = sphi 0, %s142
      %s159 = sphi 0, %s143
    $region4: #{tpu_custom_call.1} parent=1 // loop_header_branch
      %22 = sbr.rel (%p20) target = $region8
    $region5: #{tpu_custom_call.1} parent=1 // loop_body
      %s24 = ssub.s32 %s19, 1
      %s25 = ssub.s32 %s19, 2
      %s26 = sadd.s32 %s19, 1
      %s27 = ssub.s32 %s19, %s26
      %p28 = scmp.eq.s32.totalorder %s27, 0
      %s30 = sadd.s32 %s29, 1
      %s31 = scalar_select %p28, %s29, %s30
      %p34 = pneg %p28
      %p35 = scmp.eq.s32.totalorder %s19, 3
      %p36 = por %p34, %p35
      %p37 = scmp.ne.s32.totalorder %s29, %s32
      %p38 = scmp.eq.s32.totalorder %s19, 0
      %p39 = por %p37, %p38
      %p40 = scmp.ne.s32.totalorder %s29, %s32
      %p41 = scmp.eq.s32.totalorder %s24, 3
      %p42 = por %p40, %p41
      %p43 = scmp.ne.s32.totalorder %s32, %s33
      %p44 = scmp.eq.s32.totalorder %s24, 0
      %p45 = por %p43, %p44
      %p46 = scmp.ne.s32.totalorder %s32, %s33
      %p47 = scmp.eq.s32.totalorder %s25, 3
      %p48 = por %p46, %p47
      %p50 = scmp.ne.s32.totalorder %s33, %s49
      %p51 = scmp.eq.s32.totalorder %s25, 0
      %p52 = por %p50, %p51
      %s54 = sadd.s32 %s53, 1
      %p57 = scmp.eq.s32.totalorder %s19, 3
      %p58 = scmp.ne.s32.totalorder %s53, %s55
      %p59 = scmp.eq.s32.totalorder %s19, 0
      %p60 = por %p58, %p59
      %p61 = scmp.ne.s32.totalorder %s53, %s55
      %p62 = scmp.eq.s32.totalorder %s24, 3
      %p63 = por %p61, %p62
      %p64 = scmp.ne.s32.totalorder %s55, %s56
      %p65 = scmp.eq.s32.totalorder %s24, 0
      %p66 = por %p64, %p65
      %p67 = scmp.ne.s32.totalorder %s55, %s56
      %p68 = scmp.eq.s32.totalorder %s25, 3
      %p69 = por %p67, %p68
      %p71 = scmp.ne.s32.totalorder %s56, %s70
      %p72 = scmp.eq.s32.totalorder %s25, 0
      %p73 = por %p71, %p72
      %s75 = sadd.s32 %s74, 1
      %p78 = scmp.eq.s32.totalorder %s19, 3
      %p79 = scmp.ne.s32.totalorder %s74, %s76
      %p80 = scmp.eq.s32.totalorder %s19, 0
      %p81 = por %p79, %p80
      %p82 = scmp.ne.s32.totalorder %s74, %s76
      %p83 = scmp.eq.s32.totalorder %s24, 3
      %p84 = por %p82, %p83
      %p85 = scmp.ne.s32.totalorder %s76, %s77
      %p86 = scmp.eq.s32.totalorder %s24, 0
      %p87 = por %p85, %p86
      %p88 = scmp.ne.s32.totalorder %s76, %s77
      %p89 = scmp.eq.s32.totalorder %s25, 3
      %p90 = por %p88, %p89
      %p92 = scmp.ne.s32.totalorder %s77, %s91
      %p93 = scmp.eq.s32.totalorder %s25, 0
      %p94 = por %p92, %p93
      %s96 = sadd.s32 %s95, 1
      %p99 = scmp.eq.s32.totalorder %s19, 3
      %p100 = scmp.ne.s32.totalorder %s95, %s97
      %p101 = scmp.eq.s32.totalorder %s19, 0
      %p102 = por %p100, %p101
      %p103 = scmp.ne.s32.totalorder %s95, %s97
      %p104 = scmp.eq.s32.totalorder %s24, 3
      %p105 = por %p103, %p104
      %p106 = scmp.ne.s32.totalorder %s97, %s98
      %p107 = scmp.eq.s32.totalorder %s24, 0
      %p108 = por %p106, %p107
      %p109 = scmp.ne.s32.totalorder %s97, %s98
      %p110 = scmp.eq.s32.totalorder %s25, 3
      %p111 = por %p109, %p110
      %p113 = scmp.ne.s32.totalorder %s98, %s112
      %p114 = scmp.eq.s32.totalorder %s25, 0
      %p115 = por %p113, %p114
      %s117 = sadd.s32 %s116, 1
      %p120 = scmp.eq.s32.totalorder %s19, 3
      %p121 = scmp.ne.s32.totalorder %s116, %s118
      %p122 = scmp.eq.s32.totalorder %s19, 0
      %p123 = por %p121, %p122
      %p124 = scmp.ne.s32.totalorder %s116, %s118
      %p125 = scmp.eq.s32.totalorder %s24, 3
      %p126 = por %p124, %p125
      %p127 = scmp.ne.s32.totalorder %s118, %s119
      %p128 = scmp.eq.s32.totalorder %s24, 0
      %p129 = por %p127, %p128
      %p130 = scmp.ne.s32.totalorder %s118, %s119
      %p131 = scmp.eq.s32.totalorder %s25, 3
      %p132 = por %p130, %p131
      %p134 = scmp.ne.s32.totalorder %s119, %s133
      %p135 = scmp.eq.s32.totalorder %s25, 0
      %p136 = por %p134, %p135
      %s137 = ssub.s32 %s19, %s26
      %p138 = scmp.eq.s32.totalorder %s137, 0
      %s140 = sadd.s32 %s139, 1
      %s141 = scalar_select %p138, %s139, %s140
      %p144 = pneg %p138
      %p145 = scmp.eq.s32.totalorder %s19, 3
      %p146 = por %p144, %p145
      %p147 = scmp.ne.s32.totalorder %s139, %s142
      %p148 = scmp.eq.s32.totalorder %s19, 0
      %p149 = por %p147, %p148
      %p150 = scmp.ne.s32.totalorder %s139, %s142
      %p151 = scmp.eq.s32.totalorder %s24, 3
      %p152 = por %p150, %p151
      %p153 = scmp.ne.s32.totalorder %s142, %s143
      %p154 = scmp.eq.s32.totalorder %s24, 0
      %p155 = por %p153, %p154
      %p156 = scmp.ne.s32.totalorder %s142, %s143
      %p157 = scmp.eq.s32.totalorder %s25, 3
      %p158 = por %p156, %p157
      %p160 = scmp.ne.s32.totalorder %s143, %s159
      %p161 = scmp.eq.s32.totalorder %s25, 0
      %p162 = por %p160, %p161
      %p163 = scmp.le.s32.totalorder 1, %s19
      %p164 = scmp.lt.s32.totalorder %s19, 5
      %p165 = pnand %p163, %p164
      %p166 = pneg %p165
      // Predicated region
      $region9: #{tpu_custom_call.1} parent=5 // pred_check
        _
      $region10: #{tpu_custom_call.1} parent=5 // pred_check_branch
        %168 = sbr.rel (%p165) target = $region12
      $region11: #{tpu_custom_call.1} parent=5 // pred_region
        %s169 = ssub.s32 %s19, 1
        // Predicated region
        $region13: #{tpu_custom_call.1} parent=11 // pred_check
          %p170 = pneg %p66
        $region14: #{tpu_custom_call.1} parent=11 // pred_check_branch
          %172 = sbr.rel (%p170) target = $region16
        $region15: #{tpu_custom_call.1} parent=11 // pred_region
          %s174 = ssub.s32 256, 256
          %175 = vsyncadd [#allocation6], %s174
          %s176 = sshll.u32 [#allocation5], 4
          %s177 = int_to_ptr.vmem [resolvable:$true] %s176
          %182 = dma.hbm_to_vmem [thread:$0]  %s1, 256, %s177, [#allocation6], 64, 64, 4
        $region16: #{tpu_custom_call.1} parent=11 // pred_fallthru
          _
        // Predicated region
        $region17: #{tpu_custom_call.1} parent=11 // pred_check
          %p183 = pneg %p87
        $region18: #{tpu_custom_call.1} parent=11 // pred_check_branch
          %185 = sbr.rel (%p183) target = $region20
        $region19: #{tpu_custom_call.1} parent=11 // pred_region
          %s187 = ssub.s32 512, 512
          %188 = vsyncadd [#allocation6], %s187
          %s189 = sshll.u32 [#allocation7], 4
          %s190 = int_to_ptr.vmem [resolvable:$true] %s189
          %195 = dma.hbm_to_vmem [thread:$0]  %s2, 512, %s190, [#allocation6], 128, 128, 8
        $region20: #{tpu_custom_call.1} parent=11 // pred_fallthru
          _
        // Predicated region
        $region21: #{tpu_custom_call.1} parent=11 // pred_check
          %p196 = pneg %p108
        $region22: #{tpu_custom_call.1} parent=11 // pred_check_branch
          %198 = sbr.rel (%p196) target = $region24
        $region23: #{tpu_custom_call.1} parent=11 // pred_region
          %s200 = ssub.s32 768, 768
          %201 = vsyncadd [#allocation9], %s200
          %s202 = sshll.u32 [#allocation8], 4
          %s203 = int_to_ptr.vmem [resolvable:$true] %s202
          %208 = dma.hbm_to_vmem [thread:$0]  %s3, 768, %s203, [#allocation9], 64, 64, 4
        $region24: #{tpu_custom_call.1} parent=11 // pred_fallthru
          _
        // Predicated region
        $region25: #{tpu_custom_call.1} parent=11 // pred_check
          %p209 = pneg %p129
        $region26: #{tpu_custom_call.1} parent=11 // pred_check_branch
          %211 = sbr.rel (%p209) target = $region28
        $region27: #{tpu_custom_call.1} parent=11 // pred_region
          %s213 = ssub.s32 1536, 1536
          %214 = vsyncadd [#allocation9], %s213
          %s215 = sshll.u32 [#allocation10], 4
          %s216 = int_to_ptr.vmem [resolvable:$true] %s215
          %221 = dma.hbm_to_vmem [thread:$0]  %s4, 1536, %s216, [#allocation9], 128, 128, 8
        $region28: #{tpu_custom_call.1} parent=11 // pred_fallthru
          _
      $region12: #{tpu_custom_call.1} parent=5 // pred_fallthru
        _
      %p222 = scmp.lt.s32.totalorder %s19, 4
      // Predicated region
      $region29: #{tpu_custom_call.1} parent=5 // pred_check
        %p223 = pneg %p222
      $region30: #{tpu_custom_call.1} parent=5 // pred_check_branch
        %225 = sbr.rel (%p223) target = $region32
      $region31: #{tpu_custom_call.1} parent=5 // pred_region
        // Predicated region
        $region33: #{tpu_custom_call.1} parent=31 // pred_check
          %p226 = pneg %p39
        $region34: #{tpu_custom_call.1} parent=31 // pred_check_branch
          %228 = sbr.rel (%p226) target = $region36
        $region35: #{tpu_custom_call.1} parent=31 // pred_region
          %s229 = sand.u32 %s29, 1
          %s230 = scalar_lea.sflag [#allocation3], %s229
          %s231 = sand.u32 %s29, 1
          %s232 = smul.addr %s231, 32
          %s233 = scalar_lea.vmem [#allocation2], %s232
          %s235 = ssub.s32 512, 512
          %236 = vsyncadd %s230, %s235
          %s237 = smul.addr %s19, 8
          %s238 = smul.addr %s237, 64
          %s239 = scalar_lea.hbm %s0, %s238
          %s240 = sshll.u32 %s233, 4
          %s241 = int_to_ptr.vmem [resolvable:$true] %s240
          %246 = dma.hbm_to_vmem [thread:$0]  %s239, 512, %s241, %s230, 128, 128, 8
        $region36: #{tpu_custom_call.1} parent=31 // pred_fallthru
          _
      $region32: #{tpu_custom_call.1} parent=5 // pred_fallthru
        _
      %p247 = scmp.le.s32.totalorder 1, %s19
      %p248 = scmp.lt.s32.totalorder %s19, 5
      %p249 = pnand %p247, %p248
      %p250 = pneg %p249
      // Predicated region
      $region37: #{tpu_custom_call.1} parent=5 // pred_check
        _
      $region38: #{tpu_custom_call.1} parent=5 // pred_check_branch
        %252 = sbr.rel (%p249) target = $region40
      $region39: #{tpu_custom_call.1} parent=5 // pred_region
        %s253 = ssub.s32 %s19, 1
        %s254 = sand.u32 %s32, 1
        %s255 = scalar_lea.sflag [#allocation3], %s254
        %s256 = sand.u32 %s32, 1
        %s257 = smul.addr %s256, 32
        %s258 = scalar_lea.vmem [#allocation2], %s257
        // Predicated region
        $region41: #{tpu_custom_call.1} parent=39 // pred_check
          %p259 = pneg %p45
        $region42: #{tpu_custom_call.1} parent=39 // pred_check_branch
          %261 = sbr.rel (%p259) target = $region44
        $region43: #{tpu_custom_call.1} parent=39 // pred_region
          %262 = dma.done %s255, 512
        $region44: #{tpu_custom_call.1} parent=39 // pred_fallthru
          _
        // Predicated region
        $region45: #{tpu_custom_call.1} parent=39 // pred_check
          %p263 = pneg %p66
        $region46: #{tpu_custom_call.1} parent=39 // pred_check_branch
          %265 = sbr.rel (%p263) target = $region48
        $region47: #{tpu_custom_call.1} parent=39 // pred_region
          %266 = dma.done [#allocation6], 256
        $region48: #{tpu_custom_call.1} parent=39 // pred_fallthru
          _
        // Predicated region
        $region49: #{tpu_custom_call.1} parent=39 // pred_check
          %p267 = pneg %p87
        $region50: #{tpu_custom_call.1} parent=39 // pred_check_branch
          %269 = sbr.rel (%p267) target = $region52
        $region51: #{tpu_custom_call.1} parent=39 // pred_region
          %270 = dma.done [#allocation6], 512
        $region52: #{tpu_custom_call.1} parent=39 // pred_fallthru
          _
        // Predicated region
        $region53: #{tpu_custom_call.1} parent=39 // pred_check
          %p271 = pneg %p108
        $region54: #{tpu_custom_call.1} parent=39 // pred_check_branch
          %273 = sbr.rel (%p271) target = $region56
        $region55: #{tpu_custom_call.1} parent=39 // pred_region
          %274 = dma.done [#allocation9], 768
        $region56: #{tpu_custom_call.1} parent=39 // pred_fallthru
          _
        // Predicated region
        $region57: #{tpu_custom_call.1} parent=39 // pred_check
          %p275 = pneg %p129
        $region58: #{tpu_custom_call.1} parent=39 // pred_check_branch
          %277 = sbr.rel (%p275) target = $region60
        $region59: #{tpu_custom_call.1} parent=39 // pred_region
          %278 = dma.done [#allocation9], 1536
        $region60: #{tpu_custom_call.1} parent=39 // pred_fallthru
          _
        %s279 = sand.u32 %s32, 1
        %s280 = scalar_lea.sflag [#allocation3], %s279
        %s281 = sand.u32 %s32, 1
        %s282 = smul.addr %s281, 32
        %s283 = scalar_lea.vmem [#allocation2], %s282
        %p284 = pneg %p45
        %p285 = pneg %p42
        %p286 = pneg %p66
        %p287 = pneg %p63
        %p288 = pneg %p87
        %p289 = pneg %p84
        %p290 = pneg %p108
        %p291 = pneg %p105
        %p292 = pneg %p129
        %p293 = pneg %p126
        %p294 = pneg %p155
        %p295 = pneg %p152
        %s296 = sand.u32 %s142, 1
        %s297 = scalar_lea.sflag [#allocation4], %s296
        %s298 = sand.u32 %s142, 1
        %s299 = smul.addr %s298, 64
        %s300 = scalar_lea.vmem [#allocation11], %s299
        %v302 = vld [vmem:[%s258] sm:$0xff]
        %v303 = vld [vmem:[%s258 + $0x8] sm:$0xff]
        %v304 = vld [vmem:[%s258 + $0x10] sm:$0xff]
        %v305 = vld [vmem:[%s258 + $0x18] sm:$0xff]
        %v306 = vld [vmem:[#allocation5] sm:$0xf]
        %v307 = vld [vmem:[#allocation5 + $0x4] sm:$0xf]
        %v308 = vld [vmem:[#allocation5 + $0x8] sm:$0xf]
        %v309 = vld [vmem:[#allocation5 + $0xc] sm:$0xf]
        %v310 = vld [vmem:[#allocation7] sm:$0xff]
        %v311 = vld [vmem:[#allocation7 + $0x8] sm:$0xff]
        %v312 = vld [vmem:[#allocation7 + $0x10] sm:$0xff]
        %v313 = vld [vmem:[#allocation7 + $0x18] sm:$0xff]
        %315 = vset.pattern.permute.xlu0 0
        %316 = vperm.xlu0 %315, %v310
        %v317 = vpop.permute.xlu0 %316
        %320 = vset.pattern.permute.xlu0 0
        %321 = vperm.xlu0 %320, %v311
        %v322 = vpop.permute.xlu0 %321
        %325 = vset.pattern.permute.xlu0 0
        %326 = vperm.xlu0 %325, %v312
        %v327 = vpop.permute.xlu0 %326
        %330 = vset.pattern.permute.xlu0 0
        %331 = vperm.xlu0 %330, %v313
        %v332 = vpop.permute.xlu0 %331
        %v338 = vunpack.c.l.b16 %v306
        %v339 = vunpack.c.l.b16 %v307
        %v340 = vunpack.c.l.b16 %v308
        %v341 = vunpack.c.l.b16 %v309
        %v342 = vpack.c.b16 %v339, %v338
        %v343 = vpack.c.b16 %v341, %v340
        %v348 = vunpack.c.l.b16 %v302
        %v349 = vunpack.c.h.b16 %v302
        %v350 = vunpack.c.l.b16 %v303
        %v351 = vunpack.c.h.b16 %v303
        %v352 = vunpack.c.l.b16 %v304
        %v353 = vunpack.c.h.b16 %v304
        %v354 = vunpack.c.l.b16 %v305
        %v355 = vunpack.c.h.b16 %v305
        %v356 = vpack.c.b16 %v350, %v348
        %v357 = vpack.c.b16 %v351, %v349
        %v358 = vpack.c.b16 %v354, %v352
        %v359 = vpack.c.b16 %v355, %v353
        %vm364 = vcmask 261120
        %v366 = vsel %vm364, %v342, 0
        %v369 = vsel %vm364, %v343, 0
        %371 = vmatprep.subr.bf16.mxu0 %v357
        %372 = vmatpush1.bf16.msra.mxu0 %v356
        %373 = vmatprep.subr.bf16.mxu0 %v359
        %374 = vmatpush1.bf16.msra.mxu0 %v358
        %375 = vmatprep.subr.bf16.mxu0 0
        %376 = vmatpush1.bf16.msra.mxu0 0
        %377 = vmatprep.subr.bf16.mxu0 0
        %378 = vmatpush1.bf16.msra.mxu0 0
        %379 = vmatprep.subr.bf16.mxu0 0
        %380 = vmatpush1.bf16.msra.mxu0 0
        %381 = vmatprep.subr.bf16.mxu0 0
        %382 = vmatpush1.bf16.msra.mxu0 0
        %383 = vmatprep.subr.bf16.mxu0 0
        %384 = vmatpush1.bf16.msra.mxu0 0
        %385 = vmatprep.subr.bf16.mxu0 0
        %386 = vmatpush1.bf16.msra.mxu0 0
        %387 = vmatprep.subr.bf16.mxu0 0
        %388 = vmatpush1.bf16.msra.mxu0 0
        %389 = vmatprep.subr.bf16.mxu0 0
        %390 = vmatpush1.bf16.msra.mxu0 0
        %391 = vmatprep.subr.bf16.mxu0 0
        %392 = vmatpush1.bf16.msra.mxu0 0
        %393 = vmatprep.subr.bf16.mxu0 0
        %394 = vmatpush1.bf16.msra.mxu0 0
        %395 = vmatprep.subr.bf16.mxu0 0
        %396 = vmatpush1.bf16.msra.mxu0 0
        %397 = vmatprep.subr.bf16.mxu0 0
        %398 = vmatpush1.bf16.msra.mxu0 0
        %399 = vmatprep.subr.bf16.mxu0 0
        %400 = vmatpush1.bf16.msra.mxu0 0
        %401 = vmatprep.subr.bf16.mxu0 0
        %402 = vmatpush1.bf16.msra.mxu0 0
        %403 = vmatprep.mubr.bf16.mxu0 0
        %404 = vmatmul.mubr.bf16.gmra.mrb[0].mxu0 %v366
        %v405 = vpop.f32.mrb[0].mxu0
        %v406 = vadd.f32 %v317, %v405
        %v407 = vpop.f32.mrb[0].mxu0
        %v408 = vadd.f32 %v317, %v407
        %v409 = vpop.f32.mrb[0].mxu0
        %v410 = vadd.f32 %v322, %v409
        %v411 = vpop.f32.mrb[0].mxu0
        %v412 = vadd.f32 %v322, %v411
        %413 = vmatprep.mubr.bf16.mxu0 0
        %414 = vmatmul.mubr.bf16.gmra.mrb[0].mxu0 %v369
        %v415 = vpop.f32.mrb[0].mxu0
        %v416 = vadd.f32 %v327, %v415
        %v417 = vpop.f32.mrb[0].mxu0
        %v418 = vadd.f32 %v327, %v417
        %v419 = vpop.f32.mrb[0].mxu0
        %v420 = vadd.f32 %v332, %v419
        %v421 = vpop.f32.mrb[0].mxu0
        %v422 = vadd.f32 %v332, %v421
        %423 = vdwg.mxu0
        %v424 = vxor.u32 %v406, 2147483648
        %v425 = vxor.u32 %v408, 2147483648
        %v426 = vxor.u32 %v410, 2147483648
        %v427 = vxor.u32 %v412, 2147483648
        %v428 = vxor.u32 %v416, 2147483648
        %v429 = vxor.u32 %v418, 2147483648
        %v430 = vxor.u32 %v420, 2147483648
        %v431 = vxor.u32 %v422, 2147483648
        %v432 = vmul.f32 %v424, 1.442695
        %v433 = vpow.pop %v432
        %v434 = vmul.f32 %v425, 1.442695
        %v435 = vpow.pop %v434
        %v436 = vmul.f32 %v426, 1.442695
        %v437 = vpow.pop %v436
        %v438 = vmul.f32 %v427, 1.442695
        %v439 = vpow.pop %v438
        %v440 = vmul.f32 %v428, 1.442695
        %v441 = vpow.pop %v440
        %v442 = vmul.f32 %v429, 1.442695
        %v443 = vpow.pop %v442
        %v444 = vmul.f32 %v430, 1.442695
        %v445 = vpow.pop %v444
        %v446 = vmul.f32 %v431, 1.442695
        %v447 = vpow.pop %v446
        %v448 = vadd.f32 %v433, 1.0
        %v449 = vadd.f32 %v435, 1.0
        %v450 = vadd.f32 %v437, 1.0
        %v451 = vadd.f32 %v439, 1.0
        %v452 = vadd.f32 %v441, 1.0
        %v453 = vadd.f32 %v443, 1.0
        %v454 = vadd.f32 %v445, 1.0
        %v455 = vadd.f32 %v447, 1.0
        %v456 = vrcp.pop %v448
        %v457 = vmul.f32 1.0, %v456
        %v458 = vrcp.pop %v449
        %v459 = vmul.f32 1.0, %v458
        %v460 = vrcp.pop %v450
        %v461 = vmul.f32 1.0, %v460
        %v462 = vrcp.pop %v451
        %v463 = vmul.f32 1.0, %v462
        %v464 = vrcp.pop %v452
        %v465 = vmul.f32 1.0, %v464
        %v466 = vrcp.pop %v453
        %v467 = vmul.f32 1.0, %v466
        %v468 = vrcp.pop %v454
        %v469 = vmul.f32 1.0, %v468
        %v470 = vrcp.pop %v455
        %v471 = vmul.f32 1.0, %v470
        %v472 = vmul.f32 %v406, %v457
        %v473 = vmul.f32 %v408, %v459
        %v474 = vmul.f32 %v410, %v461
        %v475 = vmul.f32 %v412, %v463
        %v476 = vmul.f32 %v416, %v465
        %v477 = vmul.f32 %v418, %v467
        %v478 = vmul.f32 %v420, %v469
        %v479 = vmul.f32 %v422, %v471
        %v480 = vld [vmem:[#allocation8] sm:$0xf]
        %v481 = vld [vmem:[#allocation8 + $0x4] sm:$0xf]
        %v482 = vld [vmem:[#allocation8 + $0x8] sm:$0xf]
        %v483 = vld [vmem:[#allocation8 + $0xc] sm:$0xf]
        %v484 = vld [vmem:[#allocation8 + $0x10] sm:$0xf]
        %v485 = vld [vmem:[#allocation8 + $0x14] sm:$0xf]
        %v486 = vld [vmem:[#allocation8 + $0x18] sm:$0xf]
        %v487 = vld [vmem:[#allocation8 + $0x1c] sm:$0xf]
        %v488 = vld [vmem:[#allocation8 + $0x20] sm:$0xf]
        %v489 = vld [vmem:[#allocation8 + $0x24] sm:$0xf]
        %v490 = vld [vmem:[#allocation8 + $0x28] sm:$0xf]
        %v491 = vld [vmem:[#allocation8 + $0x2c] sm:$0xf]
        %v492 = vpack.c.bf16 %v474, %v472
        %v493 = vpack.c.bf16 %v475, %v473
        %v494 = vpack.c.bf16 %v478, %v476
        %v495 = vpack.c.bf16 %v479, %v477
        %v496 = vld [vmem:[#allocation10] sm:$0xff]
        %v497 = vld [vmem:[#allocation10 + $0x8] sm:$0xff]
        %v498 = vld [vmem:[#allocation10 + $0x10] sm:$0xff]
        %v499 = vld [vmem:[#allocation10 + $0x18] sm:$0xff]
        %v500 = vld [vmem:[#allocation10 + $0x20] sm:$0xff]
        %v501 = vld [vmem:[#allocation10 + $0x28] sm:$0xff]
        %v502 = vld [vmem:[#allocation10 + $0x30] sm:$0xff]
        %v503 = vld [vmem:[#allocation10 + $0x38] sm:$0xff]
        %v504 = vld [vmem:[#allocation10 + $0x40] sm:$0xff]
        %v505 = vld [vmem:[#allocation10 + $0x48] sm:$0xff]
        %v506 = vld [vmem:[#allocation10 + $0x50] sm:$0xff]
        %v507 = vld [vmem:[#allocation10 + $0x58] sm:$0xff]
        %509 = vset.pattern.permute.xlu0 0
        %510 = vperm.xlu0 %509, %v496
        %v511 = vpop.permute.xlu0 %510
        %514 = vset.pattern.permute.xlu0 0
        %515 = vperm.xlu0 %514, %v497
        %v516 = vpop.permute.xlu0 %515
        %519 = vset.pattern.permute.xlu0 0
        %520 = vperm.xlu0 %519, %v498
        %v521 = vpop.permute.xlu0 %520
        %524 = vset.pattern.permute.xlu0 0
        %525 = vperm.xlu0 %524, %v499
        %v526 = vpop.permute.xlu0 %525
        %529 = vset.pattern.permute.xlu0 0
        %530 = vperm.xlu0 %529, %v500
        %v531 = vpop.permute.xlu0 %530
        %534 = vset.pattern.permute.xlu0 0
        %535 = vperm.xlu0 %534, %v501
        %v536 = vpop.permute.xlu0 %535
        %539 = vset.pattern.permute.xlu0 0
        %540 = vperm.xlu0 %539, %v502
        %v541 = vpop.permute.xlu0 %540
        %544 = vset.pattern.permute.xlu0 0
        %545 = vperm.xlu0 %544, %v503
        %v546 = vpop.permute.xlu0 %545
        %549 = vset.pattern.permute.xlu0 0
        %550 = vperm.xlu0 %549, %v504
        %v551 = vpop.permute.xlu0 %550
        %554 = vset.pattern.permute.xlu0 0
        %555 = vperm.xlu0 %554, %v505
        %v556 = vpop.permute.xlu0 %555
        %559 = vset.pattern.permute.xlu0 0
        %560 = vperm.xlu0 %559, %v506
        %v561 = vpop.permute.xlu0 %560
        %564 = vset.pattern.permute.xlu0 0
        %565 = vperm.xlu0 %564, %v507
        %v566 = vpop.permute.xlu0 %565
        %v580 = vunpack.c.l.b16 %v480
        %v581 = vunpack.c.l.b16 %v481
        %v582 = vunpack.c.l.b16 %v482
        %v583 = vunpack.c.l.b16 %v483
        %v584 = vunpack.c.l.b16 %v484
        %v585 = vunpack.c.l.b16 %v485
        %v586 = vunpack.c.l.b16 %v486
        %v587 = vunpack.c.l.b16 %v487
        %v588 = vunpack.c.l.b16 %v488
        %v589 = vunpack.c.l.b16 %v489
        %v590 = vunpack.c.l.b16 %v490
        %v591 = vunpack.c.l.b16 %v491
        %v592 = vpack.c.b16 %v581, %v580
        %v593 = vpack.c.b16 %v583, %v582
        %v594 = vpack.c.b16 %v585, %v584
        %v595 = vpack.c.b16 %v587, %v586
        %v596 = vpack.c.b16 %v589, %v588
        %v597 = vpack.c.b16 %v591, %v590
        %v599 = vsel %vm364, %v592, 0
        %v602 = vsel %vm364, %v593, 0
        %v605 = vsel %vm364, %v594, 0
        %v608 = vsel %vm364, %v595, 0
        %v611 = vsel %vm364, %v596, 0
        %v614 = vsel %vm364, %v597, 0
        %616 = vmatprep.subr.bf16.mxu0 %v493
        %617 = vmatpush1.bf16.msra.mxu0 %v492
        %618 = vmatprep.subr.bf16.mxu0 %v495
        %619 = vmatpush1.bf16.msra.mxu0 %v494
        %620 = vmatprep.subr.bf16.mxu0 0
        %621 = vmatpush1.bf16.msra.mxu0 0
        %622 = vmatprep.subr.bf16.mxu0 0
        %623 = vmatpush1.bf16.msra.mxu0 0
        %624 = vmatprep.subr.bf16.mxu0 0
        %625 = vmatpush1.bf16.msra.mxu0 0
        %626 = vmatprep.subr.bf16.mxu0 0
        %627 = vmatpush1.bf16.msra.mxu0 0
        %628 = vmatprep.subr.bf16.mxu0 0
        %629 = vmatpush1.bf16.msra.mxu0 0
        %630 = vmatprep.subr.bf16.mxu0 0
        %631 = vmatpush1.bf16.msra.mxu0 0
        %632 = vmatprep.subr.bf16.mxu0 0
        %633 = vmatpush1.bf16.msra.mxu0 0
        %634 = vmatprep.subr.bf16.mxu0 0
        %635 = vmatpush1.bf16.msra.mxu0 0
        %636 = vmatprep.subr.bf16.mxu0 0
        %637 = vmatpush1.bf16.msra.mxu0 0
        %638 = vmatprep.subr.bf16.mxu0 0
        %639 = vmatpush1.bf16.msra.mxu0 0
        %640 = vmatprep.subr.bf16.mxu0 0
        %641 = vmatpush1.bf16.msra.mxu0 0
        %642 = vmatprep.subr.bf16.mxu0 0
        %643 = vmatpush1.bf16.msra.mxu0 0
        %644 = vmatprep.subr.bf16.mxu0 0
        %645 = vmatpush1.bf16.msra.mxu0 0
        %646 = vmatprep.subr.bf16.mxu0 0
        %647 = vmatpush1.bf16.msra.mxu0 0
        %648 = vmatprep.mubr.bf16.mxu0 0
        %649 = vmatmul.mubr.bf16.gmra.mrb[0].mxu0 %v599
        %v650 = vpop.f32.mrb[0].mxu0
        %v651 = vadd.f32 %v511, %v650
        %v652 = vpop.f32.mrb[0].mxu0
        %v653 = vadd.f32 %v511, %v652
        %v654 = vpop.f32.mrb[0].mxu0
        %v655 = vadd.f32 %v516, %v654
        %v656 = vpop.f32.mrb[0].mxu0
        %v657 = vadd.f32 %v516, %v656
        %658 = vmatprep.mubr.bf16.mxu0 0
        %659 = vmatmul.mubr.bf16.gmra.mrb[0].mxu0 %v602
        %v660 = vpop.f32.mrb[0].mxu0
        %v661 = vadd.f32 %v521, %v660
        %v662 = vpop.f32.mrb[0].mxu0
        %v663 = vadd.f32 %v521, %v662
        %v664 = vpop.f32.mrb[0].mxu0
        %v665 = vadd.f32 %v526, %v664
        %v666 = vpop.f32.mrb[0].mxu0
        %v667 = vadd.f32 %v526, %v666
        %668 = vmatprep.mubr.bf16.mxu0 0
        %669 = vmatmul.mubr.bf16.gmra.mrb[0].mxu0 %v605
        %v670 = vpop.f32.mrb[0].mxu0
        %v671 = vadd.f32 %v531, %v670
        %v672 = vpop.f32.mrb[0].mxu0
        %v673 = vadd.f32 %v531, %v672
        %v674 = vpop.f32.mrb[0].mxu0
        %v675 = vadd.f32 %v536, %v674
        %v676 = vpop.f32.mrb[0].mxu0
        %v677 = vadd.f32 %v536, %v676
        %678 = vmatprep.mubr.bf16.mxu0 0
        %679 = vmatmul.mubr.bf16.gmra.mrb[0].mxu0 %v608
        %v680 = vpop.f32.mrb[0].mxu0
        %v681 = vadd.f32 %v541, %v680
        %v682 = vpop.f32.mrb[0].mxu0
        %v683 = vadd.f32 %v541, %v682
        %v684 = vpop.f32.mrb[0].mxu0
        %v685 = vadd.f32 %v546, %v684
        %v686 = vpop.f32.mrb[0].mxu0
        %v687 = vadd.f32 %v546, %v686
        %688 = vmatprep.mubr.bf16.mxu0 0
        %689 = vmatmul.mubr.bf16.gmra.mrb[0].mxu0 %v611
        %v690 = vpop.f32.mrb[0].mxu0
        %v691 = vadd.f32 %v551, %v690
        %v692 = vpop.f32.mrb[0].mxu0
        %v693 = vadd.f32 %v551, %v692
        %v694 = vpop.f32.mrb[0].mxu0
        %v695 = vadd.f32 %v556, %v694
        %v696 = vpop.f32.mrb[0].mxu0
        %v697 = vadd.f32 %v556, %v696
        %698 = vmatprep.mubr.bf16.mxu0 0
        %699 = vmatmul.mubr.bf16.gmra.mrb[0].mxu0 %v614
        %v700 = vpop.f32.mrb[0].mxu0
        %v701 = vadd.f32 %v561, %v700
        %v702 = vpop.f32.mrb[0].mxu0
        %v703 = vadd.f32 %v561, %v702
        %v704 = vpop.f32.mrb[0].mxu0
        %v705 = vadd.f32 %v566, %v704
        %v706 = vpop.f32.mrb[0].mxu0
        %v707 = vadd.f32 %v566, %v706
        %708 = vdwg.mxu0
        %709 = vxpose.xlu0.b32.start [1/16] %v651, 128
        %710 = vxpose.xlu0.b32.cont [2/16] 0.0, 128
        %711 = vxpose.xlu0.b32.cont [3/16] 0.0, 128
        %712 = vxpose.xlu0.b32.cont [4/16] 0.0, 128
        %713 = vxpose.xlu0.b32.cont [5/16] 0.0, 128
        %714 = vxpose.xlu0.b32.cont [6/16] 0.0, 128
        %715 = vxpose.xlu0.b32.cont [7/16] 0.0, 128
        %716 = vxpose.xlu0.b32.cont [8/16] 0.0, 128
        %717 = vxpose.xlu0.b32.cont [9/16] 0.0, 128
        %718 = vxpose.xlu0.b32.cont [10/16] 0.0, 128
        %719 = vxpose.xlu0.b32.cont [11/16] 0.0, 128
        %720 = vxpose.xlu0.b32.cont [12/16] 0.0, 128
        %721 = vxpose.xlu0.b32.cont [13/16] 0.0, 128
        %722 = vxpose.xlu0.b32.cont [14/16] 0.0, 128
        %723 = vxpose.xlu0.b32.cont [15/16] 0.0, 128
        %724 = vxpose.xlu0.b32.end [16/16] 0.0, 128
        %v725 = vpop.trf.xlu0
        %v726 = vpop.trf.xlu0
        %v727 = vpop.trf.xlu0
        %v728 = vpop.trf.xlu0
        %v729 = vpop.trf.xlu0
        %v730 = vpop.trf.xlu0
        %v731 = vpop.trf.xlu0
        %v732 = vpop.trf.xlu0
        %v733 = vpop.trf.xlu0
        %v734 = vpop.trf.xlu0
        %v735 = vpop.trf.xlu0
        %v736 = vpop.trf.xlu0
        %v737 = vpop.trf.xlu0
        %v738 = vpop.trf.xlu0
        %v739 = vpop.trf.xlu0
        %v740 = vpop.trf.xlu0
        %741 = vxpose.xlu0.b32.start [1/16] %v653, 128
        %742 = vxpose.xlu0.b32.cont [2/16] 0.0, 128
        %743 = vxpose.xlu0.b32.cont [3/16] 0.0, 128
        %744 = vxpose.xlu0.b32.cont [4/16] 0.0, 128
        %745 = vxpose.xlu0.b32.cont [5/16] 0.0, 128
        %746 = vxpose.xlu0.b32.cont [6/16] 0.0, 128
        %747 = vxpose.xlu0.b32.cont [7/16] 0.0, 128
        %748 = vxpose.xlu0.b32.cont [8/16] 0.0, 128
        %749 = vxpose.xlu0.b32.cont [9/16] 0.0, 128
        %750 = vxpose.xlu0.b32.cont [10/16] 0.0, 128
        %751 = vxpose.xlu0.b32.cont [11/16] 0.0, 128
        %752 = vxpose.xlu0.b32.cont [12/16] 0.0, 128
        %753 = vxpose.xlu0.b32.cont [13/16] 0.0, 128
        %754 = vxpose.xlu0.b32.cont [14/16] 0.0, 128
        %755 = vxpose.xlu0.b32.cont [15/16] 0.0, 128
        %756 = vxpose.xlu0.b32.end [16/16] 0.0, 128
        %v757 = vpop.trf.xlu0
        %v758 = vpop.trf.xlu0
        %v759 = vpop.trf.xlu0
        %v760 = vpop.trf.xlu0
        %v761 = vpop.trf.xlu0
        %v762 = vpop.trf.xlu0
        %v763 = vpop.trf.xlu0
        %v764 = vpop.trf.xlu0
        %v765 = vpop.trf.xlu0
        %v766 = vpop.trf.xlu0
        %v767 = vpop.trf.xlu0
        %v768 = vpop.trf.xlu0
        %v769 = vpop.trf.xlu0
        %v770 = vpop.trf.xlu0
        %v771 = vpop.trf.xlu0
        %v772 = vpop.trf.xlu0
        %773 = vxpose.xlu0.b32.start [1/16] %v655, 128
        %774 = vxpose.xlu0.b32.cont [2/16] 0.0, 128
        %775 = vxpose.xlu0.b32.cont [3/16] 0.0, 128
        %776 = vxpose.xlu0.b32.cont [4/16] 0.0, 128
        %777 = vxpose.xlu0.b32.cont [5/16] 0.0, 128
        %778 = vxpose.xlu0.b32.cont [6/16] 0.0, 128
        %779 = vxpose.xlu0.b32.cont [7/16] 0.0, 128
        %780 = vxpose.xlu0.b32.cont [8/16] 0.0, 128
        %781 = vxpose.xlu0.b32.cont [9/16] 0.0, 128
        %782 = vxpose.xlu0.b32.cont [10/16] 0.0, 128
        %783 = vxpose.xlu0.b32.cont [11/16] 0.0, 128
        %784 = vxpose.xlu0.b32.cont [12/16] 0.0, 128
        %785 = vxpose.xlu0.b32.cont [13/16] 0.0, 128
        %786 = vxpose.xlu0.b32.cont [14/16] 0.0, 128
        %787 = vxpose.xlu0.b32.cont [15/16] 0.0, 128
        %788 = vxpose.xlu0.b32.end [16/16] 0.0, 128
        %v789 = vpop.trf.xlu0
        %v790 = vpop.trf.xlu0
        %v791 = vpop.trf.xlu0
        %v792 = vpop.trf.xlu0
        %v793 = vpop.trf.xlu0
        %v794 = vpop.trf.xlu0
        %v795 = vpop.trf.xlu0
        %v796 = vpop.trf.xlu0
        %v797 = vpop.trf.xlu0
        %v798 = vpop.trf.xlu0
        %v799 = vpop.trf.xlu0
        %v800 = vpop.trf.xlu0
        %v801 = vpop.trf.xlu0
        %v802 = vpop.trf.xlu0
        %v803 = vpop.trf.xlu0
        %v804 = vpop.trf.xlu0
        %805 = vxpose.xlu0.b32.start [1/16] %v657, 128
        %806 = vxpose.xlu0.b32.cont [2/16] 0.0, 128
        %807 = vxpose.xlu0.b32.cont [3/16] 0.0, 128
        %808 = vxpose.xlu0.b32.cont [4/16] 0.0, 128
        %809 = vxpose.xlu0.b32.cont [5/16] 0.0, 128
        %810 = vxpose.xlu0.b32.cont [6/16] 0.0, 128
        %811 = vxpose.xlu0.b32.cont [7/16] 0.0, 128
        %812 = vxpose.xlu0.b32.cont [8/16] 0.0, 128
        %813 = vxpose.xlu0.b32.cont [9/16] 0.0, 128
        %814 = vxpose.xlu0.b32.cont [10/16] 0.0, 128
        %815 = vxpose.xlu0.b32.cont [11/16] 0.0, 128
        %816 = vxpose.xlu0.b32.cont [12/16] 0.0, 128
        %817 = vxpose.xlu0.b32.cont [13/16] 0.0, 128
        %818 = vxpose.xlu0.b32.cont [14/16] 0.0, 128
        %819 = vxpose.xlu0.b32.cont [15/16] 0.0, 128
        %820 = vxpose.xlu0.b32.end [16/16] 0.0, 128
        %v821 = vpop.trf.xlu0
        %v822 = vpop.trf.xlu0
        %v823 = vpop.trf.xlu0
        %v824 = vpop.trf.xlu0
        %v825 = vpop.trf.xlu0
        %v826 = vpop.trf.xlu0
        %v827 = vpop.trf.xlu0
        %v828 = vpop.trf.xlu0
        %v829 = vpop.trf.xlu0
        %v830 = vpop.trf.xlu0
        %v831 = vpop.trf.xlu0
        %v832 = vpop.trf.xlu0
        %v833 = vpop.trf.xlu0
        %v834 = vpop.trf.xlu0
        %v835 = vpop.trf.xlu0
        %v836 = vpop.trf.xlu0
        %837 = vxpose.xlu0.b32.start [1/16] %v661, 128
        %838 = vxpose.xlu0.b32.cont [2/16] 0.0, 128
        %839 = vxpose.xlu0.b32.cont [3/16] 0.0, 128
        %840 = vxpose.xlu0.b32.cont [4/16] 0.0, 128
        %841 = vxpose.xlu0.b32.cont [5/16] 0.0, 128
        %842 = vxpose.xlu0.b32.cont [6/16] 0.0, 128
        %843 = vxpose.xlu0.b32.cont [7/16] 0.0, 128
        %844 = vxpose.xlu0.b32.cont [8/16] 0.0, 128
        %845 = vxpose.xlu0.b32.cont [9/16] 0.0, 128
        %846 = vxpose.xlu0.b32.cont [10/16] 0.0, 128
        %847 = vxpose.xlu0.b32.cont [11/16] 0.0, 128
        %848 = vxpose.xlu0.b32.cont [12/16] 0.0, 128
        %849 = vxpose.xlu0.b32.cont [13/16] 0.0, 128
        %850 = vxpose.xlu0.b32.cont [14/16] 0.0, 128
        %851 = vxpose.xlu0.b32.cont [15/16] 0.0, 128
        %852 = vxpose.xlu0.b32.end [16/16] 0.0, 128
        %v853 = vpop.trf.xlu0
        %v854 = vpop.trf.xlu0
        %v855 = vpop.trf.xlu0
        %v856 = vpop.trf.xlu0
        %v857 = vpop.trf.xlu0
        %v858 = vpop.trf.xlu0
        %v859 = vpop.trf.xlu0
        %v860 = vpop.trf.xlu0
        %v861 = vpop.trf.xlu0
        %v862 = vpop.trf.xlu0
        %v863 = vpop.trf.xlu0
        %v864 = vpop.trf.xlu0
        %v865 = vpop.trf.xlu0
        %v866 = vpop.trf.xlu0
        %v867 = vpop.trf.xlu0
        %v868 = vpop.trf.xlu0
        %869 = vxpose.xlu0.b32.start [1/16] %v663, 128
        %870 = vxpose.xlu0.b32.cont [2/16] 0.0, 128
        %871 = vxpose.xlu0.b32.cont [3/16] 0.0, 128
        %872 = vxpose.xlu0.b32.cont [4/16] 0.0, 128
        %873 = vxpose.xlu0.b32.cont [5/16] 0.0, 128
        %874 = vxpose.xlu0.b32.cont [6/16] 0.0, 128
        %875 = vxpose.xlu0.b32.cont [7/16] 0.0, 128
        %876 = vxpose.xlu0.b32.cont [8/16] 0.0, 128
        %877 = vxpose.xlu0.b32.cont [9/16] 0.0, 128
        %878 = vxpose.xlu0.b32.cont [10/16] 0.0, 128
        %879 = vxpose.xlu0.b32.cont [11/16] 0.0, 128
        %880 = vxpose.xlu0.b32.cont [12/16] 0.0, 128
        %881 = vxpose.xlu0.b32.cont [13/16] 0.0, 128
        %882 = vxpose.xlu0.b32.cont [14/16] 0.0, 128
        %883 = vxpose.xlu0.b32.cont [15/16] 0.0, 128
        %884 = vxpose.xlu0.b32.end [16/16] 0.0, 128
        %v885 = vpop.trf.xlu0
        %v886 = vpop.trf.xlu0
        %v887 = vpop.trf.xlu0
        %v888 = vpop.trf.xlu0
        %v889 = vpop.trf.xlu0
        %v890 = vpop.trf.xlu0
        %v891 = vpop.trf.xlu0
        %v892 = vpop.trf.xlu0
        %v893 = vpop.trf.xlu0
        %v894 = vpop.trf.xlu0
        %v895 = vpop.trf.xlu0
        %v896 = vpop.trf.xlu0
        %v897 = vpop.trf.xlu0
        %v898 = vpop.trf.xlu0
        %v899 = vpop.trf.xlu0
        %v900 = vpop.trf.xlu0
        %901 = vxpose.xlu0.b32.start [1/16] %v665, 128
        %902 = vxpose.xlu0.b32.cont [2/16] 0.0, 128
        %903 = vxpose.xlu0.b32.cont [3/16] 0.0, 128
        %904 = vxpose.xlu0.b32.cont [4/16] 0.0, 128
        %905 = vxpose.xlu0.b32.cont [5/16] 0.0, 128
        %906 = vxpose.xlu0.b32.cont [6/16] 0.0, 128
        %907 = vxpose.xlu0.b32.cont [7/16] 0.0, 128
        %908 = vxpose.xlu0.b32.cont [8/16] 0.0, 128
        %909 = vxpose.xlu0.b32.cont [9/16] 0.0, 128
        %910 = vxpose.xlu0.b32.cont [10/16] 0.0, 128
        %911 = vxpose.xlu0.b32.cont [11/16] 0.0, 128
        %912 = vxpose.xlu0.b32.cont [12/16] 0.0, 128
        %913 = vxpose.xlu0.b32.cont [13/16] 0.0, 128
        %914 = vxpose.xlu0.b32.cont [14/16] 0.0, 128
        %915 = vxpose.xlu0.b32.cont [15/16] 0.0, 128
        %916 = vxpose.xlu0.b32.end [16/16] 0.0, 128
        %v917 = vpop.trf.xlu0
        %v918 = vpop.trf.xlu0
        %v919 = vpop.trf.xlu0
        %v920 = vpop.trf.xlu0
        %v921 = vpop.trf.xlu0
        %v922 = vpop.trf.xlu0
        %v923 = vpop.trf.xlu0
        %v924 = vpop.trf.xlu0
        %v925 = vpop.trf.xlu0
        %v926 = vpop.trf.xlu0
        %v927 = vpop.trf.xlu0
        %v928 = vpop.trf.xlu0
        %v929 = vpop.trf.xlu0
        %v930 = vpop.trf.xlu0
        %v931 = vpop.trf.xlu0
        %v932 = vpop.trf.xlu0
        %933 = vxpose.xlu0.b32.start [1/16] %v667, 128
        %934 = vxpose.xlu0.b32.cont [2/16] 0.0, 128
        %935 = vxpose.xlu0.b32.cont [3/16] 0.0, 128
        %936 = vxpose.xlu0.b32.cont [4/16] 0.0, 128
        %937 = vxpose.xlu0.b32.cont [5/16] 0.0, 128
        %938 = vxpose.xlu0.b32.cont [6/16] 0.0, 128
        %939 = vxpose.xlu0.b32.cont [7/16] 0.0, 128
        %940 = vxpose.xlu0.b32.cont [8/16] 0.0, 128
        %941 = vxpose.xlu0.b32.cont [9/16] 0.0, 128
        %942 = vxpose.xlu0.b32.cont [10/16] 0.0, 128
        %943 = vxpose.xlu0.b32.cont [11/16] 0.0, 128
        %944 = vxpose.xlu0.b32.cont [12/16] 0.0, 128
        %945 = vxpose.xlu0.b32.cont [13/16] 0.0, 128
        %946 = vxpose.xlu0.b32.cont [14/16] 0.0, 128
        %947 = vxpose.xlu0.b32.cont [15/16] 0.0, 128
        %948 = vxpose.xlu0.b32.end [16/16] 0.0, 128
        %v949 = vpop.trf.xlu0
        %v950 = vpop.trf.xlu0
        %v951 = vpop.trf.xlu0
        %v952 = vpop.trf.xlu0
        %v953 = vpop.trf.xlu0
        %v954 = vpop.trf.xlu0
        %v955 = vpop.trf.xlu0
        %v956 = vpop.trf.xlu0
        %v957 = vpop.trf.xlu0
        %v958 = vpop.trf.xlu0
        %v959 = vpop.trf.xlu0
        %v960 = vpop.trf.xlu0
        %v961 = vpop.trf.xlu0
        %v962 = vpop.trf.xlu0
        %v963 = vpop.trf.xlu0
        %v964 = vpop.trf.xlu0
        %v965 = vpack.c.bf16 %v726, %v725
        %v966 = vpack.c.bf16 %v728, %v727
        %v967 = vpack.c.bf16 %v730, %v729
        %v968 = vpack.c.bf16 %v732, %v731
        %v969 = vpack.c.bf16 %v734, %v733
        %v970 = vpack.c.bf16 %v736, %v735
        %v971 = vpack.c.bf16 %v738, %v737
        %v972 = vpack.c.bf16 %v740, %v739
        %v973 = vpack.c.bf16 %v758, %v757
        %v974 = vpack.c.bf16 %v760, %v759
        %v975 = vpack.c.bf16 %v762, %v761
        %v976 = vpack.c.bf16 %v764, %v763
        %v977 = vpack.c.bf16 %v766, %v765
        %v978 = vpack.c.bf16 %v768, %v767
        %v979 = vpack.c.bf16 %v770, %v769
        %v980 = vpack.c.bf16 %v772, %v771
        %v981 = vpack.c.bf16 %v790, %v789
        %v982 = vpack.c.bf16 %v792, %v791
        %v983 = vpack.c.bf16 %v794, %v793
        %v984 = vpack.c.bf16 %v796, %v795
        %v985 = vpack.c.bf16 %v798, %v797
        %v986 = vpack.c.bf16 %v800, %v799
        %v987 = vpack.c.bf16 %v802, %v801
        %v988 = vpack.c.bf16 %v804, %v803
        %v989 = vpack.c.bf16 %v822, %v821
        %v990 = vpack.c.bf16 %v824, %v823
        %v991 = vpack.c.bf16 %v826, %v825
        %v992 = vpack.c.bf16 %v828, %v827
        %v993 = vpack.c.bf16 %v830, %v829
        %v994 = vpack.c.bf16 %v832, %v831
        %v995 = vpack.c.bf16 %v834, %v833
        %v996 = vpack.c.bf16 %v836, %v835
        %v997 = vpack.c.bf16 %v854, %v853
        %v998 = vpack.c.bf16 %v856, %v855
        %v999 = vpack.c.bf16 %v858, %v857
        %v1000 = vpack.c.bf16 %v860, %v859
        %v1001 = vpack.c.bf16 %v862, %v861
        %v1002 = vpack.c.bf16 %v864, %v863
        %v1003 = vpack.c.bf16 %v866, %v865
        %v1004 = vpack.c.bf16 %v868, %v867
        %v1005 = vpack.c.bf16 %v886, %v885
        %v1006 = vpack.c.bf16 %v888, %v887
        %v1007 = vpack.c.bf16 %v890, %v889
        %v1008 = vpack.c.bf16 %v892, %v891
        %v1009 = vpack.c.bf16 %v894, %v893
        %v1010 = vpack.c.bf16 %v896, %v895
        %v1011 = vpack.c.bf16 %v898, %v897
        %v1012 = vpack.c.bf16 %v900, %v899
        %v1013 = vpack.c.bf16 %v918, %v917
        %v1014 = vpack.c.bf16 %v920, %v919
        %v1015 = vpack.c.bf16 %v922, %v921
        %v1016 = vpack.c.bf16 %v924, %v923
        %v1017 = vpack.c.bf16 %v926, %v925
        %v1018 = vpack.c.bf16 %v928, %v927
        %v1019 = vpack.c.bf16 %v930, %v929
        %v1020 = vpack.c.bf16 %v932, %v931
        %v1021 = vpack.c.bf16 %v950, %v949
        %v1022 = vpack.c.bf16 %v952, %v951
        %v1023 = vpack.c.bf16 %v954, %v953
        %v1024 = vpack.c.bf16 %v956, %v955
        %v1025 = vpack.c.bf16 %v958, %v957
        %v1026 = vpack.c.bf16 %v960, %v959
        %v1027 = vpack.c.bf16 %v962, %v961
        %v1028 = vpack.c.bf16 %v964, %v963
        %v1029 = vpack.c.bf16 %v671, %v671
        %v1030 = vpack.c.bf16 %v673, %v673
        %v1031 = vpack.c.bf16 %v675, %v675
        %v1032 = vpack.c.bf16 %v677, %v677
        %v1033 = vpack.c.bf16 %v681, %v681
        %v1034 = vpack.c.bf16 %v683, %v683
        %v1035 = vpack.c.bf16 %v685, %v685
        %v1036 = vpack.c.bf16 %v687, %v687
        %vm1037 = vcmask 64512
        %v1039 = vsel %vm1037, %v965, 0
        %v1042 = vsel %vm1037, %v966, 0
        %v1045 = vsel %vm1037, %v967, 0
        %v1048 = vsel %vm1037, %v968, 0
        %v1051 = vsel %vm1037, %v969, 0
        %v1054 = vsel %vm1037, %v970, 0
        %v1057 = vsel %vm1037, %v971, 0
        %v1060 = vsel %vm1037, %v972, 0
        %v1063 = vsel %vm1037, %v973, 0
        %v1066 = vsel %vm1037, %v974, 0
        %v1069 = vsel %vm1037, %v975, 0
        %v1072 = vsel %vm1037, %v976, 0
        %v1075 = vsel %vm1037, %v977, 0
        %v1078 = vsel %vm1037, %v978, 0
        %v1081 = vsel %vm1037, %v979, 0
        %v1084 = vsel %vm1037, %v980, 0
        %vm1086 = vcmask 1043456
        %v1088 = vsel %vm1086, %v1029, 0
        %v1091 = vsel %vm1086, %v1030, 0
        %1093 = vmatprep.subr.bf16.mxu0 %v1091
        %1094 = vmatpush1.bf16.msra.mxu0 %v1088
        %1095 = vmatprep.subr.bf16.mxu0 0
        %1096 = vmatpush1.bf16.msra.mxu0 0
        %1097 = vmatprep.subr.bf16.mxu0 0
        %1098 = vmatpush1.bf16.msra.mxu0 0
        %1099 = vmatprep.subr.bf16.mxu0 0
        %1100 = vmatpush1.bf16.msra.mxu0 0
        %1101 = vmatprep.subr.bf16.mxu0 0
        %1102 = vmatpush1.bf16.msra.mxu0 0
        %1103 = vmatprep.subr.bf16.mxu0 0
        %1104 = vmatpush1.bf16.msra.mxu0 0
        %1105 = vmatprep.subr.bf16.mxu0 0
        %1106 = vmatpush1.bf16.msra.mxu0 0
        %1107 = vmatprep.subr.bf16.mxu0 0
        %1108 = vmatpush1.bf16.msra.mxu0 0
        %1109 = vmatprep.subr.bf16.mxu0 0
        %1110 = vmatpush1.bf16.msra.mxu0 0
        %1111 = vmatprep.subr.bf16.mxu0 0
        %1112 = vmatpush1.bf16.msra.mxu0 0
        %1113 = vmatprep.subr.bf16.mxu0 0
        %1114 = vmatpush1.bf16.msra.mxu0 0
        %1115 = vmatprep.subr.bf16.mxu0 0
        %1116 = vmatpush1.bf16.msra.mxu0 0
        %1117 = vmatprep.subr.bf16.mxu0 0
        %1118 = vmatpush1.bf16.msra.mxu0 0
        %1119 = vmatprep.subr.bf16.mxu0 0
        %1120 = vmatpush1.bf16.msra.mxu0 0
        %1121 = vmatprep.subr.bf16.mxu0 0
        %1122 = vmatpush1.bf16.msra.mxu0 0
        %1123 = vmatprep.subr.bf16.mxu0 0
        %1124 = vmatpush1.bf16.msra.mxu0 0
        %1125 = vmatprep.mubr.bf16.mxu0 0
        %1126 = vmatmul.mubr.bf16.gmra.mrb[0].mxu0 %v1039
        %v1127 = vpop.f32.mrb[0].mxu0
        %v1128 = vadd.f32 0.0, %v1127
        %v1129 = vpop.f32.mrb[0].mxu0
        %v1130 = vadd.f32 0.0, %v1129
        %v1131 = vpop.f32.mrb[0].mxu0
        %v1132 = vadd.f32 0.0, %v1131
        %v1133 = vpop.f32.mrb[0].mxu0
        %v1134 = vadd.f32 0.0, %v1133
        %1135 = vmatprep.mubr.bf16.mxu0 0
        %1136 = vmatmul.mubr.bf16.gmra.mrb[0].mxu0 %v1042
        %v1137 = vpop.f32.mrb[0].mxu0
        %v1138 = vadd.f32 0.0, %v1137
        %v1139 = vpop.f32.mrb[0].mxu0
        %v1140 = vadd.f32 0.0, %v1139
        %v1141 = vpop.f32.mrb[0].mxu0
        %v1142 = vadd.f32 0.0, %v1141
        %v1143 = vpop.f32.mrb[0].mxu0
        %v1144 = vadd.f32 0.0, %v1143
        %1145 = vmatprep.mubr.bf16.mxu0 0
        %1146 = vmatmul.mubr.bf16.gmra.mrb[0].mxu0 %v1045
        %v1147 = vpop.f32.mrb[0].mxu0
        %v1148 = vadd.f32 0.0, %v1147
        %v1149 = vpop.f32.mrb[0].mxu0
        %v1150 = vadd.f32 0.0, %v1149
        %v1151 = vpop.f32.mrb[0].mxu0
        %v1152 = vadd.f32 0.0, %v1151
        %v1153 = vpop.f32.mrb[0].mxu0
        %v1154 = vadd.f32 0.0, %v1153
        %1155 = vmatprep.mubr.bf16.mxu0 0
        %1156 = vmatmul.mubr.bf16.gmra.mrb[0].mxu0 %v1048
        %v1157 = vpop.f32.mrb[0].mxu0
        %v1158 = vadd.f32 0.0, %v1157
        %v1159 = vpop.f32.mrb[0].mxu0
        %v1160 = vadd.f32 0.0, %v1159
        %v1161 = vpop.f32.mrb[0].mxu0
        %v1162 = vadd.f32 0.0, %v1161
        %v1163 = vpop.f32.mrb[0].mxu0
        %v1164 = vadd.f32 0.0, %v1163
        %1165 = vmatprep.mubr.bf16.mxu0 0
        %1166 = vmatmul.mubr.bf16.gmra.mrb[0].mxu0 %v1051
        %v1167 = vpop.f32.mrb[0].mxu0
        %v1168 = vadd.f32 0.0, %v1167
        %v1169 = vpop.f32.mrb[0].mxu0
        %v1170 = vadd.f32 0.0, %v1169
        %v1171 = vpop.f32.mrb[0].mxu0
        %v1172 = vadd.f32 0.0, %v1171
        %v1173 = vpop.f32.mrb[0].mxu0
        %v1174 = vadd.f32 0.0, %v1173
        %1175 = vmatprep.mubr.bf16.mxu0 0
        %1176 = vmatmul.mubr.bf16.gmra.mrb[0].mxu0 %v1054
        %v1177 = vpop.f32.mrb[0].mxu0
        %v1178 = vadd.f32 0.0, %v1177
        %v1179 = vpop.f32.mrb[0].mxu0
        %v1180 = vadd.f32 0.0, %v1179
        %v1181 = vpop.f32.mrb[0].mxu0
        %v1182 = vadd.f32 0.0, %v1181
        %v1183 = vpop.f32.mrb[0].mxu0
        %v1184 = vadd.f32 0.0, %v1183
        %1185 = vmatprep.mubr.bf16.mxu0 0
        %1186 = vmatmul.mubr.bf16.gmra.mrb[0].mxu0 %v1057
        %v1187 = vpop.f32.mrb[0].mxu0
        %v1188 = vadd.f32 0.0, %v1187
        %v1189 = vpop.f32.mrb[0].mxu0
        %v1190 = vadd.f32 0.0, %v1189
        %v1191 = vpop.f32.mrb[0].mxu0
        %v1192 = vadd.f32 0.0, %v1191
        %v1193 = vpop.f32.mrb[0].mxu0
        %v1194 = vadd.f32 0.0, %v1193
        %1195 = vmatprep.mubr.bf16.mxu0 0
        %1196 = vmatmul.mubr.bf16.gmra.mrb[0].mxu0 %v1060
        %v1197 = vpop.f32.mrb[0].mxu0
        %v1198 = vadd.f32 0.0, %v1197
        %v1199 = vpop.f32.mrb[0].mxu0
        %v1200 = vadd.f32 0.0, %v1199
        %v1201 = vpop.f32.mrb[0].mxu0
        %v1202 = vadd.f32 0.0, %v1201
        %v1203 = vpop.f32.mrb[0].mxu0
        %v1204 = vadd.f32 0.0, %v1203
        %1205 = vmatprep.mubr.bf16.mxu0 0
        %1206 = vmatmul.mubr.bf16.gmra.mrb[0].mxu0 %v1063
        %v1207 = vpop.f32.mrb[0].mxu0
        %v1208 = vadd.f32 0.0, %v1207
        %v1209 = vpop.f32.mrb[0].mxu0
        %v1210 = vadd.f32 0.0, %v1209
        %v1211 = vpop.f32.mrb[0].mxu0
        %v1212 = vadd.f32 0.0, %v1211
        %v1213 = vpop.f32.mrb[0].mxu0
        %v1214 = vadd.f32 0.0, %v1213
        %1215 = vmatprep.mubr.bf16.mxu0 0
        %1216 = vmatmul.mubr.bf16.gmra.mrb[0].mxu0 %v1066
        %v1217 = vpop.f32.mrb[0].mxu0
        %v1218 = vadd.f32 0.0, %v1217
        %v1219 = vpop.f32.mrb[0].mxu0
        %v1220 = vadd.f32 0.0, %v1219
        %v1221 = vpop.f32.mrb[0].mxu0
        %v1222 = vadd.f32 0.0, %v1221
        %v1223 = vpop.f32.mrb[0].mxu0
        %v1224 = vadd.f32 0.0, %v1223
        %1225 = vmatprep.mubr.bf16.mxu0 0
        %1226 = vmatmul.mubr.bf16.gmra.mrb[0].mxu0 %v1069
        %v1227 = vpop.f32.mrb[0].mxu0
        %v1228 = vadd.f32 0.0, %v1227
        %v1229 = vpop.f32.mrb[0].mxu0
        %v1230 = vadd.f32 0.0, %v1229
        %v1231 = vpop.f32.mrb[0].mxu0
        %v1232 = vadd.f32 0.0, %v1231
        %v1233 = vpop.f32.mrb[0].mxu0
        %v1234 = vadd.f32 0.0, %v1233
        %1235 = vmatprep.mubr.bf16.mxu0 0
        %1236 = vmatmul.mubr.bf16.gmra.mrb[0].mxu0 %v1072
        %v1237 = vpop.f32.mrb[0].mxu0
        %v1238 = vadd.f32 0.0, %v1237
        %v1239 = vpop.f32.mrb[0].mxu0
        %v1240 = vadd.f32 0.0, %v1239
        %v1241 = vpop.f32.mrb[0].mxu0
        %v1242 = vadd.f32 0.0, %v1241
        %v1243 = vpop.f32.mrb[0].mxu0
        %v1244 = vadd.f32 0.0, %v1243
        %1245 = vmatprep.mubr.bf16.mxu0 0
        %1246 = vmatmul.mubr.bf16.gmra.mrb[0].mxu0 %v1075
        %v1247 = vpop.f32.mrb[0].mxu0
        %v1248 = vadd.f32 0.0, %v1247
        %v1249 = vpop.f32.mrb[0].mxu0
        %v1250 = vadd.f32 0.0, %v1249
        %v1251 = vpop.f32.mrb[0].mxu0
        %v1252 = vadd.f32 0.0, %v1251
        %v1253 = vpop.f32.mrb[0].mxu0
        %v1254 = vadd.f32 0.0, %v1253
        %1255 = vmatprep.mubr.bf16.mxu0 0
        %1256 = vmatmul.mubr.bf16.gmra.mrb[0].mxu0 %v1078
        %v1257 = vpop.f32.mrb[0].mxu0
        %v1258 = vadd.f32 0.0, %v1257
        %v1259 = vpop.f32.mrb[0].mxu0
        %v1260 = vadd.f32 0.0, %v1259
        %v1261 = vpop.f32.mrb[0].mxu0
        %v1262 = vadd.f32 0.0, %v1261
        %v1263 = vpop.f32.mrb[0].mxu0
        %v1264 = vadd.f32 0.0, %v1263
        %1265 = vmatprep.mubr.bf16.mxu0 0
        %1266 = vmatmul.mubr.bf16.gmra.mrb[0].mxu0 %v1081
        %v1267 = vpop.f32.mrb[0].mxu0
        %v1268 = vadd.f32 0.0, %v1267
        %v1269 = vpop.f32.mrb[0].mxu0
        %v1270 = vadd.f32 0.0, %v1269
        %v1271 = vpop.f32.mrb[0].mxu0
        %v1272 = vadd.f32 0.0, %v1271
        %v1273 = vpop.f32.mrb[0].mxu0
        %v1274 = vadd.f32 0.0, %v1273
        %1275 = vmatprep.mubr.bf16.mxu0 0
        %1276 = vmatmul.mubr.bf16.gmra.mrb[0].mxu0 %v1084
        %v1277 = vpop.f32.mrb[0].mxu0
        %v1278 = vadd.f32 0.0, %v1277
        %v1279 = vpop.f32.mrb[0].mxu0
        %v1280 = vadd.f32 0.0, %v1279
        %v1281 = vpop.f32.mrb[0].mxu0
        %v1282 = vadd.f32 0.0, %v1281
        %v1283 = vpop.f32.mrb[0].mxu0
        %v1284 = vadd.f32 0.0, %v1283
        %1285 = vdwg.mxu0
        %v1287 = vsel %vm1037, %v981, 0
        %v1290 = vsel %vm1037, %v982, 0
        %v1293 = vsel %vm1037, %v983, 0
        %v1296 = vsel %vm1037, %v984, 0
        %v1299 = vsel %vm1037, %v985, 0
        %v1302 = vsel %vm1037, %v986, 0
        %v1305 = vsel %vm1037, %v987, 0
        %v1308 = vsel %vm1037, %v988, 0
        %v1311 = vsel %vm1037, %v989, 0
        %v1314 = vsel %vm1037, %v990, 0
        %v1317 = vsel %vm1037, %v991, 0
        %v1320 = vsel %vm1037, %v992, 0
        %v1323 = vsel %vm1037, %v993, 0
        %v1326 = vsel %vm1037, %v994, 0
        %v1329 = vsel %vm1037, %v995, 0
        %v1332 = vsel %vm1037, %v996, 0
        %v1335 = vsel %vm1086, %v1031, 0
        %v1338 = vsel %vm1086, %v1032, 0
        %1340 = vmatprep.subr.bf16.mxu0 %v1338
        %1341 = vmatpush1.bf16.msra.mxu0 %v1335
        %1342 = vmatprep.subr.bf16.mxu0 0
        %1343 = vmatpush1.bf16.msra.mxu0 0
        %1344 = vmatprep.subr.bf16.mxu0 0
        %1345 = vmatpush1.bf16.msra.mxu0 0
        %1346 = vmatprep.subr.bf16.mxu0 0
        %1347 = vmatpush1.bf16.msra.mxu0 0
        %1348 = vmatprep.subr.bf16.mxu0 0
        %1349 = vmatpush1.bf16.msra.mxu0 0
        %1350 = vmatprep.subr.bf16.mxu0 0
        %1351 = vmatpush1.bf16.msra.mxu0 0
        %1352 = vmatprep.subr.bf16.mxu0 0
        %1353 = vmatpush1.bf16.msra.mxu0 0
        %1354 = vmatprep.subr.bf16.mxu0 0
        %1355 = vmatpush1.bf16.msra.mxu0 0
        %1356 = vmatprep.subr.bf16.mxu0 0
        %1357 = vmatpush1.bf16.msra.mxu0 0
        %1358 = vmatprep.subr.bf16.mxu0 0
        %1359 = vmatpush1.bf16.msra.mxu0 0
        %1360 = vmatprep.subr.bf16.mxu0 0
        %1361 = vmatpush1.bf16.msra.mxu0 0
        %1362 = vmatprep.subr.bf16.mxu0 0
        %1363 = vmatpush1.bf16.msra.mxu0 0
        %1364 = vmatprep.subr.bf16.mxu0 0
        %1365 = vmatpush1.bf16.msra.mxu0 0
        %1366 = vmatprep.subr.bf16.mxu0 0
        %1367 = vmatpush1.bf16.msra.mxu0 0
        %1368 = vmatprep.subr.bf16.mxu0 0
        %1369 = vmatpush1.bf16.msra.mxu0 0
        %1370 = vmatprep.subr.bf16.mxu0 0
        %1371 = vmatpush1.bf16.msra.mxu0 0
        %1372 = vmatprep.mubr.bf16.mxu0 0
        %1373 = vmatmul.mubr.bf16.gmra.mrb[0].mxu0 %v1287
        %v1374 = vpop.f32.mrb[0].mxu0
        %v1375 = vadd.f32 0.0, %v1374
        %v1376 = vpop.f32.mrb[0].mxu0
        %v1377 = vadd.f32 0.0, %v1376
        %v1378 = vpop.f32.mrb[0].mxu0
        %v1379 = vadd.f32 0.0, %v1378
        %v1380 = vpop.f32.mrb[0].mxu0
        %v1381 = vadd.f32 0.0, %v1380
        %1382 = vmatprep.mubr.bf16.mxu0 0
        %1383 = vmatmul.mubr.bf16.gmra.mrb[0].mxu0 %v1290
        %v1384 = vpop.f32.mrb[0].mxu0
        %v1385 = vadd.f32 0.0, %v1384
        %v1386 = vpop.f32.mrb[0].mxu0
        %v1387 = vadd.f32 0.0, %v1386
        %v1388 = vpop.f32.mrb[0].mxu0
        %v1389 = vadd.f32 0.0, %v1388
        %v1390 = vpop.f32.mrb[0].mxu0
        %v1391 = vadd.f32 0.0, %v1390
        %1392 = vmatprep.mubr.bf16.mxu0 0
        %1393 = vmatmul.mubr.bf16.gmra.mrb[0].mxu0 %v1293
        %v1394 = vpop.f32.mrb[0].mxu0
        %v1395 = vadd.f32 0.0, %v1394
        %v1396 = vpop.f32.mrb[0].mxu0
        %v1397 = vadd.f32 0.0, %v1396
        %v1398 = vpop.f32.mrb[0].mxu0
        %v1399 = vadd.f32 0.0, %v1398
        %v1400 = vpop.f32.mrb[0].mxu0
        %v1401 = vadd.f32 0.0, %v1400
        %1402 = vmatprep.mubr.bf16.mxu0 0
        %1403 = vmatmul.mubr.bf16.gmra.mrb[0].mxu0 %v1296
        %v1404 = vpop.f32.mrb[0].mxu0
        %v1405 = vadd.f32 0.0, %v1404
        %v1406 = vpop.f32.mrb[0].mxu0
        %v1407 = vadd.f32 0.0, %v1406
        %v1408 = vpop.f32.mrb[0].mxu0
        %v1409 = vadd.f32 0.0, %v1408
        %v1410 = vpop.f32.mrb[0].mxu0
        %v1411 = vadd.f32 0.0, %v1410
        %1412 = vmatprep.mubr.bf16.mxu0 0
        %1413 = vmatmul.mubr.bf16.gmra.mrb[0].mxu0 %v1299
        %v1414 = vpop.f32.mrb[0].mxu0
        %v1415 = vadd.f32 0.0, %v1414
        %v1416 = vpop.f32.mrb[0].mxu0
        %v1417 = vadd.f32 0.0, %v1416
        %v1418 = vpop.f32.mrb[0].mxu0
        %v1419 = vadd.f32 0.0, %v1418
        %v1420 = vpop.f32.mrb[0].mxu0
        %v1421 = vadd.f32 0.0, %v1420
        %1422 = vmatprep.mubr.bf16.mxu0 0
        %1423 = vmatmul.mubr.bf16.gmra.mrb[0].mxu0 %v1302
        %v1424 = vpop.f32.mrb[0].mxu0
        %v1425 = vadd.f32 0.0, %v1424
        %v1426 = vpop.f32.mrb[0].mxu0
        %v1427 = vadd.f32 0.0, %v1426
        %v1428 = vpop.f32.mrb[0].mxu0
        %v1429 = vadd.f32 0.0, %v1428
        %v1430 = vpop.f32.mrb[0].mxu0
        %v1431 = vadd.f32 0.0, %v1430
        %1432 = vmatprep.mubr.bf16.mxu0 0
        %1433 = vmatmul.mubr.bf16.gmra.mrb[0].mxu0 %v1305
        %v1434 = vpop.f32.mrb[0].mxu0
        %v1435 = vadd.f32 0.0, %v1434
        %v1436 = vpop.f32.mrb[0].mxu0
        %v1437 = vadd.f32 0.0, %v1436
        %v1438 = vpop.f32.mrb[0].mxu0
        %v1439 = vadd.f32 0.0, %v1438
        %v1440 = vpop.f32.mrb[0].mxu0
        %v1441 = vadd.f32 0.0, %v1440
        %1442 = vmatprep.mubr.bf16.mxu0 0
        %1443 = vmatmul.mubr.bf16.gmra.mrb[0].mxu0 %v1308
        %v1444 = vpop.f32.mrb[0].mxu0
        %v1445 = vadd.f32 0.0, %v1444
        %v1446 = vpop.f32.mrb[0].mxu0
        %v1447 = vadd.f32 0.0, %v1446
        %v1448 = vpop.f32.mrb[0].mxu0
        %v1449 = vadd.f32 0.0, %v1448
        %v1450 = vpop.f32.mrb[0].mxu0
        %v1451 = vadd.f32 0.0, %v1450
        %1452 = vmatprep.mubr.bf16.mxu0 0
        %1453 = vmatmul.mubr.bf16.gmra.mrb[0].mxu0 %v1311
        %v1454 = vpop.f32.mrb[0].mxu0
        %v1455 = vadd.f32 0.0, %v1454
        %v1456 = vpop.f32.mrb[0].mxu0
        %v1457 = vadd.f32 0.0, %v1456
        %v1458 = vpop.f32.mrb[0].mxu0
        %v1459 = vadd.f32 0.0, %v1458
        %v1460 = vpop.f32.mrb[0].mxu0
        %v1461 = vadd.f32 0.0, %v1460
        %1462 = vmatprep.mubr.bf16.mxu0 0
        %1463 = vmatmul.mubr.bf16.gmra.mrb[0].mxu0 %v1314
        %v1464 = vpop.f32.mrb[0].mxu0
        %v1465 = vadd.f32 0.0, %v1464
        %v1466 = vpop.f32.mrb[0].mxu0
        %v1467 = vadd.f32 0.0, %v1466
        %v1468 = vpop.f32.mrb[0].mxu0
        %v1469 = vadd.f32 0.0, %v1468
        %v1470 = vpop.f32.mrb[0].mxu0
        %v1471 = vadd.f32 0.0, %v1470
        %1472 = vmatprep.mubr.bf16.mxu0 0
        %1473 = vmatmul.mubr.bf16.gmra.mrb[0].mxu0 %v1317
        %v1474 = vpop.f32.mrb[0].mxu0
        %v1475 = vadd.f32 0.0, %v1474
        %v1476 = vpop.f32.mrb[0].mxu0
        %v1477 = vadd.f32 0.0, %v1476
        %v1478 = vpop.f32.mrb[0].mxu0
        %v1479 = vadd.f32 0.0, %v1478
        %v1480 = vpop.f32.mrb[0].mxu0
        %v1481 = vadd.f32 0.0, %v1480
        %1482 = vmatprep.mubr.bf16.mxu0 0
        %1483 = vmatmul.mubr.bf16.gmra.mrb[0].mxu0 %v1320
        %v1484 = vpop.f32.mrb[0].mxu0
        %v1485 = vadd.f32 0.0, %v1484
        %v1486 = vpop.f32.mrb[0].mxu0
        %v1487 = vadd.f32 0.0, %v1486
        %v1488 = vpop.f32.mrb[0].mxu0
        %v1489 = vadd.f32 0.0, %v1488
        %v1490 = vpop.f32.mrb[0].mxu0
        %v1491 = vadd.f32 0.0, %v1490
        %1492 = vmatprep.mubr.bf16.mxu0 0
        %1493 = vmatmul.mubr.bf16.gmra.mrb[0].mxu0 %v1323
        %v1494 = vpop.f32.mrb[0].mxu0
        %v1495 = vadd.f32 0.0, %v1494
        %v1496 = vpop.f32.mrb[0].mxu0
        %v1497 = vadd.f32 0.0, %v1496
        %v1498 = vpop.f32.mrb[0].mxu0
        %v1499 = vadd.f32 0.0, %v1498
        %v1500 = vpop.f32.mrb[0].mxu0
        %v1501 = vadd.f32 0.0, %v1500
        %1502 = vmatprep.mubr.bf16.mxu0 0
        %1503 = vmatmul.mubr.bf16.gmra.mrb[0].mxu0 %v1326
        %v1504 = vpop.f32.mrb[0].mxu0
        %v1505 = vadd.f32 0.0, %v1504
        %v1506 = vpop.f32.mrb[0].mxu0
        %v1507 = vadd.f32 0.0, %v1506
        %v1508 = vpop.f32.mrb[0].mxu0
        %v1509 = vadd.f32 0.0, %v1508
        %v1510 = vpop.f32.mrb[0].mxu0
        %v1511 = vadd.f32 0.0, %v1510
        %1512 = vmatprep.mubr.bf16.mxu0 0
        %1513 = vmatmul.mubr.bf16.gmra.mrb[0].mxu0 %v1329
        %v1514 = vpop.f32.mrb[0].mxu0
        %v1515 = vadd.f32 0.0, %v1514
        %v1516 = vpop.f32.mrb[0].mxu0
        %v1517 = vadd.f32 0.0, %v1516
        %v1518 = vpop.f32.mrb[0].mxu0
        %v1519 = vadd.f32 0.0, %v1518
        %v1520 = vpop.f32.mrb[0].mxu0
        %v1521 = vadd.f32 0.0, %v1520
        %1522 = vmatprep.mubr.bf16.mxu0 0
        %1523 = vmatmul.mubr.bf16.gmra.mrb[0].mxu0 %v1332
        %v1524 = vpop.f32.mrb[0].mxu0
        %v1525 = vadd.f32 0.0, %v1524
        %v1526 = vpop.f32.mrb[0].mxu0
        %v1527 = vadd.f32 0.0, %v1526
        %v1528 = vpop.f32.mrb[0].mxu0
        %v1529 = vadd.f32 0.0, %v1528
        %v1530 = vpop.f32.mrb[0].mxu0
        %v1531 = vadd.f32 0.0, %v1530
        %1532 = vdwg.mxu0
        %v1534 = vsel %vm1037, %v997, 0
        %v1537 = vsel %vm1037, %v998, 0
        %v1540 = vsel %vm1037, %v999, 0
        %v1543 = vsel %vm1037, %v1000, 0
        %v1546 = vsel %vm1037, %v1001, 0
        %v1549 = vsel %vm1037, %v1002, 0
        %v1552 = vsel %vm1037, %v1003, 0
        %v1555 = vsel %vm1037, %v1004, 0
        %v1558 = vsel %vm1037, %v1005, 0
        %v1561 = vsel %vm1037, %v1006, 0
        %v1564 = vsel %vm1037, %v1007, 0
        %v1567 = vsel %vm1037, %v1008, 0
        %v1570 = vsel %vm1037, %v1009, 0
        %v1573 = vsel %vm1037, %v1010, 0
        %v1576 = vsel %vm1037, %v1011, 0
        %v1579 = vsel %vm1037, %v1012, 0
        %v1582 = vsel %vm1086, %v1033, 0
        %v1585 = vsel %vm1086, %v1034, 0
        %1587 = vmatprep.subr.bf16.mxu0 %v1585
        %1588 = vmatpush1.bf16.msra.mxu0 %v1582
        %1589 = vmatprep.subr.bf16.mxu0 0
        %1590 = vmatpush1.bf16.msra.mxu0 0
        %1591 = vmatprep.subr.bf16.mxu0 0
        %1592 = vmatpush1.bf16.msra.mxu0 0
        %1593 = vmatprep.subr.bf16.mxu0 0
        %1594 = vmatpush1.bf16.msra.mxu0 0
        %1595 = vmatprep.subr.bf16.mxu0 0
        %1596 = vmatpush1.bf16.msra.mxu0 0
        %1597 = vmatprep.subr.bf16.mxu0 0
        %1598 = vmatpush1.bf16.msra.mxu0 0
        %1599 = vmatprep.subr.bf16.mxu0 0
        %1600 = vmatpush1.bf16.msra.mxu0 0
        %1601 = vmatprep.subr.bf16.mxu0 0
        %1602 = vmatpush1.bf16.msra.mxu0 0
        %1603 = vmatprep.subr.bf16.mxu0 0
        %1604 = vmatpush1.bf16.msra.mxu0 0
        %1605 = vmatprep.subr.bf16.mxu0 0
        %1606 = vmatpush1.bf16.msra.mxu0 0
        %1607 = vmatprep.subr.bf16.mxu0 0
        %1608 = vmatpush1.bf16.msra.mxu0 0
        %1609 = vmatprep.subr.bf16.mxu0 0
        %1610 = vmatpush1.bf16.msra.mxu0 0
        %1611 = vmatprep.subr.bf16.mxu0 0
        %1612 = vmatpush1.bf16.msra.mxu0 0
        %1613 = vmatprep.subr.bf16.mxu0 0
        %1614 = vmatpush1.bf16.msra.mxu0 0
        %1615 = vmatprep.subr.bf16.mxu0 0
        %1616 = vmatpush1.bf16.msra.mxu0 0
        %1617 = vmatprep.subr.bf16.mxu0 0
        %1618 = vmatpush1.bf16.msra.mxu0 0
        %1619 = vmatprep.mubr.bf16.mxu0 0
        %1620 = vmatmul.mubr.bf16.gmra.mrb[0].mxu0 %v1534
        %v1621 = vpop.f32.mrb[0].mxu0
        %v1622 = vadd.f32 0.0, %v1621
        %v1623 = vpop.f32.mrb[0].mxu0
        %v1624 = vadd.f32 0.0, %v1623
        %v1625 = vpop.f32.mrb[0].mxu0
        %v1626 = vadd.f32 0.0, %v1625
        %v1627 = vpop.f32.mrb[0].mxu0
        %v1628 = vadd.f32 0.0, %v1627
        %1629 = vmatprep.mubr.bf16.mxu0 0
        %1630 = vmatmul.mubr.bf16.gmra.mrb[0].mxu0 %v1537
        %v1631 = vpop.f32.mrb[0].mxu0
        %v1632 = vadd.f32 0.0, %v1631
        %v1633 = vpop.f32.mrb[0].mxu0
        %v1634 = vadd.f32 0.0, %v1633
        %v1635 = vpop.f32.mrb[0].mxu0
        %v1636 = vadd.f32 0.0, %v1635
        %v1637 = vpop.f32.mrb[0].mxu0
        %v1638 = vadd.f32 0.0, %v1637
        %1639 = vmatprep.mubr.bf16.mxu0 0
        %1640 = vmatmul.mubr.bf16.gmra.mrb[0].mxu0 %v1540
        %v1641 = vpop.f32.mrb[0].mxu0
        %v1642 = vadd.f32 0.0, %v1641
        %v1643 = vpop.f32.mrb[0].mxu0
        %v1644 = vadd.f32 0.0, %v1643
        %v1645 = vpop.f32.mrb[0].mxu0
        %v1646 = vadd.f32 0.0, %v1645
        %v1647 = vpop.f32.mrb[0].mxu0
        %v1648 = vadd.f32 0.0, %v1647
        %1649 = vmatprep.mubr.bf16.mxu0 0
        %1650 = vmatmul.mubr.bf16.gmra.mrb[0].mxu0 %v1543
        %v1651 = vpop.f32.mrb[0].mxu0
        %v1652 = vadd.f32 0.0, %v1651
        %v1653 = vpop.f32.mrb[0].mxu0
        %v1654 = vadd.f32 0.0, %v1653
        %v1655 = vpop.f32.mrb[0].mxu0
        %v1656 = vadd.f32 0.0, %v1655
        %v1657 = vpop.f32.mrb[0].mxu0
        %v1658 = vadd.f32 0.0, %v1657
        %1659 = vmatprep.mubr.bf16.mxu0 0
        %1660 = vmatmul.mubr.bf16.gmra.mrb[0].mxu0 %v1546
        %v1661 = vpop.f32.mrb[0].mxu0
        %v1662 = vadd.f32 0.0, %v1661
        %v1663 = vpop.f32.mrb[0].mxu0
        %v1664 = vadd.f32 0.0, %v1663
        %v1665 = vpop.f32.mrb[0].mxu0
        %v1666 = vadd.f32 0.0, %v1665
        %v1667 = vpop.f32.mrb[0].mxu0
        %v1668 = vadd.f32 0.0, %v1667
        %1669 = vmatprep.mubr.bf16.mxu0 0
        %1670 = vmatmul.mubr.bf16.gmra.mrb[0].mxu0 %v1549
        %v1671 = vpop.f32.mrb[0].mxu0
        %v1672 = vadd.f32 0.0, %v1671
        %v1673 = vpop.f32.mrb[0].mxu0
        %v1674 = vadd.f32 0.0, %v1673
        %v1675 = vpop.f32.mrb[0].mxu0
        %v1676 = vadd.f32 0.0, %v1675
        %v1677 = vpop.f32.mrb[0].mxu0
        %v1678 = vadd.f32 0.0, %v1677
        %1679 = vmatprep.mubr.bf16.mxu0 0
        %1680 = vmatmul.mubr.bf16.gmra.mrb[0].mxu0 %v1552
        %v1681 = vpop.f32.mrb[0].mxu0
        %v1682 = vadd.f32 0.0, %v1681
        %v1683 = vpop.f32.mrb[0].mxu0
        %v1684 = vadd.f32 0.0, %v1683
        %v1685 = vpop.f32.mrb[0].mxu0
        %v1686 = vadd.f32 0.0, %v1685
        %v1687 = vpop.f32.mrb[0].mxu0
        %v1688 = vadd.f32 0.0, %v1687
        %1689 = vmatprep.mubr.bf16.mxu0 0
        %1690 = vmatmul.mubr.bf16.gmra.mrb[0].mxu0 %v1555
        %v1691 = vpop.f32.mrb[0].mxu0
        %v1692 = vadd.f32 0.0, %v1691
        %v1693 = vpop.f32.mrb[0].mxu0
        %v1694 = vadd.f32 0.0, %v1693
        %v1695 = vpop.f32.mrb[0].mxu0
        %v1696 = vadd.f32 0.0, %v1695
        %v1697 = vpop.f32.mrb[0].mxu0
        %v1698 = vadd.f32 0.0, %v1697
        %1699 = vmatprep.mubr.bf16.mxu0 0
        %1700 = vmatmul.mubr.bf16.gmra.mrb[0].mxu0 %v1558
        %v1701 = vpop.f32.mrb[0].mxu0
        %v1702 = vadd.f32 0.0, %v1701
        %v1703 = vpop.f32.mrb[0].mxu0
        %v1704 = vadd.f32 0.0, %v1703
        %v1705 = vpop.f32.mrb[0].mxu0
        %v1706 = vadd.f32 0.0, %v1705
        %v1707 = vpop.f32.mrb[0].mxu0
        %v1708 = vadd.f32 0.0, %v1707
        %1709 = vmatprep.mubr.bf16.mxu0 0
        %1710 = vmatmul.mubr.bf16.gmra.mrb[0].mxu0 %v1561
        %v1711 = vpop.f32.mrb[0].mxu0
        %v1712 = vadd.f32 0.0, %v1711
        %v1713 = vpop.f32.mrb[0].mxu0
        %v1714 = vadd.f32 0.0, %v1713
        %v1715 = vpop.f32.mrb[0].mxu0
        %v1716 = vadd.f32 0.0, %v1715
        %v1717 = vpop.f32.mrb[0].mxu0
        %v1718 = vadd.f32 0.0, %v1717
        %1719 = vmatprep.mubr.bf16.mxu0 0
        %1720 = vmatmul.mubr.bf16.gmra.mrb[0].mxu0 %v1564
        %v1721 = vpop.f32.mrb[0].mxu0
        %v1722 = vadd.f32 0.0, %v1721
        %v1723 = vpop.f32.mrb[0].mxu0
        %v1724 = vadd.f32 0.0, %v1723
        %v1725 = vpop.f32.mrb[0].mxu0
        %v1726 = vadd.f32 0.0, %v1725
        %v1727 = vpop.f32.mrb[0].mxu0
        %v1728 = vadd.f32 0.0, %v1727
        %1729 = vmatprep.mubr.bf16.mxu0 0
        %1730 = vmatmul.mubr.bf16.gmra.mrb[0].mxu0 %v1567
        %v1731 = vpop.f32.mrb[0].mxu0
        %v1732 = vadd.f32 0.0, %v1731
        %v1733 = vpop.f32.mrb[0].mxu0
        %v1734 = vadd.f32 0.0, %v1733
        %v1735 = vpop.f32.mrb[0].mxu0
        %v1736 = vadd.f32 0.0, %v1735
        %v1737 = vpop.f32.mrb[0].mxu0
        %v1738 = vadd.f32 0.0, %v1737
        %1739 = vmatprep.mubr.bf16.mxu0 0
        %1740 = vmatmul.mubr.bf16.gmra.mrb[0].mxu0 %v1570
        %v1741 = vpop.f32.mrb[0].mxu0
        %v1742 = vadd.f32 0.0, %v1741
        %v1743 = vpop.f32.mrb[0].mxu0
        %v1744 = vadd.f32 0.0, %v1743
        %v1745 = vpop.f32.mrb[0].mxu0
        %v1746 = vadd.f32 0.0, %v1745
        %v1747 = vpop.f32.mrb[0].mxu0
        %v1748 = vadd.f32 0.0, %v1747
        %1749 = vmatprep.mubr.bf16.mxu0 0
        %1750 = vmatmul.mubr.bf16.gmra.mrb[0].mxu0 %v1573
        %v1751 = vpop.f32.mrb[0].mxu0
        %v1752 = vadd.f32 0.0, %v1751
        %v1753 = vpop.f32.mrb[0].mxu0
        %v1754 = vadd.f32 0.0, %v1753
        %v1755 = vpop.f32.mrb[0].mxu0
        %v1756 = vadd.f32 0.0, %v1755
        %v1757 = vpop.f32.mrb[0].mxu0
        %v1758 = vadd.f32 0.0, %v1757
        %1759 = vmatprep.mubr.bf16.mxu0 0
        %1760 = vmatmul.mubr.bf16.gmra.mrb[0].mxu0 %v1576
        %v1761 = vpop.f32.mrb[0].mxu0
        %v1762 = vadd.f32 0.0, %v1761
        %v1763 = vpop.f32.mrb[0].mxu0
        %v1764 = vadd.f32 0.0, %v1763
        %v1765 = vpop.f32.mrb[0].mxu0
        %v1766 = vadd.f32 0.0, %v1765
        %v1767 = vpop.f32.mrb[0].mxu0
        %v1768 = vadd.f32 0.0, %v1767
        %1769 = vmatprep.mubr.bf16.mxu0 0
        %1770 = vmatmul.mubr.bf16.gmra.mrb[0].mxu0 %v1579
        %v1771 = vpop.f32.mrb[0].mxu0
        %v1772 = vadd.f32 0.0, %v1771
        %v1773 = vpop.f32.mrb[0].mxu0
        %v1774 = vadd.f32 0.0, %v1773
        %v1775 = vpop.f32.mrb[0].mxu0
        %v1776 = vadd.f32 0.0, %v1775
        %v1777 = vpop.f32.mrb[0].mxu0
        %v1778 = vadd.f32 0.0, %v1777
        %1779 = vdwg.mxu0
        %v1781 = vsel %vm1037, %v1013, 0
        %v1784 = vsel %vm1037, %v1014, 0
        %v1787 = vsel %vm1037, %v1015, 0
        %v1790 = vsel %vm1037, %v1016, 0
        %v1793 = vsel %vm1037, %v1017, 0
        %v1796 = vsel %vm1037, %v1018, 0
        %v1799 = vsel %vm1037, %v1019, 0
        %v1802 = vsel %vm1037, %v1020, 0
        %v1805 = vsel %vm1037, %v1021, 0
        %v1808 = vsel %vm1037, %v1022, 0
        %v1811 = vsel %vm1037, %v1023, 0
        %v1814 = vsel %vm1037, %v1024, 0
        %v1817 = vsel %vm1037, %v1025, 0
        %v1820 = vsel %vm1037, %v1026, 0
        %v1823 = vsel %vm1037, %v1027, 0
        %v1826 = vsel %vm1037, %v1028, 0
        %v1829 = vsel %vm1086, %v1035, 0
        %v1832 = vsel %vm1086, %v1036, 0
        %1834 = vmatprep.subr.bf16.mxu0 %v1832
        %1835 = vmatpush1.bf16.msra.mxu0 %v1829
        %1836 = vmatprep.subr.bf16.mxu0 0
        %1837 = vmatpush1.bf16.msra.mxu0 0
        %1838 = vmatprep.subr.bf16.mxu0 0
        %1839 = vmatpush1.bf16.msra.mxu0 0
        %1840 = vmatprep.subr.bf16.mxu0 0
        %1841 = vmatpush1.bf16.msra.mxu0 0
        %1842 = vmatprep.subr.bf16.mxu0 0
        %1843 = vmatpush1.bf16.msra.mxu0 0
        %1844 = vmatprep.subr.bf16.mxu0 0
        %1845 = vmatpush1.bf16.msra.mxu0 0
        %1846 = vmatprep.subr.bf16.mxu0 0
        %1847 = vmatpush1.bf16.msra.mxu0 0
        %1848 = vmatprep.subr.bf16.mxu0 0
        %1849 = vmatpush1.bf16.msra.mxu0 0
        %1850 = vmatprep.subr.bf16.mxu0 0
        %1851 = vmatpush1.bf16.msra.mxu0 0
        %1852 = vmatprep.subr.bf16.mxu0 0
        %1853 = vmatpush1.bf16.msra.mxu0 0
        %1854 = vmatprep.subr.bf16.mxu0 0
        %1855 = vmatpush1.bf16.msra.mxu0 0
        %1856 = vmatprep.subr.bf16.mxu0 0
        %1857 = vmatpush1.bf16.msra.mxu0 0
        %1858 = vmatprep.subr.bf16.mxu0 0
        %1859 = vmatpush1.bf16.msra.mxu0 0
        %1860 = vmatprep.subr.bf16.mxu0 0
        %1861 = vmatpush1.bf16.msra.mxu0 0
        %1862 = vmatprep.subr.bf16.mxu0 0
        %1863 = vmatpush1.bf16.msra.mxu0 0
        %1864 = vmatprep.subr.bf16.mxu0 0
        %1865 = vmatpush1.bf16.msra.mxu0 0
        %1866 = vmatprep.mubr.bf16.mxu0 0
        %1867 = vmatmul.mubr.bf16.gmra.mrb[0].mxu0 %v1781
        %v1868 = vpop.f32.mrb[0].mxu0
        %v1869 = vadd.f32 0.0, %v1868
        %v1870 = vpop.f32.mrb[0].mxu0
        %v1871 = vadd.f32 0.0, %v1870
        %v1872 = vpop.f32.mrb[0].mxu0
        %v1873 = vadd.f32 0.0, %v1872
        %v1874 = vpop.f32.mrb[0].mxu0
        %v1875 = vadd.f32 0.0, %v1874
        %1876 = vmatprep.mubr.bf16.mxu0 0
        %1877 = vmatmul.mubr.bf16.gmra.mrb[0].mxu0 %v1784
        %v1878 = vpop.f32.mrb[0].mxu0
        %v1879 = vadd.f32 0.0, %v1878
        %v1880 = vpop.f32.mrb[0].mxu0
        %v1881 = vadd.f32 0.0, %v1880
        %v1882 = vpop.f32.mrb[0].mxu0
        %v1883 = vadd.f32 0.0, %v1882
        %v1884 = vpop.f32.mrb[0].mxu0
        %v1885 = vadd.f32 0.0, %v1884
        %1886 = vmatprep.mubr.bf16.mxu0 0
        %1887 = vmatmul.mubr.bf16.gmra.mrb[0].mxu0 %v1787
        %v1888 = vpop.f32.mrb[0].mxu0
        %v1889 = vadd.f32 0.0, %v1888
        %v1890 = vpop.f32.mrb[0].mxu0
        %v1891 = vadd.f32 0.0, %v1890
        %v1892 = vpop.f32.mrb[0].mxu0
        %v1893 = vadd.f32 0.0, %v1892
        %v1894 = vpop.f32.mrb[0].mxu0
        %v1895 = vadd.f32 0.0, %v1894
        %1896 = vmatprep.mubr.bf16.mxu0 0
        %1897 = vmatmul.mubr.bf16.gmra.mrb[0].mxu0 %v1790
        %v1898 = vpop.f32.mrb[0].mxu0
        %v1899 = vadd.f32 0.0, %v1898
        %v1900 = vpop.f32.mrb[0].mxu0
        %v1901 = vadd.f32 0.0, %v1900
        %v1902 = vpop.f32.mrb[0].mxu0
        %v1903 = vadd.f32 0.0, %v1902
        %v1904 = vpop.f32.mrb[0].mxu0
        %v1905 = vadd.f32 0.0, %v1904
        %1906 = vmatprep.mubr.bf16.mxu0 0
        %1907 = vmatmul.mubr.bf16.gmra.mrb[0].mxu0 %v1793
        %v1908 = vpop.f32.mrb[0].mxu0
        %v1909 = vadd.f32 0.0, %v1908
        %v1910 = vpop.f32.mrb[0].mxu0
        %v1911 = vadd.f32 0.0, %v1910
        %v1912 = vpop.f32.mrb[0].mxu0
        %v1913 = vadd.f32 0.0, %v1912
        %v1914 = vpop.f32.mrb[0].mxu0
        %v1915 = vadd.f32 0.0, %v1914
        %1916 = vmatprep.mubr.bf16.mxu0 0
        %1917 = vmatmul.mubr.bf16.gmra.mrb[0].mxu0 %v1796
        %v1918 = vpop.f32.mrb[0].mxu0
        %v1919 = vadd.f32 0.0, %v1918
        %v1920 = vpop.f32.mrb[0].mxu0
        %v1921 = vadd.f32 0.0, %v1920
        %v1922 = vpop.f32.mrb[0].mxu0
        %v1923 = vadd.f32 0.0, %v1922
        %v1924 = vpop.f32.mrb[0].mxu0
        %v1925 = vadd.f32 0.0, %v1924
        %1926 = vmatprep.mubr.bf16.mxu0 0
        %1927 = vmatmul.mubr.bf16.gmra.mrb[0].mxu0 %v1799
        %v1928 = vpop.f32.mrb[0].mxu0
        %v1929 = vadd.f32 0.0, %v1928
        %v1930 = vpop.f32.mrb[0].mxu0
        %v1931 = vadd.f32 0.0, %v1930
        %v1932 = vpop.f32.mrb[0].mxu0
        %v1933 = vadd.f32 0.0, %v1932
        %v1934 = vpop.f32.mrb[0].mxu0
        %v1935 = vadd.f32 0.0, %v1934
        %1936 = vmatprep.mubr.bf16.mxu0 0
        %1937 = vmatmul.mubr.bf16.gmra.mrb[0].mxu0 %v1802
        %v1938 = vpop.f32.mrb[0].mxu0
        %v1939 = vadd.f32 0.0, %v1938
        %v1940 = vpop.f32.mrb[0].mxu0
        %v1941 = vadd.f32 0.0, %v1940
        %v1942 = vpop.f32.mrb[0].mxu0
        %v1943 = vadd.f32 0.0, %v1942
        %v1944 = vpop.f32.mrb[0].mxu0
        %v1945 = vadd.f32 0.0, %v1944
        %1946 = vmatprep.mubr.bf16.mxu0 0
        %1947 = vmatmul.mubr.bf16.gmra.mrb[0].mxu0 %v1805
        %v1948 = vpop.f32.mrb[0].mxu0
        %v1949 = vadd.f32 0.0, %v1948
        %v1950 = vpop.f32.mrb[0].mxu0
        %v1951 = vadd.f32 0.0, %v1950
        %v1952 = vpop.f32.mrb[0].mxu0
        %v1953 = vadd.f32 0.0, %v1952
        %v1954 = vpop.f32.mrb[0].mxu0
        %v1955 = vadd.f32 0.0, %v1954
        %1956 = vmatprep.mubr.bf16.mxu0 0
        %1957 = vmatmul.mubr.bf16.gmra.mrb[0].mxu0 %v1808
        %v1958 = vpop.f32.mrb[0].mxu0
        %v1959 = vadd.f32 0.0, %v1958
        %v1960 = vpop.f32.mrb[0].mxu0
        %v1961 = vadd.f32 0.0, %v1960
        %v1962 = vpop.f32.mrb[0].mxu0
        %v1963 = vadd.f32 0.0, %v1962
        %v1964 = vpop.f32.mrb[0].mxu0
        %v1965 = vadd.f32 0.0, %v1964
        %1966 = vmatprep.mubr.bf16.mxu0 0
        %1967 = vmatmul.mubr.bf16.gmra.mrb[0].mxu0 %v1811
        %v1968 = vpop.f32.mrb[0].mxu0
        %v1969 = vadd.f32 0.0, %v1968
        %v1970 = vpop.f32.mrb[0].mxu0
        %v1971 = vadd.f32 0.0, %v1970
        %v1972 = vpop.f32.mrb[0].mxu0
        %v1973 = vadd.f32 0.0, %v1972
        %v1974 = vpop.f32.mrb[0].mxu0
        %v1975 = vadd.f32 0.0, %v1974
        %1976 = vmatprep.mubr.bf16.mxu0 0
        %1977 = vmatmul.mubr.bf16.gmra.mrb[0].mxu0 %v1814
        %v1978 = vpop.f32.mrb[0].mxu0
        %v1979 = vadd.f32 0.0, %v1978
        %v1980 = vpop.f32.mrb[0].mxu0
        %v1981 = vadd.f32 0.0, %v1980
        %v1982 = vpop.f32.mrb[0].mxu0
        %v1983 = vadd.f32 0.0, %v1982
        %v1984 = vpop.f32.mrb[0].mxu0
        %v1985 = vadd.f32 0.0, %v1984
        %1986 = vmatprep.mubr.bf16.mxu0 0
        %1987 = vmatmul.mubr.bf16.gmra.mrb[0].mxu0 %v1817
        %v1988 = vpop.f32.mrb[0].mxu0
        %v1989 = vadd.f32 0.0, %v1988
        %v1990 = vpop.f32.mrb[0].mxu0
        %v1991 = vadd.f32 0.0, %v1990
        %v1992 = vpop.f32.mrb[0].mxu0
        %v1993 = vadd.f32 0.0, %v1992
        %v1994 = vpop.f32.mrb[0].mxu0
        %v1995 = vadd.f32 0.0, %v1994
        %1996 = vmatprep.mubr.bf16.mxu0 0
        %1997 = vmatmul.mubr.bf16.gmra.mrb[0].mxu0 %v1820
        %v1998 = vpop.f32.mrb[0].mxu0
        %v1999 = vadd.f32 0.0, %v1998
        %v2000 = vpop.f32.mrb[0].mxu0
        %v2001 = vadd.f32 0.0, %v2000
        %v2002 = vpop.f32.mrb[0].mxu0
        %v2003 = vadd.f32 0.0, %v2002
        %v2004 = vpop.f32.mrb[0].mxu0
        %v2005 = vadd.f32 0.0, %v2004
        %2006 = vmatprep.mubr.bf16.mxu0 0
        %2007 = vmatmul.mubr.bf16.gmra.mrb[0].mxu0 %v1823
        %v2008 = vpop.f32.mrb[0].mxu0
        %v2009 = vadd.f32 0.0, %v2008
        %v2010 = vpop.f32.mrb[0].mxu0
        %v2011 = vadd.f32 0.0, %v2010
        %v2012 = vpop.f32.mrb[0].mxu0
        %v2013 = vadd.f32 0.0, %v2012
        %v2014 = vpop.f32.mrb[0].mxu0
        %v2015 = vadd.f32 0.0, %v2014
        %2016 = vmatprep.mubr.bf16.mxu0 0
        %2017 = vmatmul.mubr.bf16.gmra.mrb[0].mxu0 %v1826
        %v2018 = vpop.f32.mrb[0].mxu0
        %v2019 = vadd.f32 0.0, %v2018
        %v2020 = vpop.f32.mrb[0].mxu0
        %v2021 = vadd.f32 0.0, %v2020
        %v2022 = vpop.f32.mrb[0].mxu0
        %v2023 = vadd.f32 0.0, %v2022
        %v2024 = vpop.f32.mrb[0].mxu0
        %v2025 = vadd.f32 0.0, %v2024
        %2026 = vdwg.mxu0
        %v2027 = vmax.f32 %v1128, %v1130
        %2028 = vmax.xlane.f32.xlu0 %v2027
        %v2029 = vpop.xlane.xlu0 %2028
        %v2030 = vmax.f32 %v1132, %v1134
        %2031 = vmax.xlane.f32.xlu0 %v2030
        %v2032 = vpop.xlane.xlu0 %2031
        %v2033 = vmax.f32 %v1138, %v1140
        %2034 = vmax.xlane.f32.xlu0 %v2033
        %v2035 = vpop.xlane.xlu0 %2034
        %v2036 = vmax.f32 %v1142, %v1144
        %2037 = vmax.xlane.f32.xlu0 %v2036
        %v2038 = vpop.xlane.xlu0 %2037
        %v2039 = vmax.f32 %v1148, %v1150
        %2040 = vmax.xlane.f32.xlu0 %v2039
        %v2041 = vpop.xlane.xlu0 %2040
        %v2042 = vmax.f32 %v1152, %v1154
        %2043 = vmax.xlane.f32.xlu0 %v2042
        %v2044 = vpop.xlane.xlu0 %2043
        %v2045 = vmax.f32 %v1158, %v1160
        %2046 = vmax.xlane.f32.xlu0 %v2045
        %v2047 = vpop.xlane.xlu0 %2046
        %v2048 = vmax.f32 %v1162, %v1164
        %2049 = vmax.xlane.f32.xlu0 %v2048
        %v2050 = vpop.xlane.xlu0 %2049
        %v2051 = vmax.f32 %v1168, %v1170
        %2052 = vmax.xlane.f32.xlu0 %v2051
        %v2053 = vpop.xlane.xlu0 %2052
        %v2054 = vmax.f32 %v1172, %v1174
        %2055 = vmax.xlane.f32.xlu0 %v2054
        %v2056 = vpop.xlane.xlu0 %2055
        %v2057 = vmax.f32 %v1178, %v1180
        %2058 = vmax.xlane.f32.xlu0 %v2057
        %v2059 = vpop.xlane.xlu0 %2058
        %v2060 = vmax.f32 %v1182, %v1184
        %2061 = vmax.xlane.f32.xlu0 %v2060
        %v2062 = vpop.xlane.xlu0 %2061
        %v2063 = vmax.f32 %v1188, %v1190
        %2064 = vmax.xlane.f32.xlu0 %v2063
        %v2065 = vpop.xlane.xlu0 %2064
        %v2066 = vmax.f32 %v1192, %v1194
        %2067 = vmax.xlane.f32.xlu0 %v2066
        %v2068 = vpop.xlane.xlu0 %2067
        %v2069 = vmax.f32 %v1198, %v1200
        %2070 = vmax.xlane.f32.xlu0 %v2069
        %v2071 = vpop.xlane.xlu0 %2070
        %v2072 = vmax.f32 %v1202, %v1204
        %2073 = vmax.xlane.f32.xlu0 %v2072
        %v2074 = vpop.xlane.xlu0 %2073
        %v2075 = vmax.f32 %v1208, %v1210
        %2076 = vmax.xlane.f32.xlu0 %v2075
        %v2077 = vpop.xlane.xlu0 %2076
        %v2078 = vmax.f32 %v1212, %v1214
        %2079 = vmax.xlane.f32.xlu0 %v2078
        %v2080 = vpop.xlane.xlu0 %2079
        %v2081 = vmax.f32 %v1218, %v1220
        %2082 = vmax.xlane.f32.xlu0 %v2081
        %v2083 = vpop.xlane.xlu0 %2082
        %v2084 = vmax.f32 %v1222, %v1224
        %2085 = vmax.xlane.f32.xlu0 %v2084
        %v2086 = vpop.xlane.xlu0 %2085
        %v2087 = vmax.f32 %v1228, %v1230
        %2088 = vmax.xlane.f32.xlu0 %v2087
        %v2089 = vpop.xlane.xlu0 %2088
        %v2090 = vmax.f32 %v1232, %v1234
        %2091 = vmax.xlane.f32.xlu0 %v2090
        %v2092 = vpop.xlane.xlu0 %2091
        %v2093 = vmax.f32 %v1238, %v1240
        %2094 = vmax.xlane.f32.xlu0 %v2093
        %v2095 = vpop.xlane.xlu0 %2094
        %v2096 = vmax.f32 %v1242, %v1244
        %2097 = vmax.xlane.f32.xlu0 %v2096
        %v2098 = vpop.xlane.xlu0 %2097
        %v2099 = vmax.f32 %v1248, %v1250
        %2100 = vmax.xlane.f32.xlu0 %v2099
        %v2101 = vpop.xlane.xlu0 %2100
        %v2102 = vmax.f32 %v1252, %v1254
        %2103 = vmax.xlane.f32.xlu0 %v2102
        %v2104 = vpop.xlane.xlu0 %2103
        %v2105 = vmax.f32 %v1258, %v1260
        %2106 = vmax.xlane.f32.xlu0 %v2105
        %v2107 = vpop.xlane.xlu0 %2106
        %v2108 = vmax.f32 %v1262, %v1264
        %2109 = vmax.xlane.f32.xlu0 %v2108
        %v2110 = vpop.xlane.xlu0 %2109
        %v2111 = vmax.f32 %v1268, %v1270
        %2112 = vmax.xlane.f32.xlu0 %v2111
        %v2113 = vpop.xlane.xlu0 %2112
        %v2114 = vmax.f32 %v1272, %v1274
        %2115 = vmax.xlane.f32.xlu0 %v2114
        %v2116 = vpop.xlane.xlu0 %2115
        %v2117 = vmax.f32 %v1278, %v1280
        %2118 = vmax.xlane.f32.xlu0 %v2117
        %v2119 = vpop.xlane.xlu0 %2118
        %v2120 = vmax.f32 %v1282, %v1284
        %2121 = vmax.xlane.f32.xlu0 %v2120
        %v2122 = vpop.xlane.xlu0 %2121
        %v2123 = vmax.f32 %v1375, %v1377
        %2124 = vmax.xlane.f32.xlu0 %v2123
        %v2125 = vpop.xlane.xlu0 %2124
        %v2126 = vmax.f32 %v1379, %v1381
        %2127 = vmax.xlane.f32.xlu0 %v2126
        %v2128 = vpop.xlane.xlu0 %2127
        %v2129 = vmax.f32 %v1385, %v1387
        %2130 = vmax.xlane.f32.xlu0 %v2129
        %v2131 = vpop.xlane.xlu0 %2130
        %v2132 = vmax.f32 %v1389, %v1391
        %2133 = vmax.xlane.f32.xlu0 %v2132
        %v2134 = vpop.xlane.xlu0 %2133
        %v2135 = vmax.f32 %v1395, %v1397
        %2136 = vmax.xlane.f32.xlu0 %v2135
        %v2137 = vpop.xlane.xlu0 %2136
        %v2138 = vmax.f32 %v1399, %v1401
        %2139 = vmax.xlane.f32.xlu0 %v2138
        %v2140 = vpop.xlane.xlu0 %2139
        %v2141 = vmax.f32 %v1405, %v1407
        %2142 = vmax.xlane.f32.xlu0 %v2141
        %v2143 = vpop.xlane.xlu0 %2142
        %v2144 = vmax.f32 %v1409, %v1411
        %2145 = vmax.xlane.f32.xlu0 %v2144
        %v2146 = vpop.xlane.xlu0 %2145
        %v2147 = vmax.f32 %v1415, %v1417
        %2148 = vmax.xlane.f32.xlu0 %v2147
        %v2149 = vpop.xlane.xlu0 %2148
        %v2150 = vmax.f32 %v1419, %v1421
        %2151 = vmax.xlane.f32.xlu0 %v2150
        %v2152 = vpop.xlane.xlu0 %2151
        %v2153 = vmax.f32 %v1425, %v1427
        %2154 = vmax.xlane.f32.xlu0 %v2153
        %v2155 = vpop.xlane.xlu0 %2154
        %v2156 = vmax.f32 %v1429, %v1431
        %2157 = vmax.xlane.f32.xlu0 %v2156
        %v2158 = vpop.xlane.xlu0 %2157
        %v2159 = vmax.f32 %v1435, %v1437
        %2160 = vmax.xlane.f32.xlu0 %v2159
        %v2161 = vpop.xlane.xlu0 %2160
        %v2162 = vmax.f32 %v1439, %v1441
        %2163 = vmax.xlane.f32.xlu0 %v2162
        %v2164 = vpop.xlane.xlu0 %2163
        %v2165 = vmax.f32 %v1445, %v1447
        %2166 = vmax.xlane.f32.xlu0 %v2165
        %v2167 = vpop.xlane.xlu0 %2166
        %v2168 = vmax.f32 %v1449, %v1451
        %2169 = vmax.xlane.f32.xlu0 %v2168
        %v2170 = vpop.xlane.xlu0 %2169
        %v2171 = vmax.f32 %v1455, %v1457
        %2172 = vmax.xlane.f32.xlu0 %v2171
        %v2173 = vpop.xlane.xlu0 %2172
        %v2174 = vmax.f32 %v1459, %v1461
        %2175 = vmax.xlane.f32.xlu0 %v2174
        %v2176 = vpop.xlane.xlu0 %2175
        %v2177 = vmax.f32 %v1465, %v1467
        %2178 = vmax.xlane.f32.xlu0 %v2177
        %v2179 = vpop.xlane.xlu0 %2178
        %v2180 = vmax.f32 %v1469, %v1471
        %2181 = vmax.xlane.f32.xlu0 %v2180
        %v2182 = vpop.xlane.xlu0 %2181
        %v2183 = vmax.f32 %v1475, %v1477
        %2184 = vmax.xlane.f32.xlu0 %v2183
        %v2185 = vpop.xlane.xlu0 %2184
        %v2186 = vmax.f32 %v1479, %v1481
        %2187 = vmax.xlane.f32.xlu0 %v2186
        %v2188 = vpop.xlane.xlu0 %2187
        %v2189 = vmax.f32 %v1485, %v1487
        %2190 = vmax.xlane.f32.xlu0 %v2189
        %v2191 = vpop.xlane.xlu0 %2190
        %v2192 = vmax.f32 %v1489, %v1491
        %2193 = vmax.xlane.f32.xlu0 %v2192
        %v2194 = vpop.xlane.xlu0 %2193
        %v2195 = vmax.f32 %v1495, %v1497
        %2196 = vmax.xlane.f32.xlu0 %v2195
        %v2197 = vpop.xlane.xlu0 %2196
        %v2198 = vmax.f32 %v1499, %v1501
        %2199 = vmax.xlane.f32.xlu0 %v2198
        %v2200 = vpop.xlane.xlu0 %2199
        %v2201 = vmax.f32 %v1505, %v1507
        %2202 = vmax.xlane.f32.xlu0 %v2201
        %v2203 = vpop.xlane.xlu0 %2202
        %v2204 = vmax.f32 %v1509, %v1511
        %2205 = vmax.xlane.f32.xlu0 %v2204
        %v2206 = vpop.xlane.xlu0 %2205
        %v2207 = vmax.f32 %v1515, %v1517
        %2208 = vmax.xlane.f32.xlu0 %v2207
        %v2209 = vpop.xlane.xlu0 %2208
        %v2210 = vmax.f32 %v1519, %v1521
        %2211 = vmax.xlane.f32.xlu0 %v2210
        %v2212 = vpop.xlane.xlu0 %2211
        %v2213 = vmax.f32 %v1525, %v1527
        %2214 = vmax.xlane.f32.xlu0 %v2213
        %v2215 = vpop.xlane.xlu0 %2214
        %v2216 = vmax.f32 %v1529, %v1531
        %2217 = vmax.xlane.f32.xlu0 %v2216
        %v2218 = vpop.xlane.xlu0 %2217
        %v2219 = vmax.f32 %v1622, %v1624
        %2220 = vmax.xlane.f32.xlu0 %v2219
        %v2221 = vpop.xlane.xlu0 %2220
        %v2222 = vmax.f32 %v1626, %v1628
        %2223 = vmax.xlane.f32.xlu0 %v2222
        %v2224 = vpop.xlane.xlu0 %2223
        %v2225 = vmax.f32 %v1632, %v1634
        %2226 = vmax.xlane.f32.xlu0 %v2225
        %v2227 = vpop.xlane.xlu0 %2226
        %v2228 = vmax.f32 %v1636, %v1638
        %2229 = vmax.xlane.f32.xlu0 %v2228
        %v2230 = vpop.xlane.xlu0 %2229
        %v2231 = vmax.f32 %v1642, %v1644
        %2232 = vmax.xlane.f32.xlu0 %v2231
        %v2233 = vpop.xlane.xlu0 %2232
        %v2234 = vmax.f32 %v1646, %v1648
        %2235 = vmax.xlane.f32.xlu0 %v2234
        %v2236 = vpop.xlane.xlu0 %2235
        %v2237 = vmax.f32 %v1652, %v1654
        %2238 = vmax.xlane.f32.xlu0 %v2237
        %v2239 = vpop.xlane.xlu0 %2238
        %v2240 = vmax.f32 %v1656, %v1658
        %2241 = vmax.xlane.f32.xlu0 %v2240
        %v2242 = vpop.xlane.xlu0 %2241
        %v2243 = vmax.f32 %v1662, %v1664
        %2244 = vmax.xlane.f32.xlu0 %v2243
        %v2245 = vpop.xlane.xlu0 %2244
        %v2246 = vmax.f32 %v1666, %v1668
        %2247 = vmax.xlane.f32.xlu0 %v2246
        %v2248 = vpop.xlane.xlu0 %2247
        %v2249 = vmax.f32 %v1672, %v1674
        %2250 = vmax.xlane.f32.xlu0 %v2249
        %v2251 = vpop.xlane.xlu0 %2250
        %v2252 = vmax.f32 %v1676, %v1678
        %2253 = vmax.xlane.f32.xlu0 %v2252
        %v2254 = vpop.xlane.xlu0 %2253
        %v2255 = vmax.f32 %v1682, %v1684
        %2256 = vmax.xlane.f32.xlu0 %v2255
        %v2257 = vpop.xlane.xlu0 %2256
        %v2258 = vmax.f32 %v1686, %v1688
        %2259 = vmax.xlane.f32.xlu0 %v2258
        %v2260 = vpop.xlane.xlu0 %2259
        %v2261 = vmax.f32 %v1692, %v1694
        %2262 = vmax.xlane.f32.xlu0 %v2261
        %v2263 = vpop.xlane.xlu0 %2262
        %v2264 = vmax.f32 %v1696, %v1698
        %2265 = vmax.xlane.f32.xlu0 %v2264
        %v2266 = vpop.xlane.xlu0 %2265
        %v2267 = vmax.f32 %v1702, %v1704
        %2268 = vmax.xlane.f32.xlu0 %v2267
        %v2269 = vpop.xlane.xlu0 %2268
        %v2270 = vmax.f32 %v1706, %v1708
        %2271 = vmax.xlane.f32.xlu0 %v2270
        %v2272 = vpop.xlane.xlu0 %2271
        %v2273 = vmax.f32 %v1712, %v1714
        %2274 = vmax.xlane.f32.xlu0 %v2273
        %v2275 = vpop.xlane.xlu0 %2274
        %v2276 = vmax.f32 %v1716, %v1718
        %2277 = vmax.xlane.f32.xlu0 %v2276
        %v2278 = vpop.xlane.xlu0 %2277
        %v2279 = vmax.f32 %v1722, %v1724
        %2280 = vmax.xlane.f32.xlu0 %v2279
        %v2281 = vpop.xlane.xlu0 %2280
        %v2282 = vmax.f32 %v1726, %v1728
        %2283 = vmax.xlane.f32.xlu0 %v2282
        %v2284 = vpop.xlane.xlu0 %2283
        %v2285 = vmax.f32 %v1732, %v1734
        %2286 = vmax.xlane.f32.xlu0 %v2285
        %v2287 = vpop.xlane.xlu0 %2286
        %v2288 = vmax.f32 %v1736, %v1738
        %2289 = vmax.xlane.f32.xlu0 %v2288
        %v2290 = vpop.xlane.xlu0 %2289
        %v2291 = vmax.f32 %v1742, %v1744
        %2292 = vmax.xlane.f32.xlu0 %v2291
        %v2293 = vpop.xlane.xlu0 %2292
        %v2294 = vmax.f32 %v1746, %v1748
        %2295 = vmax.xlane.f32.xlu0 %v2294
        %v2296 = vpop.xlane.xlu0 %2295
        %v2297 = vmax.f32 %v1752, %v1754
        %2298 = vmax.xlane.f32.xlu0 %v2297
        %v2299 = vpop.xlane.xlu0 %2298
        %v2300 = vmax.f32 %v1756, %v1758
        %2301 = vmax.xlane.f32.xlu0 %v2300
        %v2302 = vpop.xlane.xlu0 %2301
        %v2303 = vmax.f32 %v1762, %v1764
        %2304 = vmax.xlane.f32.xlu0 %v2303
        %v2305 = vpop.xlane.xlu0 %2304
        %v2306 = vmax.f32 %v1766, %v1768
        %2307 = vmax.xlane.f32.xlu0 %v2306
        %v2308 = vpop.xlane.xlu0 %2307
        %v2309 = vmax.f32 %v1772, %v1774
        %2310 = vmax.xlane.f32.xlu0 %v2309
        %v2311 = vpop.xlane.xlu0 %2310
        %v2312 = vmax.f32 %v1776, %v1778
        %2313 = vmax.xlane.f32.xlu0 %v2312
        %v2314 = vpop.xlane.xlu0 %2313
        %v2315 = vmax.f32 %v1869, %v1871
        %2316 = vmax.xlane.f32.xlu0 %v2315
        %v2317 = vpop.xlane.xlu0 %2316
        %v2318 = vmax.f32 %v1873, %v1875
        %2319 = vmax.xlane.f32.xlu0 %v2318
        %v2320 = vpop.xlane.xlu0 %2319
        %v2321 = vmax.f32 %v1879, %v1881
        %2322 = vmax.xlane.f32.xlu0 %v2321
        %v2323 = vpop.xlane.xlu0 %2322
        %v2324 = vmax.f32 %v1883, %v1885
        %2325 = vmax.xlane.f32.xlu0 %v2324
        %v2326 = vpop.xlane.xlu0 %2325
        %v2327 = vmax.f32 %v1889, %v1891
        %2328 = vmax.xlane.f32.xlu0 %v2327
        %v2329 = vpop.xlane.xlu0 %2328
        %v2330 = vmax.f32 %v1893, %v1895
        %2331 = vmax.xlane.f32.xlu0 %v2330
        %v2332 = vpop.xlane.xlu0 %2331
        %v2333 = vmax.f32 %v1899, %v1901
        %2334 = vmax.xlane.f32.xlu0 %v2333
        %v2335 = vpop.xlane.xlu0 %2334
        %v2336 = vmax.f32 %v1903, %v1905
        %2337 = vmax.xlane.f32.xlu0 %v2336
        %v2338 = vpop.xlane.xlu0 %2337
        %v2339 = vmax.f32 %v1909, %v1911
        %2340 = vmax.xlane.f32.xlu0 %v2339
        %v2341 = vpop.xlane.xlu0 %2340
        %v2342 = vmax.f32 %v1913, %v1915
        %2343 = vmax.xlane.f32.xlu0 %v2342
        %v2344 = vpop.xlane.xlu0 %2343
        %v2345 = vmax.f32 %v1919, %v1921
        %2346 = vmax.xlane.f32.xlu0 %v2345
        %v2347 = vpop.xlane.xlu0 %2346
        %v2348 = vmax.f32 %v1923, %v1925
        %2349 = vmax.xlane.f32.xlu0 %v2348
        %v2350 = vpop.xlane.xlu0 %2349
        %v2351 = vmax.f32 %v1929, %v1931
        %2352 = vmax.xlane.f32.xlu0 %v2351
        %v2353 = vpop.xlane.xlu0 %2352
        %v2354 = vmax.f32 %v1933, %v1935
        %2355 = vmax.xlane.f32.xlu0 %v2354
        %v2356 = vpop.xlane.xlu0 %2355
        %v2357 = vmax.f32 %v1939, %v1941
        %2358 = vmax.xlane.f32.xlu0 %v2357
        %v2359 = vpop.xlane.xlu0 %2358
        %v2360 = vmax.f32 %v1943, %v1945
        %2361 = vmax.xlane.f32.xlu0 %v2360
        %v2362 = vpop.xlane.xlu0 %2361
        %v2363 = vmax.f32 %v1949, %v1951
        %2364 = vmax.xlane.f32.xlu0 %v2363
        %v2365 = vpop.xlane.xlu0 %2364
        %v2366 = vmax.f32 %v1953, %v1955
        %2367 = vmax.xlane.f32.xlu0 %v2366
        %v2368 = vpop.xlane.xlu0 %2367
        %v2369 = vmax.f32 %v1959, %v1961
        %2370 = vmax.xlane.f32.xlu0 %v2369
        %v2371 = vpop.xlane.xlu0 %2370
        %v2372 = vmax.f32 %v1963, %v1965
        %2373 = vmax.xlane.f32.xlu0 %v2372
        %v2374 = vpop.xlane.xlu0 %2373
        %v2375 = vmax.f32 %v1969, %v1971
        %2376 = vmax.xlane.f32.xlu0 %v2375
        %v2377 = vpop.xlane.xlu0 %2376
        %v2378 = vmax.f32 %v1973, %v1975
        %2379 = vmax.xlane.f32.xlu0 %v2378
        %v2380 = vpop.xlane.xlu0 %2379
        %v2381 = vmax.f32 %v1979, %v1981
        %2382 = vmax.xlane.f32.xlu0 %v2381
        %v2383 = vpop.xlane.xlu0 %2382
        %v2384 = vmax.f32 %v1983, %v1985
        %2385 = vmax.xlane.f32.xlu0 %v2384
        %v2386 = vpop.xlane.xlu0 %2385
        %v2387 = vmax.f32 %v1989, %v1991
        %2388 = vmax.xlane.f32.xlu0 %v2387
        %v2389 = vpop.xlane.xlu0 %2388
        %v2390 = vmax.f32 %v1993, %v1995
        %2391 = vmax.xlane.f32.xlu0 %v2390
        %v2392 = vpop.xlane.xlu0 %2391
        %v2393 = vmax.f32 %v1999, %v2001
        %2394 = vmax.xlane.f32.xlu0 %v2393
        %v2395 = vpop.xlane.xlu0 %2394
        %v2396 = vmax.f32 %v2003, %v2005
        %2397 = vmax.xlane.f32.xlu0 %v2396
        %v2398 = vpop.xlane.xlu0 %2397
        %v2399 = vmax.f32 %v2009, %v2011
        %2400 = vmax.xlane.f32.xlu0 %v2399
        %v2401 = vpop.xlane.xlu0 %2400
        %v2402 = vmax.f32 %v2013, %v2015
        %2403 = vmax.xlane.f32.xlu0 %v2402
        %v2404 = vpop.xlane.xlu0 %2403
        %v2405 = vmax.f32 %v2019, %v2021
        %2406 = vmax.xlane.f32.xlu0 %v2405
        %v2407 = vpop.xlane.xlu0 %2406
        %v2408 = vmax.f32 %v2023, %v2025
        %2409 = vmax.xlane.f32.xlu0 %v2408
        %v2410 = vpop.xlane.xlu0 %2409
        %v2411 = vsub.f32 %v1128, %v2029
        %v2412 = vsub.f32 %v1130, %v2029
        %v2413 = vsub.f32 %v1132, %v2032
        %v2414 = vsub.f32 %v1134, %v2032
        %v2415 = vsub.f32 %v1138, %v2035
        %v2416 = vsub.f32 %v1140, %v2035
        %v2417 = vsub.f32 %v1142, %v2038
        %v2418 = vsub.f32 %v1144, %v2038
        %v2419 = vsub.f32 %v1148, %v2041
        %v2420 = vsub.f32 %v1150, %v2041
        %v2421 = vsub.f32 %v1152, %v2044
        %v2422 = vsub.f32 %v1154, %v2044
        %v2423 = vsub.f32 %v1158, %v2047
        %v2424 = vsub.f32 %v1160, %v2047
        %v2425 = vsub.f32 %v1162, %v2050
        %v2426 = vsub.f32 %v1164, %v2050
        %v2427 = vsub.f32 %v1168, %v2053
        %v2428 = vsub.f32 %v1170, %v2053
        %v2429 = vsub.f32 %v1172, %v2056
        %v2430 = vsub.f32 %v1174, %v2056
        %v2431 = vsub.f32 %v1178, %v2059
        %v2432 = vsub.f32 %v1180, %v2059
        %v2433 = vsub.f32 %v1182, %v2062
        %v2434 = vsub.f32 %v1184, %v2062
        %v2435 = vsub.f32 %v1188, %v2065
        %v2436 = vsub.f32 %v1190, %v2065
        %v2437 = vsub.f32 %v1192, %v2068
        %v2438 = vsub.f32 %v1194, %v2068
        %v2439 = vsub.f32 %v1198, %v2071
        %v2440 = vsub.f32 %v1200, %v2071
        %v2441 = vsub.f32 %v1202, %v2074
        %v2442 = vsub.f32 %v1204, %v2074
        %v2443 = vsub.f32 %v1208, %v2077
        %v2444 = vsub.f32 %v1210, %v2077
        %v2445 = vsub.f32 %v1212, %v2080
        %v2446 = vsub.f32 %v1214, %v2080
        %v2447 = vsub.f32 %v1218, %v2083
        %v2448 = vsub.f32 %v1220, %v2083
        %v2449 = vsub.f32 %v1222, %v2086
        %v2450 = vsub.f32 %v1224, %v2086
        %v2451 = vsub.f32 %v1228, %v2089
        %v2452 = vsub.f32 %v1230, %v2089
        %v2453 = vsub.f32 %v1232, %v2092
        %v2454 = vsub.f32 %v1234, %v2092
        %v2455 = vsub.f32 %v1238, %v2095
        %v2456 = vsub.f32 %v1240, %v2095
        %v2457 = vsub.f32 %v1242, %v2098
        %v2458 = vsub.f32 %v1244, %v2098
        %v2459 = vsub.f32 %v1248, %v2101
        %v2460 = vsub.f32 %v1250, %v2101
        %v2461 = vsub.f32 %v1252, %v2104
        %v2462 = vsub.f32 %v1254, %v2104
        %v2463 = vsub.f32 %v1258, %v2107
        %v2464 = vsub.f32 %v1260, %v2107
        %v2465 = vsub.f32 %v1262, %v2110
        %v2466 = vsub.f32 %v1264, %v2110
        %v2467 = vsub.f32 %v1268, %v2113
        %v2468 = vsub.f32 %v1270, %v2113
        %v2469 = vsub.f32 %v1272, %v2116
        %v2470 = vsub.f32 %v1274, %v2116
        %v2471 = vsub.f32 %v1278, %v2119
        %v2472 = vsub.f32 %v1280, %v2119
        %v2473 = vsub.f32 %v1282, %v2122
        %v2474 = vsub.f32 %v1284, %v2122
        %v2475 = vsub.f32 %v1375, %v2125
        %v2476 = vsub.f32 %v1377, %v2125
        %v2477 = vsub.f32 %v1379, %v2128
        %v2478 = vsub.f32 %v1381, %v2128
        %v2479 = vsub.f32 %v1385, %v2131
        %v2480 = vsub.f32 %v1387, %v2131
        %v2481 = vsub.f32 %v1389, %v2134
        %v2482 = vsub.f32 %v1391, %v2134
        %v2483 = vsub.f32 %v1395, %v2137
        %v2484 = vsub.f32 %v1397, %v2137
        %v2485 = vsub.f32 %v1399, %v2140
        %v2486 = vsub.f32 %v1401, %v2140
        %v2487 = vsub.f32 %v1405, %v2143
        %v2488 = vsub.f32 %v1407, %v2143
        %v2489 = vsub.f32 %v1409, %v2146
        %v2490 = vsub.f32 %v1411, %v2146
        %v2491 = vsub.f32 %v1415, %v2149
        %v2492 = vsub.f32 %v1417, %v2149
        %v2493 = vsub.f32 %v1419, %v2152
        %v2494 = vsub.f32 %v1421, %v2152
        %v2495 = vsub.f32 %v1425, %v2155
        %v2496 = vsub.f32 %v1427, %v2155
        %v2497 = vsub.f32 %v1429, %v2158
        %v2498 = vsub.f32 %v1431, %v2158
        %v2499 = vsub.f32 %v1435, %v2161
        %v2500 = vsub.f32 %v1437, %v2161
        %v2501 = vsub.f32 %v1439, %v2164
        %v2502 = vsub.f32 %v1441, %v2164
        %v2503 = vsub.f32 %v1445, %v2167
        %v2504 = vsub.f32 %v1447, %v2167
        %v2505 = vsub.f32 %v1449, %v2170
        %v2506 = vsub.f32 %v1451, %v2170
        %v2507 = vsub.f32 %v1455, %v2173
        %v2508 = vsub.f32 %v1457, %v2173
        %v2509 = vsub.f32 %v1459, %v2176
        %v2510 = vsub.f32 %v1461, %v2176
        %v2511 = vsub.f32 %v1465, %v2179
        %v2512 = vsub.f32 %v1467, %v2179
        %v2513 = vsub.f32 %v1469, %v2182
        %v2514 = vsub.f32 %v1471, %v2182
        %v2515 = vsub.f32 %v1475, %v2185
        %v2516 = vsub.f32 %v1477, %v2185
        %v2517 = vsub.f32 %v1479, %v2188
        %v2518 = vsub.f32 %v1481, %v2188
        %v2519 = vsub.f32 %v1485, %v2191
        %v2520 = vsub.f32 %v1487, %v2191
        %v2521 = vsub.f32 %v1489, %v2194
        %v2522 = vsub.f32 %v1491, %v2194
        %v2523 = vsub.f32 %v1495, %v2197
        %v2524 = vsub.f32 %v1497, %v2197
        %v2525 = vsub.f32 %v1499, %v2200
        %v2526 = vsub.f32 %v1501, %v2200
        %v2527 = vsub.f32 %v1505, %v2203
        %v2528 = vsub.f32 %v1507, %v2203
        %v2529 = vsub.f32 %v1509, %v2206
        %v2530 = vsub.f32 %v1511, %v2206
        %v2531 = vsub.f32 %v1515, %v2209
        %v2532 = vsub.f32 %v1517, %v2209
        %v2533 = vsub.f32 %v1519, %v2212
        %v2534 = vsub.f32 %v1521, %v2212
        %v2535 = vsub.f32 %v1525, %v2215
        %v2536 = vsub.f32 %v1527, %v2215
        %v2537 = vsub.f32 %v1529, %v2218
        %v2538 = vsub.f32 %v1531, %v2218
        %v2539 = vsub.f32 %v1622, %v2221
        %v2540 = vsub.f32 %v1624, %v2221
        %v2541 = vsub.f32 %v1626, %v2224
        %v2542 = vsub.f32 %v1628, %v2224
        %v2543 = vsub.f32 %v1632, %v2227
        %v2544 = vsub.f32 %v1634, %v2227
        %v2545 = vsub.f32 %v1636, %v2230
        %v2546 = vsub.f32 %v1638, %v2230
        %v2547 = vsub.f32 %v1642, %v2233
        %v2548 = vsub.f32 %v1644, %v2233
        %v2549 = vsub.f32 %v1646, %v2236
        %v2550 = vsub.f32 %v1648, %v2236
        %v2551 = vsub.f32 %v1652, %v2239
        %v2552 = vsub.f32 %v1654, %v2239
        %v2553 = vsub.f32 %v1656, %v2242
        %v2554 = vsub.f32 %v1658, %v2242
        %v2555 = vsub.f32 %v1662, %v2245
        %v2556 = vsub.f32 %v1664, %v2245
        %v2557 = vsub.f32 %v1666, %v2248
        %v2558 = vsub.f32 %v1668, %v2248
        %v2559 = vsub.f32 %v1672, %v2251
        %v2560 = vsub.f32 %v1674, %v2251
        %v2561 = vsub.f32 %v1676, %v2254
        %v2562 = vsub.f32 %v1678, %v2254
        %v2563 = vsub.f32 %v1682, %v2257
        %v2564 = vsub.f32 %v1684, %v2257
        %v2565 = vsub.f32 %v1686, %v2260
        %v2566 = vsub.f32 %v1688, %v2260
        %v2567 = vsub.f32 %v1692, %v2263
        %v2568 = vsub.f32 %v1694, %v2263
        %v2569 = vsub.f32 %v1696, %v2266
        %v2570 = vsub.f32 %v1698, %v2266
        %v2571 = vsub.f32 %v1702, %v2269
        %v2572 = vsub.f32 %v1704, %v2269
        %v2573 = vsub.f32 %v1706, %v2272
        %v2574 = vsub.f32 %v1708, %v2272
        %v2575 = vsub.f32 %v1712, %v2275
        %v2576 = vsub.f32 %v1714, %v2275
        %v2577 = vsub.f32 %v1716, %v2278
        %v2578 = vsub.f32 %v1718, %v2278
        %v2579 = vsub.f32 %v1722, %v2281
        %v2580 = vsub.f32 %v1724, %v2281
        %v2581 = vsub.f32 %v1726, %v2284
        %v2582 = vsub.f32 %v1728, %v2284
        %v2583 = vsub.f32 %v1732, %v2287
        %v2584 = vsub.f32 %v1734, %v2287
        %v2585 = vsub.f32 %v1736, %v2290
        %v2586 = vsub.f32 %v1738, %v2290
        %v2587 = vsub.f32 %v1742, %v2293
        %v2588 = vsub.f32 %v1744, %v2293
        %v2589 = vsub.f32 %v1746, %v2296
        %v2590 = vsub.f32 %v1748, %v2296
        %v2591 = vsub.f32 %v1752, %v2299
        %v2592 = vsub.f32 %v1754, %v2299
        %v2593 = vsub.f32 %v1756, %v2302
        %v2594 = vsub.f32 %v1758, %v2302
        %v2595 = vsub.f32 %v1762, %v2305
        %v2596 = vsub.f32 %v1764, %v2305
        %v2597 = vsub.f32 %v1766, %v2308
        %v2598 = vsub.f32 %v1768, %v2308
        %v2599 = vsub.f32 %v1772, %v2311
        %v2600 = vsub.f32 %v1774, %v2311
        %v2601 = vsub.f32 %v1776, %v2314
        %v2602 = vsub.f32 %v1778, %v2314
        %v2603 = vsub.f32 %v1869, %v2317
        %v2604 = vsub.f32 %v1871, %v2317
        %v2605 = vsub.f32 %v1873, %v2320
        %v2606 = vsub.f32 %v1875, %v2320
        %v2607 = vsub.f32 %v1879, %v2323
        %v2608 = vsub.f32 %v1881, %v2323
        %v2609 = vsub.f32 %v1883, %v2326
        %v2610 = vsub.f32 %v1885, %v2326
        %v2611 = vsub.f32 %v1889, %v2329
        %v2612 = vsub.f32 %v1891, %v2329
        %v2613 = vsub.f32 %v1893, %v2332
        %v2614 = vsub.f32 %v1895, %v2332
        %v2615 = vsub.f32 %v1899, %v2335
        %v2616 = vsub.f32 %v1901, %v2335
        %v2617 = vsub.f32 %v1903, %v2338
        %v2618 = vsub.f32 %v1905, %v2338
        %v2619 = vsub.f32 %v1909, %v2341
        %v2620 = vsub.f32 %v1911, %v2341
        %v2621 = vsub.f32 %v1913, %v2344
        %v2622 = vsub.f32 %v1915, %v2344
        %v2623 = vsub.f32 %v1919, %v2347
        %v2624 = vsub.f32 %v1921, %v2347
        %v2625 = vsub.f32 %v1923, %v2350
        %v2626 = vsub.f32 %v1925, %v2350
        %v2627 = vsub.f32 %v1929, %v2353
        %v2628 = vsub.f32 %v1931, %v2353
        %v2629 = vsub.f32 %v1933, %v2356
        %v2630 = vsub.f32 %v1935, %v2356
        %v2631 = vsub.f32 %v1939, %v2359
        %v2632 = vsub.f32 %v1941, %v2359
        %v2633 = vsub.f32 %v1943, %v2362
        %v2634 = vsub.f32 %v1945, %v2362
        %v2635 = vsub.f32 %v1949, %v2365
        %v2636 = vsub.f32 %v1951, %v2365
        %v2637 = vsub.f32 %v1953, %v2368
        %v2638 = vsub.f32 %v1955, %v2368
        %v2639 = vsub.f32 %v1959, %v2371
        %v2640 = vsub.f32 %v1961, %v2371
        %v2641 = vsub.f32 %v1963, %v2374
        %v2642 = vsub.f32 %v1965, %v2374
        %v2643 = vsub.f32 %v1969, %v2377
        %v2644 = vsub.f32 %v1971, %v2377
        %v2645 = vsub.f32 %v1973, %v2380
        %v2646 = vsub.f32 %v1975, %v2380
        %v2647 = vsub.f32 %v1979, %v2383
        %v2648 = vsub.f32 %v1981, %v2383
        %v2649 = vsub.f32 %v1983, %v2386
        %v2650 = vsub.f32 %v1985, %v2386
        %v2651 = vsub.f32 %v1989, %v2389
        %v2652 = vsub.f32 %v1991, %v2389
        %v2653 = vsub.f32 %v1993, %v2392
        %v2654 = vsub.f32 %v1995, %v2392
        %v2655 = vsub.f32 %v1999, %v2395
        %v2656 = vsub.f32 %v2001, %v2395
        %v2657 = vsub.f32 %v2003, %v2398
        %v2658 = vsub.f32 %v2005, %v2398
        %v2659 = vsub.f32 %v2009, %v2401
        %v2660 = vsub.f32 %v2011, %v2401
        %v2661 = vsub.f32 %v2013, %v2404
        %v2662 = vsub.f32 %v2015, %v2404
        %v2663 = vsub.f32 %v2019, %v2407
        %v2664 = vsub.f32 %v2021, %v2407
        %v2665 = vsub.f32 %v2023, %v2410
        %v2666 = vsub.f32 %v2025, %v2410
        %v2667 = vmul.f32 %v2411, 1.442695
        %v2668 = vpow.pop %v2667
        %v2669 = vmul.f32 %v2412, 1.442695
        %v2670 = vpow.pop %v2669
        %v2671 = vmul.f32 %v2413, 1.442695
        %v2672 = vpow.pop %v2671
        %v2673 = vmul.f32 %v2414, 1.442695
        %v2674 = vpow.pop %v2673
        %v2675 = vmul.f32 %v2415, 1.442695
        %v2676 = vpow.pop %v2675
        %v2677 = vmul.f32 %v2416, 1.442695
        %v2678 = vpow.pop %v2677
        %v2679 = vmul.f32 %v2417, 1.442695
        %v2680 = vpow.pop %v2679
        %v2681 = vmul.f32 %v2418, 1.442695
        %v2682 = vpow.pop %v2681
        %v2683 = vmul.f32 %v2419, 1.442695
        %v2684 = vpow.pop %v2683
        %v2685 = vmul.f32 %v2420, 1.442695
        %v2686 = vpow.pop %v2685
        %v2687 = vmul.f32 %v2421, 1.442695
        %v2688 = vpow.pop %v2687
        %v2689 = vmul.f32 %v2422, 1.442695
        %v2690 = vpow.pop %v2689
        %v2691 = vmul.f32 %v2423, 1.442695
        %v2692 = vpow.pop %v2691
        %v2693 = vmul.f32 %v2424, 1.442695
        %v2694 = vpow.pop %v2693
        %v2695 = vmul.f32 %v2425, 1.442695
        %v2696 = vpow.pop %v2695
        %v2697 = vmul.f32 %v2426, 1.442695
        %v2698 = vpow.pop %v2697
        %v2699 = vmul.f32 %v2427, 1.442695
        %v2700 = vpow.pop %v2699
        %v2701 = vmul.f32 %v2428, 1.442695
        %v2702 = vpow.pop %v2701
        %v2703 = vmul.f32 %v2429, 1.442695
        %v2704 = vpow.pop %v2703
        %v2705 = vmul.f32 %v2430, 1.442695
        %v2706 = vpow.pop %v2705
        %v2707 = vmul.f32 %v2431, 1.442695
        %v2708 = vpow.pop %v2707
        %v2709 = vmul.f32 %v2432, 1.442695
        %v2710 = vpow.pop %v2709
        %v2711 = vmul.f32 %v2433, 1.442695
        %v2712 = vpow.pop %v2711
        %v2713 = vmul.f32 %v2434, 1.442695
        %v2714 = vpow.pop %v2713
        %v2715 = vmul.f32 %v2435, 1.442695
        %v2716 = vpow.pop %v2715
        %v2717 = vmul.f32 %v2436, 1.442695
        %v2718 = vpow.pop %v2717
        %v2719 = vmul.f32 %v2437, 1.442695
        %v2720 = vpow.pop %v2719
        %v2721 = vmul.f32 %v2438, 1.442695
        %v2722 = vpow.pop %v2721
        %v2723 = vmul.f32 %v2439, 1.442695
        %v2724 = vpow.pop %v2723
        %v2725 = vmul.f32 %v2440, 1.442695
        %v2726 = vpow.pop %v2725
        %v2727 = vmul.f32 %v2441, 1.442695
        %v2728 = vpow.pop %v2727
        %v2729 = vmul.f32 %v2442, 1.442695
        %v2730 = vpow.pop %v2729
        %v2731 = vmul.f32 %v2443, 1.442695
        %v2732 = vpow.pop %v2731
        %v2733 = vmul.f32 %v2444, 1.442695
        %v2734 = vpow.pop %v2733
        %v2735 = vmul.f32 %v2445, 1.442695
        %v2736 = vpow.pop %v2735
        %v2737 = vmul.f32 %v2446, 1.442695
        %v2738 = vpow.pop %v2737
        %v2739 = vmul.f32 %v2447, 1.442695
        %v2740 = vpow.pop %v2739
        %v2741 = vmul.f32 %v2448, 1.442695
        %v2742 = vpow.pop %v2741
        %v2743 = vmul.f32 %v2449, 1.442695
        %v2744 = vpow.pop %v2743
        %v2745 = vmul.f32 %v2450, 1.442695
        %v2746 = vpow.pop %v2745
        %v2747 = vmul.f32 %v2451, 1.442695
        %v2748 = vpow.pop %v2747
        %v2749 = vmul.f32 %v2452, 1.442695
        %v2750 = vpow.pop %v2749
        %v2751 = vmul.f32 %v2453, 1.442695
        %v2752 = vpow.pop %v2751
        %v2753 = vmul.f32 %v2454, 1.442695
        %v2754 = vpow.pop %v2753
        %v2755 = vmul.f32 %v2455, 1.442695
        %v2756 = vpow.pop %v2755
        %v2757 = vmul.f32 %v2456, 1.442695
        %v2758 = vpow.pop %v2757
        %v2759 = vmul.f32 %v2457, 1.442695
        %v2760 = vpow.pop %v2759
        %v2761 = vmul.f32 %v2458, 1.442695
        %v2762 = vpow.pop %v2761
        %v2763 = vmul.f32 %v2459, 1.442695
        %v2764 = vpow.pop %v2763
        %v2765 = vmul.f32 %v2460, 1.442695
        %v2766 = vpow.pop %v2765
        %v2767 = vmul.f32 %v2461, 1.442695
        %v2768 = vpow.pop %v2767
        %v2769 = vmul.f32 %v2462, 1.442695
        %v2770 = vpow.pop %v2769
        %v2771 = vmul.f32 %v2463, 1.442695
        %v2772 = vpow.pop %v2771
        %v2773 = vmul.f32 %v2464, 1.442695
        %v2774 = vpow.pop %v2773
        %v2775 = vmul.f32 %v2465, 1.442695
        %v2776 = vpow.pop %v2775
        %v2777 = vmul.f32 %v2466, 1.442695
        %v2778 = vpow.pop %v2777
        %v2779 = vmul.f32 %v2467, 1.442695
        %v2780 = vpow.pop %v2779
        %v2781 = vmul.f32 %v2468, 1.442695
        %v2782 = vpow.pop %v2781
        %v2783 = vmul.f32 %v2469, 1.442695
        %v2784 = vpow.pop %v2783
        %v2785 = vmul.f32 %v2470, 1.442695
        %v2786 = vpow.pop %v2785
        %v2787 = vmul.f32 %v2471, 1.442695
        %v2788 = vpow.pop %v2787
        %v2789 = vmul.f32 %v2472, 1.442695
        %v2790 = vpow.pop %v2789
        %v2791 = vmul.f32 %v2473, 1.442695
        %v2792 = vpow.pop %v2791
        %v2793 = vmul.f32 %v2474, 1.442695
        %v2794 = vpow.pop %v2793
        %v2795 = vmul.f32 %v2475, 1.442695
        %v2796 = vpow.pop %v2795
        %v2797 = vmul.f32 %v2476, 1.442695
        %v2798 = vpow.pop %v2797
        %v2799 = vmul.f32 %v2477, 1.442695
        %v2800 = vpow.pop %v2799
        %v2801 = vmul.f32 %v2478, 1.442695
        %v2802 = vpow.pop %v2801
        %v2803 = vmul.f32 %v2479, 1.442695
        %v2804 = vpow.pop %v2803
        %v2805 = vmul.f32 %v2480, 1.442695
        %v2806 = vpow.pop %v2805
        %v2807 = vmul.f32 %v2481, 1.442695
        %v2808 = vpow.pop %v2807
        %v2809 = vmul.f32 %v2482, 1.442695
        %v2810 = vpow.pop %v2809
        %v2811 = vmul.f32 %v2483, 1.442695
        %v2812 = vpow.pop %v2811
        %v2813 = vmul.f32 %v2484, 1.442695
        %v2814 = vpow.pop %v2813
        %v2815 = vmul.f32 %v2485, 1.442695
        %v2816 = vpow.pop %v2815
        %v2817 = vmul.f32 %v2486, 1.442695
        %v2818 = vpow.pop %v2817
        %v2819 = vmul.f32 %v2487, 1.442695
        %v2820 = vpow.pop %v2819
        %v2821 = vmul.f32 %v2488, 1.442695
        %v2822 = vpow.pop %v2821
        %v2823 = vmul.f32 %v2489, 1.442695
        %v2824 = vpow.pop %v2823
        %v2825 = vmul.f32 %v2490, 1.442695
        %v2826 = vpow.pop %v2825
        %v2827 = vmul.f32 %v2491, 1.442695
        %v2828 = vpow.pop %v2827
        %v2829 = vmul.f32 %v2492, 1.442695
        %v2830 = vpow.pop %v2829
        %v2831 = vmul.f32 %v2493, 1.442695
        %v2832 = vpow.pop %v2831
        %v2833 = vmul.f32 %v2494, 1.442695
        %v2834 = vpow.pop %v2833
        %v2835 = vmul.f32 %v2495, 1.442695
        %v2836 = vpow.pop %v2835
        %v2837 = vmul.f32 %v2496, 1.442695
        %v2838 = vpow.pop %v2837
        %v2839 = vmul.f32 %v2497, 1.442695
        %v2840 = vpow.pop %v2839
        %v2841 = vmul.f32 %v2498, 1.442695
        %v2842 = vpow.pop %v2841
        %v2843 = vmul.f32 %v2499, 1.442695
        %v2844 = vpow.pop %v2843
        %v2845 = vmul.f32 %v2500, 1.442695
        %v2846 = vpow.pop %v2845
        %v2847 = vmul.f32 %v2501, 1.442695
        %v2848 = vpow.pop %v2847
        %v2849 = vmul.f32 %v2502, 1.442695
        %v2850 = vpow.pop %v2849
        %v2851 = vmul.f32 %v2503, 1.442695
        %v2852 = vpow.pop %v2851
        %v2853 = vmul.f32 %v2504, 1.442695
        %v2854 = vpow.pop %v2853
        %v2855 = vmul.f32 %v2505, 1.442695
        %v2856 = vpow.pop %v2855
        %v2857 = vmul.f32 %v2506, 1.442695
        %v2858 = vpow.pop %v2857
        %v2859 = vmul.f32 %v2507, 1.442695
        %v2860 = vpow.pop %v2859
        %v2861 = vmul.f32 %v2508, 1.442695
        %v2862 = vpow.pop %v2861
        %v2863 = vmul.f32 %v2509, 1.442695
        %v2864 = vpow.pop %v2863
        %v2865 = vmul.f32 %v2510, 1.442695
        %v2866 = vpow.pop %v2865
        %v2867 = vmul.f32 %v2511, 1.442695
        %v2868 = vpow.pop %v2867
        %v2869 = vmul.f32 %v2512, 1.442695
        %v2870 = vpow.pop %v2869
        %v2871 = vmul.f32 %v2513, 1.442695
        %v2872 = vpow.pop %v2871
        %v2873 = vmul.f32 %v2514, 1.442695
        %v2874 = vpow.pop %v2873
        %v2875 = vmul.f32 %v2515, 1.442695
        %v2876 = vpow.pop %v2875
        %v2877 = vmul.f32 %v2516, 1.442695
        %v2878 = vpow.pop %v2877
        %v2879 = vmul.f32 %v2517, 1.442695
        %v2880 = vpow.pop %v2879
        %v2881 = vmul.f32 %v2518, 1.442695
        %v2882 = vpow.pop %v2881
        %v2883 = vmul.f32 %v2519, 1.442695
        %v2884 = vpow.pop %v2883
        %v2885 = vmul.f32 %v2520, 1.442695
        %v2886 = vpow.pop %v2885
        %v2887 = vmul.f32 %v2521, 1.442695
        %v2888 = vpow.pop %v2887
        %v2889 = vmul.f32 %v2522, 1.442695
        %v2890 = vpow.pop %v2889
        %v2891 = vmul.f32 %v2523, 1.442695
        %v2892 = vpow.pop %v2891
        %v2893 = vmul.f32 %v2524, 1.442695
        %v2894 = vpow.pop %v2893
        %v2895 = vmul.f32 %v2525, 1.442695
        %v2896 = vpow.pop %v2895
        %v2897 = vmul.f32 %v2526, 1.442695
        %v2898 = vpow.pop %v2897
        %v2899 = vmul.f32 %v2527, 1.442695
        %v2900 = vpow.pop %v2899
        %v2901 = vmul.f32 %v2528, 1.442695
        %v2902 = vpow.pop %v2901
        %v2903 = vmul.f32 %v2529, 1.442695
        %v2904 = vpow.pop %v2903
        %v2905 = vmul.f32 %v2530, 1.442695
        %v2906 = vpow.pop %v2905
        %v2907 = vmul.f32 %v2531, 1.442695
        %v2908 = vpow.pop %v2907
        %v2909 = vmul.f32 %v2532, 1.442695
        %v2910 = vpow.pop %v2909
        %v2911 = vmul.f32 %v2533, 1.442695
        %v2912 = vpow.pop %v2911
        %v2913 = vmul.f32 %v2534, 1.442695
        %v2914 = vpow.pop %v2913
        %v2915 = vmul.f32 %v2535, 1.442695
        %v2916 = vpow.pop %v2915
        %v2917 = vmul.f32 %v2536, 1.442695
        %v2918 = vpow.pop %v2917
        %v2919 = vmul.f32 %v2537, 1.442695
        %v2920 = vpow.pop %v2919
        %v2921 = vmul.f32 %v2538, 1.442695
        %v2922 = vpow.pop %v2921
        %v2923 = vmul.f32 %v2539, 1.442695
        %v2924 = vpow.pop %v2923
        %v2925 = vmul.f32 %v2540, 1.442695
        %v2926 = vpow.pop %v2925
        %v2927 = vmul.f32 %v2541, 1.442695
        %v2928 = vpow.pop %v2927
        %v2929 = vmul.f32 %v2542, 1.442695
        %v2930 = vpow.pop %v2929
        %v2931 = vmul.f32 %v2543, 1.442695
        %v2932 = vpow.pop %v2931
        %v2933 = vmul.f32 %v2544, 1.442695
        %v2934 = vpow.pop %v2933
        %v2935 = vmul.f32 %v2545, 1.442695
        %v2936 = vpow.pop %v2935
        %v2937 = vmul.f32 %v2546, 1.442695
        %v2938 = vpow.pop %v2937
        %v2939 = vmul.f32 %v2547, 1.442695
        %v2940 = vpow.pop %v2939
        %v2941 = vmul.f32 %v2548, 1.442695
        %v2942 = vpow.pop %v2941
        %v2943 = vmul.f32 %v2549, 1.442695
        %v2944 = vpow.pop %v2943
        %v2945 = vmul.f32 %v2550, 1.442695
        %v2946 = vpow.pop %v2945
        %v2947 = vmul.f32 %v2551, 1.442695
        %v2948 = vpow.pop %v2947
        %v2949 = vmul.f32 %v2552, 1.442695
        %v2950 = vpow.pop %v2949
        %v2951 = vmul.f32 %v2553, 1.442695
        %v2952 = vpow.pop %v2951
        %v2953 = vmul.f32 %v2554, 1.442695
        %v2954 = vpow.pop %v2953
        %v2955 = vmul.f32 %v2555, 1.442695
        %v2956 = vpow.pop %v2955
        %v2957 = vmul.f32 %v2556, 1.442695
        %v2958 = vpow.pop %v2957
        %v2959 = vmul.f32 %v2557, 1.442695
        %v2960 = vpow.pop %v2959
        %v2961 = vmul.f32 %v2558, 1.442695
        %v2962 = vpow.pop %v2961
        %v2963 = vmul.f32 %v2559, 1.442695
        %v2964 = vpow.pop %v2963
        %v2965 = vmul.f32 %v2560, 1.442695
        %v2966 = vpow.pop %v2965
        %v2967 = vmul.f32 %v2561, 1.442695
        %v2968 = vpow.pop %v2967
        %v2969 = vmul.f32 %v2562, 1.442695
        %v2970 = vpow.pop %v2969
        %v2971 = vmul.f32 %v2563, 1.442695
        %v2972 = vpow.pop %v2971
        %v2973 = vmul.f32 %v2564, 1.442695
        %v2974 = vpow.pop %v2973
        %v2975 = vmul.f32 %v2565, 1.442695
        %v2976 = vpow.pop %v2975
        %v2977 = vmul.f32 %v2566, 1.442695
        %v2978 = vpow.pop %v2977
        %v2979 = vmul.f32 %v2567, 1.442695
        %v2980 = vpow.pop %v2979
        %v2981 = vmul.f32 %v2568, 1.442695
        %v2982 = vpow.pop %v2981
        %v2983 = vmul.f32 %v2569, 1.442695
        %v2984 = vpow.pop %v2983
        %v2985 = vmul.f32 %v2570, 1.442695
        %v2986 = vpow.pop %v2985
        %v2987 = vmul.f32 %v2571, 1.442695
        %v2988 = vpow.pop %v2987
        %v2989 = vmul.f32 %v2572, 1.442695
        %v2990 = vpow.pop %v2989
        %v2991 = vmul.f32 %v2573, 1.442695
        %v2992 = vpow.pop %v2991
        %v2993 = vmul.f32 %v2574, 1.442695
        %v2994 = vpow.pop %v2993
        %v2995 = vmul.f32 %v2575, 1.442695
        %v2996 = vpow.pop %v2995
        %v2997 = vmul.f32 %v2576, 1.442695
        %v2998 = vpow.pop %v2997
        %v2999 = vmul.f32 %v2577, 1.442695
        %v3000 = vpow.pop %v2999
        %v3001 = vmul.f32 %v2578, 1.442695
        %v3002 = vpow.pop %v3001
        %v3003 = vmul.f32 %v2579, 1.442695
        %v3004 = vpow.pop %v3003
        %v3005 = vmul.f32 %v2580, 1.442695
        %v3006 = vpow.pop %v3005
        %v3007 = vmul.f32 %v2581, 1.442695
        %v3008 = vpow.pop %v3007
        %v3009 = vmul.f32 %v2582, 1.442695
        %v3010 = vpow.pop %v3009
        %v3011 = vmul.f32 %v2583, 1.442695
        %v3012 = vpow.pop %v3011
        %v3013 = vmul.f32 %v2584, 1.442695
        %v3014 = vpow.pop %v3013
        %v3015 = vmul.f32 %v2585, 1.442695
        %v3016 = vpow.pop %v3015
        %v3017 = vmul.f32 %v2586, 1.442695
        %v3018 = vpow.pop %v3017
        %v3019 = vmul.f32 %v2587, 1.442695
        %v3020 = vpow.pop %v3019
        %v3021 = vmul.f32 %v2588, 1.442695
        %v3022 = vpow.pop %v3021
        %v3023 = vmul.f32 %v2589, 1.442695
        %v3024 = vpow.pop %v3023
        %v3025 = vmul.f32 %v2590, 1.442695
        %v3026 = vpow.pop %v3025
        %v3027 = vmul.f32 %v2591, 1.442695
        %v3028 = vpow.pop %v3027
        %v3029 = vmul.f32 %v2592, 1.442695
        %v3030 = vpow.pop %v3029
        %v3031 = vmul.f32 %v2593, 1.442695
        %v3032 = vpow.pop %v3031
        %v3033 = vmul.f32 %v2594, 1.442695
        %v3034 = vpow.pop %v3033
        %v3035 = vmul.f32 %v2595, 1.442695
        %v3036 = vpow.pop %v3035
        %v3037 = vmul.f32 %v2596, 1.442695
        %v3038 = vpow.pop %v3037
        %v3039 = vmul.f32 %v2597, 1.442695
        %v3040 = vpow.pop %v3039
        %v3041 = vmul.f32 %v2598, 1.442695
        %v3042 = vpow.pop %v3041
        %v3043 = vmul.f32 %v2599, 1.442695
        %v3044 = vpow.pop %v3043
        %v3045 = vmul.f32 %v2600, 1.442695
        %v3046 = vpow.pop %v3045
        %v3047 = vmul.f32 %v2601, 1.442695
        %v3048 = vpow.pop %v3047
        %v3049 = vmul.f32 %v2602, 1.442695
        %v3050 = vpow.pop %v3049
        %v3051 = vmul.f32 %v2603, 1.442695
        %v3052 = vpow.pop %v3051
        %v3053 = vmul.f32 %v2604, 1.442695
        %v3054 = vpow.pop %v3053
        %v3055 = vmul.f32 %v2605, 1.442695
        %v3056 = vpow.pop %v3055
        %v3057 = vmul.f32 %v2606, 1.442695
        %v3058 = vpow.pop %v3057
        %v3059 = vmul.f32 %v2607, 1.442695
        %v3060 = vpow.pop %v3059
        %v3061 = vmul.f32 %v2608, 1.442695
        %v3062 = vpow.pop %v3061
        %v3063 = vmul.f32 %v2609, 1.442695
        %v3064 = vpow.pop %v3063
        %v3065 = vmul.f32 %v2610, 1.442695
        %v3066 = vpow.pop %v3065
        %v3067 = vmul.f32 %v2611, 1.442695
        %v3068 = vpow.pop %v3067
        %v3069 = vmul.f32 %v2612, 1.442695
        %v3070 = vpow.pop %v3069
        %v3071 = vmul.f32 %v2613, 1.442695
        %v3072 = vpow.pop %v3071
        %v3073 = vmul.f32 %v2614, 1.442695
        %v3074 = vpow.pop %v3073
        %v3075 = vmul.f32 %v2615, 1.442695
        %v3076 = vpow.pop %v3075
        %v3077 = vmul.f32 %v2616, 1.442695
        %v3078 = vpow.pop %v3077
        %v3079 = vmul.f32 %v2617, 1.442695
        %v3080 = vpow.pop %v3079
        %v3081 = vmul.f32 %v2618, 1.442695
        %v3082 = vpow.pop %v3081
        %v3083 = vmul.f32 %v2619, 1.442695
        %v3084 = vpow.pop %v3083
        %v3085 = vmul.f32 %v2620, 1.442695
        %v3086 = vpow.pop %v3085
        %v3087 = vmul.f32 %v2621, 1.442695
        %v3088 = vpow.pop %v3087
        %v3089 = vmul.f32 %v2622, 1.442695
        %v3090 = vpow.pop %v3089
        %v3091 = vmul.f32 %v2623, 1.442695
        %v3092 = vpow.pop %v3091
        %v3093 = vmul.f32 %v2624, 1.442695
        %v3094 = vpow.pop %v3093
        %v3095 = vmul.f32 %v2625, 1.442695
        %v3096 = vpow.pop %v3095
        %v3097 = vmul.f32 %v2626, 1.442695
        %v3098 = vpow.pop %v3097
        %v3099 = vmul.f32 %v2627, 1.442695
        %v3100 = vpow.pop %v3099
        %v3101 = vmul.f32 %v2628, 1.442695
        %v3102 = vpow.pop %v3101
        %v3103 = vmul.f32 %v2629, 1.442695
        %v3104 = vpow.pop %v3103
        %v3105 = vmul.f32 %v2630, 1.442695
        %v3106 = vpow.pop %v3105
        %v3107 = vmul.f32 %v2631, 1.442695
        %v3108 = vpow.pop %v3107
        %v3109 = vmul.f32 %v2632, 1.442695
        %v3110 = vpow.pop %v3109
        %v3111 = vmul.f32 %v2633, 1.442695
        %v3112 = vpow.pop %v3111
        %v3113 = vmul.f32 %v2634, 1.442695
        %v3114 = vpow.pop %v3113
        %v3115 = vmul.f32 %v2635, 1.442695
        %v3116 = vpow.pop %v3115
        %v3117 = vmul.f32 %v2636, 1.442695
        %v3118 = vpow.pop %v3117
        %v3119 = vmul.f32 %v2637, 1.442695
        %v3120 = vpow.pop %v3119
        %v3121 = vmul.f32 %v2638, 1.442695
        %v3122 = vpow.pop %v3121
        %v3123 = vmul.f32 %v2639, 1.442695
        %v3124 = vpow.pop %v3123
        %v3125 = vmul.f32 %v2640, 1.442695
        %v3126 = vpow.pop %v3125
        %v3127 = vmul.f32 %v2641, 1.442695
        %v3128 = vpow.pop %v3127
        %v3129 = vmul.f32 %v2642, 1.442695
        %v3130 = vpow.pop %v3129
        %v3131 = vmul.f32 %v2643, 1.442695
        %v3132 = vpow.pop %v3131
        %v3133 = vmul.f32 %v2644, 1.442695
        %v3134 = vpow.pop %v3133
        %v3135 = vmul.f32 %v2645, 1.442695
        %v3136 = vpow.pop %v3135
        %v3137 = vmul.f32 %v2646, 1.442695
        %v3138 = vpow.pop %v3137
        %v3139 = vmul.f32 %v2647, 1.442695
        %v3140 = vpow.pop %v3139
        %v3141 = vmul.f32 %v2648, 1.442695
        %v3142 = vpow.pop %v3141
        %v3143 = vmul.f32 %v2649, 1.442695
        %v3144 = vpow.pop %v3143
        %v3145 = vmul.f32 %v2650, 1.442695
        %v3146 = vpow.pop %v3145
        %v3147 = vmul.f32 %v2651, 1.442695
        %v3148 = vpow.pop %v3147
        %v3149 = vmul.f32 %v2652, 1.442695
        %v3150 = vpow.pop %v3149
        %v3151 = vmul.f32 %v2653, 1.442695
        %v3152 = vpow.pop %v3151
        %v3153 = vmul.f32 %v2654, 1.442695
        %v3154 = vpow.pop %v3153
        %v3155 = vmul.f32 %v2655, 1.442695
        %v3156 = vpow.pop %v3155
        %v3157 = vmul.f32 %v2656, 1.442695
        %v3158 = vpow.pop %v3157
        %v3159 = vmul.f32 %v2657, 1.442695
        %v3160 = vpow.pop %v3159
        %v3161 = vmul.f32 %v2658, 1.442695
        %v3162 = vpow.pop %v3161
        %v3163 = vmul.f32 %v2659, 1.442695
        %v3164 = vpow.pop %v3163
        %v3165 = vmul.f32 %v2660, 1.442695
        %v3166 = vpow.pop %v3165
        %v3167 = vmul.f32 %v2661, 1.442695
        %v3168 = vpow.pop %v3167
        %v3169 = vmul.f32 %v2662, 1.442695
        %v3170 = vpow.pop %v3169
        %v3171 = vmul.f32 %v2663, 1.442695
        %v3172 = vpow.pop %v3171
        %v3173 = vmul.f32 %v2664, 1.442695
        %v3174 = vpow.pop %v3173
        %v3175 = vmul.f32 %v2665, 1.442695
        %v3176 = vpow.pop %v3175
        %v3177 = vmul.f32 %v2666, 1.442695
        %v3178 = vpow.pop %v3177
        %v3179 = vadd.f32 %v2668, %v2670
        %3180 = vadd.xlane.f32.xlu0 %v3179
        %v3181 = vpop.xlane.xlu0 %3180
        %v3182 = vadd.f32 %v2672, %v2674
        %3183 = vadd.xlane.f32.xlu0 %v3182
        %v3184 = vpop.xlane.xlu0 %3183
        %v3185 = vadd.f32 %v2676, %v2678
        %3186 = vadd.xlane.f32.xlu0 %v3185
        %v3187 = vpop.xlane.xlu0 %3186
        %v3188 = vadd.f32 %v2680, %v2682
        %3189 = vadd.xlane.f32.xlu0 %v3188
        %v3190 = vpop.xlane.xlu0 %3189
        %v3191 = vadd.f32 %v2684, %v2686
        %3192 = vadd.xlane.f32.xlu0 %v3191
        %v3193 = vpop.xlane.xlu0 %3192
        %v3194 = vadd.f32 %v2688, %v2690
        %3195 = vadd.xlane.f32.xlu0 %v3194
        %v3196 = vpop.xlane.xlu0 %3195
        %v3197 = vadd.f32 %v2692, %v2694
        %3198 = vadd.xlane.f32.xlu0 %v3197
        %v3199 = vpop.xlane.xlu0 %3198
        %v3200 = vadd.f32 %v2696, %v2698
        %3201 = vadd.xlane.f32.xlu0 %v3200
        %v3202 = vpop.xlane.xlu0 %3201
        %v3203 = vadd.f32 %v2700, %v2702
        %3204 = vadd.xlane.f32.xlu0 %v3203
        %v3205 = vpop.xlane.xlu0 %3204
        %v3206 = vadd.f32 %v2704, %v2706
        %3207 = vadd.xlane.f32.xlu0 %v3206
        %v3208 = vpop.xlane.xlu0 %3207
        %v3209 = vadd.f32 %v2708, %v2710
        %3210 = vadd.xlane.f32.xlu0 %v3209
        %v3211 = vpop.xlane.xlu0 %3210
        %v3212 = vadd.f32 %v2712, %v2714
        %3213 = vadd.xlane.f32.xlu0 %v3212
        %v3214 = vpop.xlane.xlu0 %3213
        %v3215 = vadd.f32 %v2716, %v2718
        %3216 = vadd.xlane.f32.xlu0 %v3215
        %v3217 = vpop.xlane.xlu0 %3216
        %v3218 = vadd.f32 %v2720, %v2722
        %3219 = vadd.xlane.f32.xlu0 %v3218
        %v3220 = vpop.xlane.xlu0 %3219
        %v3221 = vadd.f32 %v2724, %v2726
        %3222 = vadd.xlane.f32.xlu0 %v3221
        %v3223 = vpop.xlane.xlu0 %3222
        %v3224 = vadd.f32 %v2728, %v2730
        %3225 = vadd.xlane.f32.xlu0 %v3224
        %v3226 = vpop.xlane.xlu0 %3225
        %v3227 = vadd.f32 %v2732, %v2734
        %3228 = vadd.xlane.f32.xlu0 %v3227
        %v3229 = vpop.xlane.xlu0 %3228
        %v3230 = vadd.f32 %v2736, %v2738
        %3231 = vadd.xlane.f32.xlu0 %v3230
        %v3232 = vpop.xlane.xlu0 %3231
        %v3233 = vadd.f32 %v2740, %v2742
        %3234 = vadd.xlane.f32.xlu0 %v3233
        %v3235 = vpop.xlane.xlu0 %3234
        %v3236 = vadd.f32 %v2744, %v2746
        %3237 = vadd.xlane.f32.xlu0 %v3236
        %v3238 = vpop.xlane.xlu0 %3237
        %v3239 = vadd.f32 %v2748, %v2750
        %3240 = vadd.xlane.f32.xlu0 %v3239
        %v3241 = vpop.xlane.xlu0 %3240
        %v3242 = vadd.f32 %v2752, %v2754
        %3243 = vadd.xlane.f32.xlu0 %v3242
        %v3244 = vpop.xlane.xlu0 %3243
        %v3245 = vadd.f32 %v2756, %v2758
        %3246 = vadd.xlane.f32.xlu0 %v3245
        %v3247 = vpop.xlane.xlu0 %3246
        %v3248 = vadd.f32 %v2760, %v2762
        %3249 = vadd.xlane.f32.xlu0 %v3248
        %v3250 = vpop.xlane.xlu0 %3249
        %v3251 = vadd.f32 %v2764, %v2766
        %3252 = vadd.xlane.f32.xlu0 %v3251
        %v3253 = vpop.xlane.xlu0 %3252
        %v3254 = vadd.f32 %v2768, %v2770
        %3255 = vadd.xlane.f32.xlu0 %v3254
        %v3256 = vpop.xlane.xlu0 %3255
        %v3257 = vadd.f32 %v2772, %v2774
        %3258 = vadd.xlane.f32.xlu0 %v3257
        %v3259 = vpop.xlane.xlu0 %3258
        %v3260 = vadd.f32 %v2776, %v2778
        %3261 = vadd.xlane.f32.xlu0 %v3260
        %v3262 = vpop.xlane.xlu0 %3261
        %v3263 = vadd.f32 %v2780, %v2782
        %3264 = vadd.xlane.f32.xlu0 %v3263
        %v3265 = vpop.xlane.xlu0 %3264
        %v3266 = vadd.f32 %v2784, %v2786
        %3267 = vadd.xlane.f32.xlu0 %v3266
        %v3268 = vpop.xlane.xlu0 %3267
        %v3269 = vadd.f32 %v2788, %v2790
        %3270 = vadd.xlane.f32.xlu0 %v3269
        %v3271 = vpop.xlane.xlu0 %3270
        %v3272 = vadd.f32 %v2792, %v2794
        %3273 = vadd.xlane.f32.xlu0 %v3272
        %v3274 = vpop.xlane.xlu0 %3273
        %v3275 = vadd.f32 %v2796, %v2798
        %3276 = vadd.xlane.f32.xlu0 %v3275
        %v3277 = vpop.xlane.xlu0 %3276
        %v3278 = vadd.f32 %v2800, %v2802
        %3279 = vadd.xlane.f32.xlu0 %v3278
        %v3280 = vpop.xlane.xlu0 %3279
        %v3281 = vadd.f32 %v2804, %v2806
        %3282 = vadd.xlane.f32.xlu0 %v3281
        %v3283 = vpop.xlane.xlu0 %3282
        %v3284 = vadd.f32 %v2808, %v2810
        %3285 = vadd.xlane.f32.xlu0 %v3284
        %v3286 = vpop.xlane.xlu0 %3285
        %v3287 = vadd.f32 %v2812, %v2814
        %3288 = vadd.xlane.f32.xlu0 %v3287
        %v3289 = vpop.xlane.xlu0 %3288
        %v3290 = vadd.f32 %v2816, %v2818
        %3291 = vadd.xlane.f32.xlu0 %v3290
        %v3292 = vpop.xlane.xlu0 %3291
        %v3293 = vadd.f32 %v2820, %v2822
        %3294 = vadd.xlane.f32.xlu0 %v3293
        %v3295 = vpop.xlane.xlu0 %3294
        %v3296 = vadd.f32 %v2824, %v2826
        %3297 = vadd.xlane.f32.xlu0 %v3296
        %v3298 = vpop.xlane.xlu0 %3297
        %v3299 = vadd.f32 %v2828, %v2830
        %3300 = vadd.xlane.f32.xlu0 %v3299
        %v3301 = vpop.xlane.xlu0 %3300
        %v3302 = vadd.f32 %v2832, %v2834
        %3303 = vadd.xlane.f32.xlu0 %v3302
        %v3304 = vpop.xlane.xlu0 %3303
        %v3305 = vadd.f32 %v2836, %v2838
        %3306 = vadd.xlane.f32.xlu0 %v3305
        %v3307 = vpop.xlane.xlu0 %3306
        %v3308 = vadd.f32 %v2840, %v2842
        %3309 = vadd.xlane.f32.xlu0 %v3308
        %v3310 = vpop.xlane.xlu0 %3309
        %v3311 = vadd.f32 %v2844, %v2846
        %3312 = vadd.xlane.f32.xlu0 %v3311
        %v3313 = vpop.xlane.xlu0 %3312
        %v3314 = vadd.f32 %v2848, %v2850
        %3315 = vadd.xlane.f32.xlu0 %v3314
        %v3316 = vpop.xlane.xlu0 %3315
        %v3317 = vadd.f32 %v2852, %v2854
        %3318 = vadd.xlane.f32.xlu0 %v3317
        %v3319 = vpop.xlane.xlu0 %3318
        %v3320 = vadd.f32 %v2856, %v2858
        %3321 = vadd.xlane.f32.xlu0 %v3320
        %v3322 = vpop.xlane.xlu0 %3321
        %v3323 = vadd.f32 %v2860, %v2862
        %3324 = vadd.xlane.f32.xlu0 %v3323
        %v3325 = vpop.xlane.xlu0 %3324
        %v3326 = vadd.f32 %v2864, %v2866
        %3327 = vadd.xlane.f32.xlu0 %v3326
        %v3328 = vpop.xlane.xlu0 %3327
        %v3329 = vadd.f32 %v2868, %v2870
        %3330 = vadd.xlane.f32.xlu0 %v3329
        %v3331 = vpop.xlane.xlu0 %3330
        %v3332 = vadd.f32 %v2872, %v2874
        %3333 = vadd.xlane.f32.xlu0 %v3332
        %v3334 = vpop.xlane.xlu0 %3333
        %v3335 = vadd.f32 %v2876, %v2878
        %3336 = vadd.xlane.f32.xlu0 %v3335
        %v3337 = vpop.xlane.xlu0 %3336
        %v3338 = vadd.f32 %v2880, %v2882
        %3339 = vadd.xlane.f32.xlu0 %v3338
        %v3340 = vpop.xlane.xlu0 %3339
        %v3341 = vadd.f32 %v2884, %v2886
        %3342 = vadd.xlane.f32.xlu0 %v3341
        %v3343 = vpop.xlane.xlu0 %3342
        %v3344 = vadd.f32 %v2888, %v2890
        %3345 = vadd.xlane.f32.xlu0 %v3344
        %v3346 = vpop.xlane.xlu0 %3345
        %v3347 = vadd.f32 %v2892, %v2894
        %3348 = vadd.xlane.f32.xlu0 %v3347
        %v3349 = vpop.xlane.xlu0 %3348
        %v3350 = vadd.f32 %v2896, %v2898
        %3351 = vadd.xlane.f32.xlu0 %v3350
        %v3352 = vpop.xlane.xlu0 %3351
        %v3353 = vadd.f32 %v2900, %v2902
        %3354 = vadd.xlane.f32.xlu0 %v3353
        %v3355 = vpop.xlane.xlu0 %3354
        %v3356 = vadd.f32 %v2904, %v2906
        %3357 = vadd.xlane.f32.xlu0 %v3356
        %v3358 = vpop.xlane.xlu0 %3357
        %v3359 = vadd.f32 %v2908, %v2910
        %3360 = vadd.xlane.f32.xlu0 %v3359
        %v3361 = vpop.xlane.xlu0 %3360
        %v3362 = vadd.f32 %v2912, %v2914
        %3363 = vadd.xlane.f32.xlu0 %v3362
        %v3364 = vpop.xlane.xlu0 %3363
        %v3365 = vadd.f32 %v2916, %v2918
        %3366 = vadd.xlane.f32.xlu0 %v3365
        %v3367 = vpop.xlane.xlu0 %3366
        %v3368 = vadd.f32 %v2920, %v2922
        %3369 = vadd.xlane.f32.xlu0 %v3368
        %v3370 = vpop.xlane.xlu0 %3369
        %v3371 = vadd.f32 %v2924, %v2926
        %3372 = vadd.xlane.f32.xlu0 %v3371
        %v3373 = vpop.xlane.xlu0 %3372
        %v3374 = vadd.f32 %v2928, %v2930
        %3375 = vadd.xlane.f32.xlu0 %v3374
        %v3376 = vpop.xlane.xlu0 %3375
        %v3377 = vadd.f32 %v2932, %v2934
        %3378 = vadd.xlane.f32.xlu0 %v3377
        %v3379 = vpop.xlane.xlu0 %3378
        %v3380 = vadd.f32 %v2936, %v2938
        %3381 = vadd.xlane.f32.xlu0 %v3380
        %v3382 = vpop.xlane.xlu0 %3381
        %v3383 = vadd.f32 %v2940, %v2942
        %3384 = vadd.xlane.f32.xlu0 %v3383
        %v3385 = vpop.xlane.xlu0 %3384
        %v3386 = vadd.f32 %v2944, %v2946
        %3387 = vadd.xlane.f32.xlu0 %v3386
        %v3388 = vpop.xlane.xlu0 %3387
        %v3389 = vadd.f32 %v2948, %v2950
        %3390 = vadd.xlane.f32.xlu0 %v3389
        %v3391 = vpop.xlane.xlu0 %3390
        %v3392 = vadd.f32 %v2952, %v2954
        %3393 = vadd.xlane.f32.xlu0 %v3392
        %v3394 = vpop.xlane.xlu0 %3393
        %v3395 = vadd.f32 %v2956, %v2958
        %3396 = vadd.xlane.f32.xlu0 %v3395
        %v3397 = vpop.xlane.xlu0 %3396
        %v3398 = vadd.f32 %v2960, %v2962
        %3399 = vadd.xlane.f32.xlu0 %v3398
        %v3400 = vpop.xlane.xlu0 %3399
        %v3401 = vadd.f32 %v2964, %v2966
        %3402 = vadd.xlane.f32.xlu0 %v3401
        %v3403 = vpop.xlane.xlu0 %3402
        %v3404 = vadd.f32 %v2968, %v2970
        %3405 = vadd.xlane.f32.xlu0 %v3404
        %v3406 = vpop.xlane.xlu0 %3405
        %v3407 = vadd.f32 %v2972, %v2974
        %3408 = vadd.xlane.f32.xlu0 %v3407
        %v3409 = vpop.xlane.xlu0 %3408
        %v3410 = vadd.f32 %v2976, %v2978
        %3411 = vadd.xlane.f32.xlu0 %v3410
        %v3412 = vpop.xlane.xlu0 %3411
        %v3413 = vadd.f32 %v2980, %v2982
        %3414 = vadd.xlane.f32.xlu0 %v3413
        %v3415 = vpop.xlane.xlu0 %3414
        %v3416 = vadd.f32 %v2984, %v2986
        %3417 = vadd.xlane.f32.xlu0 %v3416
        %v3418 = vpop.xlane.xlu0 %3417
        %v3419 = vadd.f32 %v2988, %v2990
        %3420 = vadd.xlane.f32.xlu0 %v3419
        %v3421 = vpop.xlane.xlu0 %3420
        %v3422 = vadd.f32 %v2992, %v2994
        %3423 = vadd.xlane.f32.xlu0 %v3422
        %v3424 = vpop.xlane.xlu0 %3423
        %v3425 = vadd.f32 %v2996, %v2998
        %3426 = vadd.xlane.f32.xlu0 %v3425
        %v3427 = vpop.xlane.xlu0 %3426
        %v3428 = vadd.f32 %v3000, %v3002
        %3429 = vadd.xlane.f32.xlu0 %v3428
        %v3430 = vpop.xlane.xlu0 %3429
        %v3431 = vadd.f32 %v3004, %v3006
        %3432 = vadd.xlane.f32.xlu0 %v3431
        %v3433 = vpop.xlane.xlu0 %3432
        %v3434 = vadd.f32 %v3008, %v3010
        %3435 = vadd.xlane.f32.xlu0 %v3434
        %v3436 = vpop.xlane.xlu0 %3435
        %v3437 = vadd.f32 %v3012, %v3014
        %3438 = vadd.xlane.f32.xlu0 %v3437
        %v3439 = vpop.xlane.xlu0 %3438
        %v3440 = vadd.f32 %v3016, %v3018
        %3441 = vadd.xlane.f32.xlu0 %v3440
        %v3442 = vpop.xlane.xlu0 %3441
        %v3443 = vadd.f32 %v3020, %v3022
        %3444 = vadd.xlane.f32.xlu0 %v3443
        %v3445 = vpop.xlane.xlu0 %3444
        %v3446 = vadd.f32 %v3024, %v3026
        %3447 = vadd.xlane.f32.xlu0 %v3446
        %v3448 = vpop.xlane.xlu0 %3447
        %v3449 = vadd.f32 %v3028, %v3030
        %3450 = vadd.xlane.f32.xlu0 %v3449
        %v3451 = vpop.xlane.xlu0 %3450
        %v3452 = vadd.f32 %v3032, %v3034
        %3453 = vadd.xlane.f32.xlu0 %v3452
        %v3454 = vpop.xlane.xlu0 %3453
        %v3455 = vadd.f32 %v3036, %v3038
        %3456 = vadd.xlane.f32.xlu0 %v3455
        %v3457 = vpop.xlane.xlu0 %3456
        %v3458 = vadd.f32 %v3040, %v3042
        %3459 = vadd.xlane.f32.xlu0 %v3458
        %v3460 = vpop.xlane.xlu0 %3459
        %v3461 = vadd.f32 %v3044, %v3046
        %3462 = vadd.xlane.f32.xlu0 %v3461
        %v3463 = vpop.xlane.xlu0 %3462
        %v3464 = vadd.f32 %v3048, %v3050
        %3465 = vadd.xlane.f32.xlu0 %v3464
        %v3466 = vpop.xlane.xlu0 %3465
        %v3467 = vadd.f32 %v3052, %v3054
        %3468 = vadd.xlane.f32.xlu0 %v3467
        %v3469 = vpop.xlane.xlu0 %3468
        %v3470 = vadd.f32 %v3056, %v3058
        %3471 = vadd.xlane.f32.xlu0 %v3470
        %v3472 = vpop.xlane.xlu0 %3471
        %v3473 = vadd.f32 %v3060, %v3062
        %3474 = vadd.xlane.f32.xlu0 %v3473
        %v3475 = vpop.xlane.xlu0 %3474
        %v3476 = vadd.f32 %v3064, %v3066
        %3477 = vadd.xlane.f32.xlu0 %v3476
        %v3478 = vpop.xlane.xlu0 %3477
        %v3479 = vadd.f32 %v3068, %v3070
        %3480 = vadd.xlane.f32.xlu0 %v3479
        %v3481 = vpop.xlane.xlu0 %3480
        %v3482 = vadd.f32 %v3072, %v3074
        %3483 = vadd.xlane.f32.xlu0 %v3482
        %v3484 = vpop.xlane.xlu0 %3483
        %v3485 = vadd.f32 %v3076, %v3078
        %3486 = vadd.xlane.f32.xlu0 %v3485
        %v3487 = vpop.xlane.xlu0 %3486
        %v3488 = vadd.f32 %v3080, %v3082
        %3489 = vadd.xlane.f32.xlu0 %v3488
        %v3490 = vpop.xlane.xlu0 %3489
        %v3491 = vadd.f32 %v3084, %v3086
        %3492 = vadd.xlane.f32.xlu0 %v3491
        %v3493 = vpop.xlane.xlu0 %3492
        %v3494 = vadd.f32 %v3088, %v3090
        %3495 = vadd.xlane.f32.xlu0 %v3494
        %v3496 = vpop.xlane.xlu0 %3495
        %v3497 = vadd.f32 %v3092, %v3094
        %3498 = vadd.xlane.f32.xlu0 %v3497
        %v3499 = vpop.xlane.xlu0 %3498
        %v3500 = vadd.f32 %v3096, %v3098
        %3501 = vadd.xlane.f32.xlu0 %v3500
        %v3502 = vpop.xlane.xlu0 %3501
        %v3503 = vadd.f32 %v3100, %v3102
        %3504 = vadd.xlane.f32.xlu0 %v3503
        %v3505 = vpop.xlane.xlu0 %3504
        %v3506 = vadd.f32 %v3104, %v3106
        %3507 = vadd.xlane.f32.xlu0 %v3506
        %v3508 = vpop.xlane.xlu0 %3507
        %v3509 = vadd.f32 %v3108, %v3110
        %3510 = vadd.xlane.f32.xlu0 %v3509
        %v3511 = vpop.xlane.xlu0 %3510
        %v3512 = vadd.f32 %v3112, %v3114
        %3513 = vadd.xlane.f32.xlu0 %v3512
        %v3514 = vpop.xlane.xlu0 %3513
        %v3515 = vadd.f32 %v3116, %v3118
        %3516 = vadd.xlane.f32.xlu0 %v3515
        %v3517 = vpop.xlane.xlu0 %3516
        %v3518 = vadd.f32 %v3120, %v3122
        %3519 = vadd.xlane.f32.xlu0 %v3518
        %v3520 = vpop.xlane.xlu0 %3519
        %v3521 = vadd.f32 %v3124, %v3126
        %3522 = vadd.xlane.f32.xlu0 %v3521
        %v3523 = vpop.xlane.xlu0 %3522
        %v3524 = vadd.f32 %v3128, %v3130
        %3525 = vadd.xlane.f32.xlu0 %v3524
        %v3526 = vpop.xlane.xlu0 %3525
        %v3527 = vadd.f32 %v3132, %v3134
        %3528 = vadd.xlane.f32.xlu0 %v3527
        %v3529 = vpop.xlane.xlu0 %3528
        %v3530 = vadd.f32 %v3136, %v3138
        %3531 = vadd.xlane.f32.xlu0 %v3530
        %v3532 = vpop.xlane.xlu0 %3531
        %v3533 = vadd.f32 %v3140, %v3142
        %3534 = vadd.xlane.f32.xlu0 %v3533
        %v3535 = vpop.xlane.xlu0 %3534
        %v3536 = vadd.f32 %v3144, %v3146
        %3537 = vadd.xlane.f32.xlu0 %v3536
        %v3538 = vpop.xlane.xlu0 %3537
        %v3539 = vadd.f32 %v3148, %v3150
        %3540 = vadd.xlane.f32.xlu0 %v3539
        %v3541 = vpop.xlane.xlu0 %3540
        %v3542 = vadd.f32 %v3152, %v3154
        %3543 = vadd.xlane.f32.xlu0 %v3542
        %v3544 = vpop.xlane.xlu0 %3543
        %v3545 = vadd.f32 %v3156, %v3158
        %3546 = vadd.xlane.f32.xlu0 %v3545
        %v3547 = vpop.xlane.xlu0 %3546
        %v3548 = vadd.f32 %v3160, %v3162
        %3549 = vadd.xlane.f32.xlu0 %v3548
        %v3550 = vpop.xlane.xlu0 %3549
        %v3551 = vadd.f32 %v3164, %v3166
        %3552 = vadd.xlane.f32.xlu0 %v3551
        %v3553 = vpop.xlane.xlu0 %3552
        %v3554 = vadd.f32 %v3168, %v3170
        %3555 = vadd.xlane.f32.xlu0 %v3554
        %v3556 = vpop.xlane.xlu0 %3555
        %v3557 = vadd.f32 %v3172, %v3174
        %3558 = vadd.xlane.f32.xlu0 %v3557
        %v3559 = vpop.xlane.xlu0 %3558
        %v3560 = vadd.f32 %v3176, %v3178
        %3561 = vadd.xlane.f32.xlu0 %v3560
        %v3562 = vpop.xlane.xlu0 %3561
        %v3563 = vrcp.pop %v3181
        %v3564 = vrcp.pop %v3184
        %v3565 = vrcp.pop %v3187
        %v3566 = vrcp.pop %v3190
        %v3567 = vrcp.pop %v3193
        %v3568 = vrcp.pop %v3196
        %v3569 = vrcp.pop %v3199
        %v3570 = vrcp.pop %v3202
        %v3571 = vrcp.pop %v3205
        %v3572 = vrcp.pop %v3208
        %v3573 = vrcp.pop %v3211
        %v3574 = vrcp.pop %v3214
        %v3575 = vrcp.pop %v3217
        %v3576 = vrcp.pop %v3220
        %v3577 = vrcp.pop %v3223
        %v3578 = vrcp.pop %v3226
        %v3579 = vrcp.pop %v3229
        %v3580 = vrcp.pop %v3232
        %v3581 = vrcp.pop %v3235
        %v3582 = vrcp.pop %v3238
        %v3583 = vrcp.pop %v3241
        %v3584 = vrcp.pop %v3244
        %v3585 = vrcp.pop %v3247
        %v3586 = vrcp.pop %v3250
        %v3587 = vrcp.pop %v3253
        %v3588 = vrcp.pop %v3256
        %v3589 = vrcp.pop %v3259
        %v3590 = vrcp.pop %v3262
        %v3591 = vrcp.pop %v3265
        %v3592 = vrcp.pop %v3268
        %v3593 = vrcp.pop %v3271
        %v3594 = vrcp.pop %v3274
        %v3595 = vrcp.pop %v3277
        %v3596 = vrcp.pop %v3280
        %v3597 = vrcp.pop %v3283
        %v3598 = vrcp.pop %v3286
        %v3599 = vrcp.pop %v3289
        %v3600 = vrcp.pop %v3292
        %v3601 = vrcp.pop %v3295
        %v3602 = vrcp.pop %v3298
        %v3603 = vrcp.pop %v3301
        %v3604 = vrcp.pop %v3304
        %v3605 = vrcp.pop %v3307
        %v3606 = vrcp.pop %v3310
        %v3607 = vrcp.pop %v3313
        %v3608 = vrcp.pop %v3316
        %v3609 = vrcp.pop %v3319
        %v3610 = vrcp.pop %v3322
        %v3611 = vrcp.pop %v3325
        %v3612 = vrcp.pop %v3328
        %v3613 = vrcp.pop %v3331
        %v3614 = vrcp.pop %v3334
        %v3615 = vrcp.pop %v3337
        %v3616 = vrcp.pop %v3340
        %v3617 = vrcp.pop %v3343
        %v3618 = vrcp.pop %v3346
        %v3619 = vrcp.pop %v3349
        %v3620 = vrcp.pop %v3352
        %v3621 = vrcp.pop %v3355
        %v3622 = vrcp.pop %v3358
        %v3623 = vrcp.pop %v3361
        %v3624 = vrcp.pop %v3364
        %v3625 = vrcp.pop %v3367
        %v3626 = vrcp.pop %v3370
        %v3627 = vrcp.pop %v3373
        %v3628 = vrcp.pop %v3376
        %v3629 = vrcp.pop %v3379
        %v3630 = vrcp.pop %v3382
        %v3631 = vrcp.pop %v3385
        %v3632 = vrcp.pop %v3388
        %v3633 = vrcp.pop %v3391
        %v3634 = vrcp.pop %v3394
        %v3635 = vrcp.pop %v3397
        %v3636 = vrcp.pop %v3400
        %v3637 = vrcp.pop %v3403
        %v3638 = vrcp.pop %v3406
        %v3639 = vrcp.pop %v3409
        %v3640 = vrcp.pop %v3412
        %v3641 = vrcp.pop %v3415
        %v3642 = vrcp.pop %v3418
        %v3643 = vrcp.pop %v3421
        %v3644 = vrcp.pop %v3424
        %v3645 = vrcp.pop %v3427
        %v3646 = vrcp.pop %v3430
        %v3647 = vrcp.pop %v3433
        %v3648 = vrcp.pop %v3436
        %v3649 = vrcp.pop %v3439
        %v3650 = vrcp.pop %v3442
        %v3651 = vrcp.pop %v3445
        %v3652 = vrcp.pop %v3448
        %v3653 = vrcp.pop %v3451
        %v3654 = vrcp.pop %v3454
        %v3655 = vrcp.pop %v3457
        %v3656 = vrcp.pop %v3460
        %v3657 = vrcp.pop %v3463
        %v3658 = vrcp.pop %v3466
        %v3659 = vrcp.pop %v3469
        %v3660 = vrcp.pop %v3472
        %v3661 = vrcp.pop %v3475
        %v3662 = vrcp.pop %v3478
        %v3663 = vrcp.pop %v3481
        %v3664 = vrcp.pop %v3484
        %v3665 = vrcp.pop %v3487
        %v3666 = vrcp.pop %v3490
        %v3667 = vrcp.pop %v3493
        %v3668 = vrcp.pop %v3496
        %v3669 = vrcp.pop %v3499
        %v3670 = vrcp.pop %v3502
        %v3671 = vrcp.pop %v3505
        %v3672 = vrcp.pop %v3508
        %v3673 = vrcp.pop %v3511
        %v3674 = vrcp.pop %v3514
        %v3675 = vrcp.pop %v3517
        %v3676 = vrcp.pop %v3520
        %v3677 = vrcp.pop %v3523
        %v3678 = vrcp.pop %v3526
        %v3679 = vrcp.pop %v3529
        %v3680 = vrcp.pop %v3532
        %v3681 = vrcp.pop %v3535
        %v3682 = vrcp.pop %v3538
        %v3683 = vrcp.pop %v3541
        %v3684 = vrcp.pop %v3544
        %v3685 = vrcp.pop %v3547
        %v3686 = vrcp.pop %v3550
        %v3687 = vrcp.pop %v3553
        %v3688 = vrcp.pop %v3556
        %v3689 = vrcp.pop %v3559
        %v3690 = vrcp.pop %v3562
        %v3691 = vmul.f32 %v2668, %v3563
        %v3692 = vmul.f32 %v2670, %v3563
        %v3693 = vmul.f32 %v2672, %v3564
        %v3694 = vmul.f32 %v2674, %v3564
        %v3695 = vmul.f32 %v2676, %v3565
        %v3696 = vmul.f32 %v2678, %v3565
        %v3697 = vmul.f32 %v2680, %v3566
        %v3698 = vmul.f32 %v2682, %v3566
        %v3699 = vmul.f32 %v2684, %v3567
        %v3700 = vmul.f32 %v2686, %v3567
        %v3701 = vmul.f32 %v2688, %v3568
        %v3702 = vmul.f32 %v2690, %v3568
        %v3703 = vmul.f32 %v2692, %v3569
        %v3704 = vmul.f32 %v2694, %v3569
        %v3705 = vmul.f32 %v2696, %v3570
        %v3706 = vmul.f32 %v2698, %v3570
        %v3707 = vmul.f32 %v2700, %v3571
        %v3708 = vmul.f32 %v2702, %v3571
        %v3709 = vmul.f32 %v2704, %v3572
        %v3710 = vmul.f32 %v2706, %v3572
        %v3711 = vmul.f32 %v2708, %v3573
        %v3712 = vmul.f32 %v2710, %v3573
        %v3713 = vmul.f32 %v2712, %v3574
        %v3714 = vmul.f32 %v2714, %v3574
        %v3715 = vmul.f32 %v2716, %v3575
        %v3716 = vmul.f32 %v2718, %v3575
        %v3717 = vmul.f32 %v2720, %v3576
        %v3718 = vmul.f32 %v2722, %v3576
        %v3719 = vmul.f32 %v2724, %v3577
        %v3720 = vmul.f32 %v2726, %v3577
        %v3721 = vmul.f32 %v2728, %v3578
        %v3722 = vmul.f32 %v2730, %v3578
        %v3723 = vmul.f32 %v2732, %v3579
        %v3724 = vmul.f32 %v2734, %v3579
        %v3725 = vmul.f32 %v2736, %v3580
        %v3726 = vmul.f32 %v2738, %v3580
        %v3727 = vmul.f32 %v2740, %v3581
        %v3728 = vmul.f32 %v2742, %v3581
        %v3729 = vmul.f32 %v2744, %v3582
        %v3730 = vmul.f32 %v2746, %v3582
        %v3731 = vmul.f32 %v2748, %v3583
        %v3732 = vmul.f32 %v2750, %v3583
        %v3733 = vmul.f32 %v2752, %v3584
        %v3734 = vmul.f32 %v2754, %v3584
        %v3735 = vmul.f32 %v2756, %v3585
        %v3736 = vmul.f32 %v2758, %v3585
        %v3737 = vmul.f32 %v2760, %v3586
        %v3738 = vmul.f32 %v2762, %v3586
        %v3739 = vmul.f32 %v2764, %v3587
        %v3740 = vmul.f32 %v2766, %v3587
        %v3741 = vmul.f32 %v2768, %v3588
        %v3742 = vmul.f32 %v2770, %v3588
        %v3743 = vmul.f32 %v2772, %v3589
        %v3744 = vmul.f32 %v2774, %v3589
        %v3745 = vmul.f32 %v2776, %v3590
        %v3746 = vmul.f32 %v2778, %v3590
        %v3747 = vmul.f32 %v2780, %v3591
        %v3748 = vmul.f32 %v2782, %v3591
        %v3749 = vmul.f32 %v2784, %v3592
        %v3750 = vmul.f32 %v2786, %v3592
        %v3751 = vmul.f32 %v2788, %v3593
        %v3752 = vmul.f32 %v2790, %v3593
        %v3753 = vmul.f32 %v2792, %v3594
        %v3754 = vmul.f32 %v2794, %v3594
        %v3755 = vmul.f32 %v2796, %v3595
        %v3756 = vmul.f32 %v2798, %v3595
        %v3757 = vmul.f32 %v2800, %v3596
        %v3758 = vmul.f32 %v2802, %v3596
        %v3759 = vmul.f32 %v2804, %v3597
        %v3760 = vmul.f32 %v2806, %v3597
        %v3761 = vmul.f32 %v2808, %v3598
        %v3762 = vmul.f32 %v2810, %v3598
        %v3763 = vmul.f32 %v2812, %v3599
        %v3764 = vmul.f32 %v2814, %v3599
        %v3765 = vmul.f32 %v2816, %v3600
        %v3766 = vmul.f32 %v2818, %v3600
        %v3767 = vmul.f32 %v2820, %v3601
        %v3768 = vmul.f32 %v2822, %v3601
        %v3769 = vmul.f32 %v2824, %v3602
        %v3770 = vmul.f32 %v2826, %v3602
        %v3771 = vmul.f32 %v2828, %v3603
        %v3772 = vmul.f32 %v2830, %v3603
        %v3773 = vmul.f32 %v2832, %v3604
        %v3774 = vmul.f32 %v2834, %v3604
        %v3775 = vmul.f32 %v2836, %v3605
        %v3776 = vmul.f32 %v2838, %v3605
        %v3777 = vmul.f32 %v2840, %v3606
        %v3778 = vmul.f32 %v2842, %v3606
        %v3779 = vmul.f32 %v2844, %v3607
        %v3780 = vmul.f32 %v2846, %v3607
        %v3781 = vmul.f32 %v2848, %v3608
        %v3782 = vmul.f32 %v2850, %v3608
        %v3783 = vmul.f32 %v2852, %v3609
        %v3784 = vmul.f32 %v2854, %v3609
        %v3785 = vmul.f32 %v2856, %v3610
        %v3786 = vmul.f32 %v2858, %v3610
        %v3787 = vmul.f32 %v2860, %v3611
        %v3788 = vmul.f32 %v2862, %v3611
        %v3789 = vmul.f32 %v2864, %v3612
        %v3790 = vmul.f32 %v2866, %v3612
        %v3791 = vmul.f32 %v2868, %v3613
        %v3792 = vmul.f32 %v2870, %v3613
        %v3793 = vmul.f32 %v2872, %v3614
        %v3794 = vmul.f32 %v2874, %v3614
        %v3795 = vmul.f32 %v2876, %v3615
        %v3796 = vmul.f32 %v2878, %v3615
        %v3797 = vmul.f32 %v2880, %v3616
        %v3798 = vmul.f32 %v2882, %v3616
        %v3799 = vmul.f32 %v2884, %v3617
        %v3800 = vmul.f32 %v2886, %v3617
        %v3801 = vmul.f32 %v2888, %v3618
        %v3802 = vmul.f32 %v2890, %v3618
        %v3803 = vmul.f32 %v2892, %v3619
        %v3804 = vmul.f32 %v2894, %v3619
        %v3805 = vmul.f32 %v2896, %v3620
        %v3806 = vmul.f32 %v2898, %v3620
        %v3807 = vmul.f32 %v2900, %v3621
        %v3808 = vmul.f32 %v2902, %v3621
        %v3809 = vmul.f32 %v2904, %v3622
        %v3810 = vmul.f32 %v2906, %v3622
        %v3811 = vmul.f32 %v2908, %v3623
        %v3812 = vmul.f32 %v2910, %v3623
        %v3813 = vmul.f32 %v2912, %v3624
        %v3814 = vmul.f32 %v2914, %v3624
        %v3815 = vmul.f32 %v2916, %v3625
        %v3816 = vmul.f32 %v2918, %v3625
        %v3817 = vmul.f32 %v2920, %v3626
        %v3818 = vmul.f32 %v2922, %v3626
        %v3819 = vmul.f32 %v2924, %v3627
        %v3820 = vmul.f32 %v2926, %v3627
        %v3821 = vmul.f32 %v2928, %v3628
        %v3822 = vmul.f32 %v2930, %v3628
        %v3823 = vmul.f32 %v2932, %v3629
        %v3824 = vmul.f32 %v2934, %v3629
        %v3825 = vmul.f32 %v2936, %v3630
        %v3826 = vmul.f32 %v2938, %v3630
        %v3827 = vmul.f32 %v2940, %v3631
        %v3828 = vmul.f32 %v2942, %v3631
        %v3829 = vmul.f32 %v2944, %v3632
        %v3830 = vmul.f32 %v2946, %v3632
        %v3831 = vmul.f32 %v2948, %v3633
        %v3832 = vmul.f32 %v2950, %v3633
        %v3833 = vmul.f32 %v2952, %v3634
        %v3834 = vmul.f32 %v2954, %v3634
        %v3835 = vmul.f32 %v2956, %v3635
        %v3836 = vmul.f32 %v2958, %v3635
        %v3837 = vmul.f32 %v2960, %v3636
        %v3838 = vmul.f32 %v2962, %v3636
        %v3839 = vmul.f32 %v2964, %v3637
        %v3840 = vmul.f32 %v2966, %v3637
        %v3841 = vmul.f32 %v2968, %v3638
        %v3842 = vmul.f32 %v2970, %v3638
        %v3843 = vmul.f32 %v2972, %v3639
        %v3844 = vmul.f32 %v2974, %v3639
        %v3845 = vmul.f32 %v2976, %v3640
        %v3846 = vmul.f32 %v2978, %v3640
        %v3847 = vmul.f32 %v2980, %v3641
        %v3848 = vmul.f32 %v2982, %v3641
        %v3849 = vmul.f32 %v2984, %v3642
        %v3850 = vmul.f32 %v2986, %v3642
        %v3851 = vmul.f32 %v2988, %v3643
        %v3852 = vmul.f32 %v2990, %v3643
        %v3853 = vmul.f32 %v2992, %v3644
        %v3854 = vmul.f32 %v2994, %v3644
        %v3855 = vmul.f32 %v2996, %v3645
        %v3856 = vmul.f32 %v2998, %v3645
        %v3857 = vmul.f32 %v3000, %v3646
        %v3858 = vmul.f32 %v3002, %v3646
        %v3859 = vmul.f32 %v3004, %v3647
        %v3860 = vmul.f32 %v3006, %v3647
        %v3861 = vmul.f32 %v3008, %v3648
        %v3862 = vmul.f32 %v3010, %v3648
        %v3863 = vmul.f32 %v3012, %v3649
        %v3864 = vmul.f32 %v3014, %v3649
        %v3865 = vmul.f32 %v3016, %v3650
        %v3866 = vmul.f32 %v3018, %v3650
        %v3867 = vmul.f32 %v3020, %v3651
        %v3868 = vmul.f32 %v3022, %v3651
        %v3869 = vmul.f32 %v3024, %v3652
        %v3870 = vmul.f32 %v3026, %v3652
        %v3871 = vmul.f32 %v3028, %v3653
        %v3872 = vmul.f32 %v3030, %v3653
        %v3873 = vmul.f32 %v3032, %v3654
        %v3874 = vmul.f32 %v3034, %v3654
        %v3875 = vmul.f32 %v3036, %v3655
        %v3876 = vmul.f32 %v3038, %v3655
        %v3877 = vmul.f32 %v3040, %v3656
        %v3878 = vmul.f32 %v3042, %v3656
        %v3879 = vmul.f32 %v3044, %v3657
        %v3880 = vmul.f32 %v3046, %v3657
        %v3881 = vmul.f32 %v3048, %v3658
        %v3882 = vmul.f32 %v3050, %v3658
        %v3883 = vmul.f32 %v3052, %v3659
        %v3884 = vmul.f32 %v3054, %v3659
        %v3885 = vmul.f32 %v3056, %v3660
        %v3886 = vmul.f32 %v3058, %v3660
        %v3887 = vmul.f32 %v3060, %v3661
        %v3888 = vmul.f32 %v3062, %v3661
        %v3889 = vmul.f32 %v3064, %v3662
        %v3890 = vmul.f32 %v3066, %v3662
        %v3891 = vmul.f32 %v3068, %v3663
        %v3892 = vmul.f32 %v3070, %v3663
        %v3893 = vmul.f32 %v3072, %v3664
        %v3894 = vmul.f32 %v3074, %v3664
        %v3895 = vmul.f32 %v3076, %v3665
        %v3896 = vmul.f32 %v3078, %v3665
        %v3897 = vmul.f32 %v3080, %v3666
        %v3898 = vmul.f32 %v3082, %v3666
        %v3899 = vmul.f32 %v3084, %v3667
        %v3900 = vmul.f32 %v3086, %v3667
        %v3901 = vmul.f32 %v3088, %v3668
        %v3902 = vmul.f32 %v3090, %v3668
        %v3903 = vmul.f32 %v3092, %v3669
        %v3904 = vmul.f32 %v3094, %v3669
        %v3905 = vmul.f32 %v3096, %v3670
        %v3906 = vmul.f32 %v3098, %v3670
        %v3907 = vmul.f32 %v3100, %v3671
        %v3908 = vmul.f32 %v3102, %v3671
        %v3909 = vmul.f32 %v3104, %v3672
        %v3910 = vmul.f32 %v3106, %v3672
        %v3911 = vmul.f32 %v3108, %v3673
        %v3912 = vmul.f32 %v3110, %v3673
        %v3913 = vmul.f32 %v3112, %v3674
        %v3914 = vmul.f32 %v3114, %v3674
        %v3915 = vmul.f32 %v3116, %v3675
        %v3916 = vmul.f32 %v3118, %v3675
        %v3917 = vmul.f32 %v3120, %v3676
        %v3918 = vmul.f32 %v3122, %v3676
        %v3919 = vmul.f32 %v3124, %v3677
        %v3920 = vmul.f32 %v3126, %v3677
        %v3921 = vmul.f32 %v3128, %v3678
        %v3922 = vmul.f32 %v3130, %v3678
        %v3923 = vmul.f32 %v3132, %v3679
        %v3924 = vmul.f32 %v3134, %v3679
        %v3925 = vmul.f32 %v3136, %v3680
        %v3926 = vmul.f32 %v3138, %v3680
        %v3927 = vmul.f32 %v3140, %v3681
        %v3928 = vmul.f32 %v3142, %v3681
        %v3929 = vmul.f32 %v3144, %v3682
        %v3930 = vmul.f32 %v3146, %v3682
        %v3931 = vmul.f32 %v3148, %v3683
        %v3932 = vmul.f32 %v3150, %v3683
        %v3933 = vmul.f32 %v3152, %v3684
        %v3934 = vmul.f32 %v3154, %v3684
        %v3935 = vmul.f32 %v3156, %v3685
        %v3936 = vmul.f32 %v3158, %v3685
        %v3937 = vmul.f32 %v3160, %v3686
        %v3938 = vmul.f32 %v3162, %v3686
        %v3939 = vmul.f32 %v3164, %v3687
        %v3940 = vmul.f32 %v3166, %v3687
        %v3941 = vmul.f32 %v3168, %v3688
        %v3942 = vmul.f32 %v3170, %v3688
        %v3943 = vmul.f32 %v3172, %v3689
        %v3944 = vmul.f32 %v3174, %v3689
        %v3945 = vmul.f32 %v3176, %v3690
        %v3946 = vmul.f32 %v3178, %v3690
        %v3947 = vpack.c.bf16 %v691, %v691
        %v3948 = vpack.c.bf16 %v693, %v693
        %v3949 = vpack.c.bf16 %v695, %v695
        %v3950 = vpack.c.bf16 %v697, %v697
        %v3951 = vpack.c.bf16 %v701, %v701
        %v3952 = vpack.c.bf16 %v703, %v703
        %v3953 = vpack.c.bf16 %v705, %v705
        %v3954 = vpack.c.bf16 %v707, %v707
        %v3955 = vpack.c.bf16 %v3693, %v3691
        %v3956 = vpack.c.bf16 %v3694, %v3692
        %v3957 = vpack.c.bf16 %v3697, %v3695
        %v3958 = vpack.c.bf16 %v3698, %v3696
        %v3959 = vpack.c.bf16 %v3701, %v3699
        %v3960 = vpack.c.bf16 %v3702, %v3700
        %v3961 = vpack.c.bf16 %v3705, %v3703
        %v3962 = vpack.c.bf16 %v3706, %v3704
        %v3963 = vpack.c.bf16 %v3709, %v3707
        %v3964 = vpack.c.bf16 %v3710, %v3708
        %v3965 = vpack.c.bf16 %v3713, %v3711
        %v3966 = vpack.c.bf16 %v3714, %v3712
        %v3967 = vpack.c.bf16 %v3717, %v3715
        %v3968 = vpack.c.bf16 %v3718, %v3716
        %v3969 = vpack.c.bf16 %v3721, %v3719
        %v3970 = vpack.c.bf16 %v3722, %v3720
        %v3971 = vpack.c.bf16 %v3725, %v3723
        %v3972 = vpack.c.bf16 %v3726, %v3724
        %v3973 = vpack.c.bf16 %v3729, %v3727
        %v3974 = vpack.c.bf16 %v3730, %v3728
        %v3975 = vpack.c.bf16 %v3733, %v3731
        %v3976 = vpack.c.bf16 %v3734, %v3732
        %v3977 = vpack.c.bf16 %v3737, %v3735
        %v3978 = vpack.c.bf16 %v3738, %v3736
        %v3979 = vpack.c.bf16 %v3741, %v3739
        %v3980 = vpack.c.bf16 %v3742, %v3740
        %v3981 = vpack.c.bf16 %v3745, %v3743
        %v3982 = vpack.c.bf16 %v3746, %v3744
        %v3983 = vpack.c.bf16 %v3749, %v3747
        %v3984 = vpack.c.bf16 %v3750, %v3748
        %v3985 = vpack.c.bf16 %v3753, %v3751
        %v3986 = vpack.c.bf16 %v3754, %v3752
        %v3987 = vpack.c.bf16 %v3757, %v3755
        %v3988 = vpack.c.bf16 %v3758, %v3756
        %v3989 = vpack.c.bf16 %v3761, %v3759
        %v3990 = vpack.c.bf16 %v3762, %v3760
        %v3991 = vpack.c.bf16 %v3765, %v3763
        %v3992 = vpack.c.bf16 %v3766, %v3764
        %v3993 = vpack.c.bf16 %v3769, %v3767
        %v3994 = vpack.c.bf16 %v3770, %v3768
        %v3995 = vpack.c.bf16 %v3773, %v3771
        %v3996 = vpack.c.bf16 %v3774, %v3772
        %v3997 = vpack.c.bf16 %v3777, %v3775
        %v3998 = vpack.c.bf16 %v3778, %v3776
        %v3999 = vpack.c.bf16 %v3781, %v3779
        %v4000 = vpack.c.bf16 %v3782, %v3780
        %v4001 = vpack.c.bf16 %v3785, %v3783
        %v4002 = vpack.c.bf16 %v3786, %v3784
        %v4003 = vpack.c.bf16 %v3789, %v3787
        %v4004 = vpack.c.bf16 %v3790, %v3788
        %v4005 = vpack.c.bf16 %v3793, %v3791
        %v4006 = vpack.c.bf16 %v3794, %v3792
        %v4007 = vpack.c.bf16 %v3797, %v3795
        %v4008 = vpack.c.bf16 %v3798, %v3796
        %v4009 = vpack.c.bf16 %v3801, %v3799
        %v4010 = vpack.c.bf16 %v3802, %v3800
        %v4011 = vpack.c.bf16 %v3805, %v3803
        %v4012 = vpack.c.bf16 %v3806, %v3804
        %v4013 = vpack.c.bf16 %v3809, %v3807
        %v4014 = vpack.c.bf16 %v3810, %v3808
        %v4015 = vpack.c.bf16 %v3813, %v3811
        %v4016 = vpack.c.bf16 %v3814, %v3812
        %v4017 = vpack.c.bf16 %v3817, %v3815
        %v4018 = vpack.c.bf16 %v3818, %v3816
        %v4019 = vpack.c.bf16 %v3821, %v3819
        %v4020 = vpack.c.bf16 %v3822, %v3820
        %v4021 = vpack.c.bf16 %v3825, %v3823
        %v4022 = vpack.c.bf16 %v3826, %v3824
        %v4023 = vpack.c.bf16 %v3829, %v3827
        %v4024 = vpack.c.bf16 %v3830, %v3828
        %v4025 = vpack.c.bf16 %v3833, %v3831
        %v4026 = vpack.c.bf16 %v3834, %v3832
        %v4027 = vpack.c.bf16 %v3837, %v3835
        %v4028 = vpack.c.bf16 %v3838, %v3836
        %v4029 = vpack.c.bf16 %v3841, %v3839
        %v4030 = vpack.c.bf16 %v3842, %v3840
        %v4031 = vpack.c.bf16 %v3845, %v3843
        %v4032 = vpack.c.bf16 %v3846, %v3844
        %v4033 = vpack.c.bf16 %v3849, %v3847
        %v4034 = vpack.c.bf16 %v3850, %v3848
        %v4035 = vpack.c.bf16 %v3853, %v3851
        %v4036 = vpack.c.bf16 %v3854, %v3852
        %v4037 = vpack.c.bf16 %v3857, %v3855
        %v4038 = vpack.c.bf16 %v3858, %v3856
        %v4039 = vpack.c.bf16 %v3861, %v3859
        %v4040 = vpack.c.bf16 %v3862, %v3860
        %v4041 = vpack.c.bf16 %v3865, %v3863
        %v4042 = vpack.c.bf16 %v3866, %v3864
        %v4043 = vpack.c.bf16 %v3869, %v3867
        %v4044 = vpack.c.bf16 %v3870, %v3868
        %v4045 = vpack.c.bf16 %v3873, %v3871
        %v4046 = vpack.c.bf16 %v3874, %v3872
        %v4047 = vpack.c.bf16 %v3877, %v3875
        %v4048 = vpack.c.bf16 %v3878, %v3876
        %v4049 = vpack.c.bf16 %v3881, %v3879
        %v4050 = vpack.c.bf16 %v3882, %v3880
        %v4051 = vpack.c.bf16 %v3885, %v3883
        %v4052 = vpack.c.bf16 %v3886, %v3884
        %v4053 = vpack.c.bf16 %v3889, %v3887
        %v4054 = vpack.c.bf16 %v3890, %v3888
        %v4055 = vpack.c.bf16 %v3893, %v3891
        %v4056 = vpack.c.bf16 %v3894, %v3892
        %v4057 = vpack.c.bf16 %v3897, %v3895
        %v4058 = vpack.c.bf16 %v3898, %v3896
        %v4059 = vpack.c.bf16 %v3901, %v3899
        %v4060 = vpack.c.bf16 %v3902, %v3900
        %v4061 = vpack.c.bf16 %v3905, %v3903
        %v4062 = vpack.c.bf16 %v3906, %v3904
        %v4063 = vpack.c.bf16 %v3909, %v3907
        %v4064 = vpack.c.bf16 %v3910, %v3908
        %v4065 = vpack.c.bf16 %v3913, %v3911
        %v4066 = vpack.c.bf16 %v3914, %v3912
        %v4067 = vpack.c.bf16 %v3917, %v3915
        %v4068 = vpack.c.bf16 %v3918, %v3916
        %v4069 = vpack.c.bf16 %v3921, %v3919
        %v4070 = vpack.c.bf16 %v3922, %v3920
        %v4071 = vpack.c.bf16 %v3925, %v3923
        %v4072 = vpack.c.bf16 %v3926, %v3924
        %v4073 = vpack.c.bf16 %v3929, %v3927
        %v4074 = vpack.c.bf16 %v3930, %v3928
        %v4075 = vpack.c.bf16 %v3933, %v3931
        %v4076 = vpack.c.bf16 %v3934, %v3932
        %v4077 = vpack.c.bf16 %v3937, %v3935
        %v4078 = vpack.c.bf16 %v3938, %v3936
        %v4079 = vpack.c.bf16 %v3941, %v3939
        %v4080 = vpack.c.bf16 %v3942, %v3940
        %v4081 = vpack.c.bf16 %v3945, %v3943
        %v4082 = vpack.c.bf16 %v3946, %v3944
        %4083 = vmatprep.subr.bf16.mxu0 %v3956
        %4084 = vmatpush1.bf16.xpose.msra.mxu0 %v3955
        %4085 = vmatprep.subr.bf16.mxu0 %v3958
        %4086 = vmatpush1.bf16.xpose.msra.mxu0 %v3957
        %4087 = vmatprep.subr.bf16.mxu0 %v3960
        %4088 = vmatpush1.bf16.xpose.msra.mxu0 %v3959
        %4089 = vmatprep.subr.bf16.mxu0 %v3962
        %4090 = vmatpush1.bf16.xpose.msra.mxu0 %v3961
        %4091 = vmatprep.subr.bf16.mxu0 %v3964
        %4092 = vmatpush1.bf16.xpose.msra.mxu0 %v3963
        %4093 = vmatprep.subr.bf16.mxu0 %v3966
        %4094 = vmatpush1.bf16.xpose.msra.mxu0 %v3965
        %4095 = vmatprep.subr.bf16.mxu0 %v3968
        %4096 = vmatpush1.bf16.xpose.msra.mxu0 %v3967
        %4097 = vmatprep.subr.bf16.mxu0 %v3970
        %4098 = vmatpush1.bf16.xpose.msra.mxu0 %v3969
        %4099 = vmatprep.subr.bf16.mxu0 %v3972
        %4100 = vmatpush1.bf16.xpose.msra.mxu0 %v3971
        %4101 = vmatprep.subr.bf16.mxu0 %v3974
        %4102 = vmatpush1.bf16.xpose.msra.mxu0 %v3973
        %4103 = vmatprep.subr.bf16.mxu0 %v3976
        %4104 = vmatpush1.bf16.xpose.msra.mxu0 %v3975
        %4105 = vmatprep.subr.bf16.mxu0 %v3978
        %4106 = vmatpush1.bf16.xpose.msra.mxu0 %v3977
        %4107 = vmatprep.subr.bf16.mxu0 %v3980
        %4108 = vmatpush1.bf16.xpose.msra.mxu0 %v3979
        %4109 = vmatprep.subr.bf16.mxu0 %v3982
        %4110 = vmatpush1.bf16.xpose.msra.mxu0 %v3981
        %4111 = vmatprep.subr.bf16.mxu0 %v3984
        %4112 = vmatpush1.bf16.xpose.msra.mxu0 %v3983
        %4113 = vmatprep.subr.bf16.mxu0 %v3986
        %4114 = vmatpush1.bf16.xpose.msra.mxu0 %v3985
        %4115 = vmatprep.mubr.bf16.mxu0 %v3948
        %4116 = vmatmul.mubr.bf16.gmra.mrb[0].mxu0 %v3947
        %v4117 = vpop.f32.mrb[0].mxu0
        %v4118 = vadd.f32 0.0, %v4117
        %v4119 = vpop.f32.mrb[0].mxu0
        %v4120 = vadd.f32 0.0, %v4119
        %v4121 = vpop.f32.mrb[0].mxu0
        %v4122 = vpop.f32.mrb[0].mxu0
        %4123 = vdwg.mxu0
        %4124 = vmatprep.subr.bf16.mxu0 %v3988
        %4125 = vmatpush1.bf16.xpose.msra.mxu0 %v3987
        %4126 = vmatprep.subr.bf16.mxu0 %v3990
        %4127 = vmatpush1.bf16.xpose.msra.mxu0 %v3989
        %4128 = vmatprep.subr.bf16.mxu0 %v3992
        %4129 = vmatpush1.bf16.xpose.msra.mxu0 %v3991
        %4130 = vmatprep.subr.bf16.mxu0 %v3994
        %4131 = vmatpush1.bf16.xpose.msra.mxu0 %v3993
        %4132 = vmatprep.subr.bf16.mxu0 %v3996
        %4133 = vmatpush1.bf16.xpose.msra.mxu0 %v3995
        %4134 = vmatprep.subr.bf16.mxu0 %v3998
        %4135 = vmatpush1.bf16.xpose.msra.mxu0 %v3997
        %4136 = vmatprep.subr.bf16.mxu0 %v4000
        %4137 = vmatpush1.bf16.xpose.msra.mxu0 %v3999
        %4138 = vmatprep.subr.bf16.mxu0 %v4002
        %4139 = vmatpush1.bf16.xpose.msra.mxu0 %v4001
        %4140 = vmatprep.subr.bf16.mxu0 %v4004
        %4141 = vmatpush1.bf16.xpose.msra.mxu0 %v4003
        %4142 = vmatprep.subr.bf16.mxu0 %v4006
        %4143 = vmatpush1.bf16.xpose.msra.mxu0 %v4005
        %4144 = vmatprep.subr.bf16.mxu0 %v4008
        %4145 = vmatpush1.bf16.xpose.msra.mxu0 %v4007
        %4146 = vmatprep.subr.bf16.mxu0 %v4010
        %4147 = vmatpush1.bf16.xpose.msra.mxu0 %v4009
        %4148 = vmatprep.subr.bf16.mxu0 %v4012
        %4149 = vmatpush1.bf16.xpose.msra.mxu0 %v4011
        %4150 = vmatprep.subr.bf16.mxu0 %v4014
        %4151 = vmatpush1.bf16.xpose.msra.mxu0 %v4013
        %4152 = vmatprep.subr.bf16.mxu0 %v4016
        %4153 = vmatpush1.bf16.xpose.msra.mxu0 %v4015
        %4154 = vmatprep.subr.bf16.mxu0 %v4018
        %4155 = vmatpush1.bf16.xpose.msra.mxu0 %v4017
        %4156 = vmatprep.mubr.bf16.mxu0 %v3950
        %4157 = vmatmul.mubr.bf16.gmra.mrb[0].mxu0 %v3949
        %v4158 = vpop.f32.mrb[0].mxu0
        %v4159 = vadd.f32 0.0, %v4158
        %v4160 = vpop.f32.mrb[0].mxu0
        %v4161 = vadd.f32 0.0, %v4160
        %v4162 = vpop.f32.mrb[0].mxu0
        %v4163 = vpop.f32.mrb[0].mxu0
        %4164 = vdwg.mxu0
        %4165 = vmatprep.subr.bf16.mxu0 %v4020
        %4166 = vmatpush1.bf16.xpose.msra.mxu0 %v4019
        %4167 = vmatprep.subr.bf16.mxu0 %v4022
        %4168 = vmatpush1.bf16.xpose.msra.mxu0 %v4021
        %4169 = vmatprep.subr.bf16.mxu0 %v4024
        %4170 = vmatpush1.bf16.xpose.msra.mxu0 %v4023
        %4171 = vmatprep.subr.bf16.mxu0 %v4026
        %4172 = vmatpush1.bf16.xpose.msra.mxu0 %v4025
        %4173 = vmatprep.subr.bf16.mxu0 %v4028
        %4174 = vmatpush1.bf16.xpose.msra.mxu0 %v4027
        %4175 = vmatprep.subr.bf16.mxu0 %v4030
        %4176 = vmatpush1.bf16.xpose.msra.mxu0 %v4029
        %4177 = vmatprep.subr.bf16.mxu0 %v4032
        %4178 = vmatpush1.bf16.xpose.msra.mxu0 %v4031
        %4179 = vmatprep.subr.bf16.mxu0 %v4034
        %4180 = vmatpush1.bf16.xpose.msra.mxu0 %v4033
        %4181 = vmatprep.subr.bf16.mxu0 %v4036
        %4182 = vmatpush1.bf16.xpose.msra.mxu0 %v4035
        %4183 = vmatprep.subr.bf16.mxu0 %v4038
        %4184 = vmatpush1.bf16.xpose.msra.mxu0 %v4037
        %4185 = vmatprep.subr.bf16.mxu0 %v4040
        %4186 = vmatpush1.bf16.xpose.msra.mxu0 %v4039
        %4187 = vmatprep.subr.bf16.mxu0 %v4042
        %4188 = vmatpush1.bf16.xpose.msra.mxu0 %v4041
        %4189 = vmatprep.subr.bf16.mxu0 %v4044
        %4190 = vmatpush1.bf16.xpose.msra.mxu0 %v4043
        %4191 = vmatprep.subr.bf16.mxu0 %v4046
        %4192 = vmatpush1.bf16.xpose.msra.mxu0 %v4045
        %4193 = vmatprep.subr.bf16.mxu0 %v4048
        %4194 = vmatpush1.bf16.xpose.msra.mxu0 %v4047
        %4195 = vmatprep.subr.bf16.mxu0 %v4050
        %4196 = vmatpush1.bf16.xpose.msra.mxu0 %v4049
        %4197 = vmatprep.mubr.bf16.mxu0 %v3952
        %4198 = vmatmul.mubr.bf16.gmra.mrb[0].mxu0 %v3951
        %v4199 = vpop.f32.mrb[0].mxu0
        %v4200 = vadd.f32 0.0, %v4199
        %v4201 = vpop.f32.mrb[0].mxu0
        %v4202 = vadd.f32 0.0, %v4201
        %v4203 = vpop.f32.mrb[0].mxu0
        %v4204 = vpop.f32.mrb[0].mxu0
        %4205 = vdwg.mxu0
        %4206 = vmatprep.subr.bf16.mxu0 %v4052
        %4207 = vmatpush1.bf16.xpose.msra.mxu0 %v4051
        %4208 = vmatprep.subr.bf16.mxu0 %v4054
        %4209 = vmatpush1.bf16.xpose.msra.mxu0 %v4053
        %4210 = vmatprep.subr.bf16.mxu0 %v4056
        %4211 = vmatpush1.bf16.xpose.msra.mxu0 %v4055
        %4212 = vmatprep.subr.bf16.mxu0 %v4058
        %4213 = vmatpush1.bf16.xpose.msra.mxu0 %v4057
        %4214 = vmatprep.subr.bf16.mxu0 %v4060
        %4215 = vmatpush1.bf16.xpose.msra.mxu0 %v4059
        %4216 = vmatprep.subr.bf16.mxu0 %v4062
        %4217 = vmatpush1.bf16.xpose.msra.mxu0 %v4061
        %4218 = vmatprep.subr.bf16.mxu0 %v4064
        %4219 = vmatpush1.bf16.xpose.msra.mxu0 %v4063
        %4220 = vmatprep.subr.bf16.mxu0 %v4066
        %4221 = vmatpush1.bf16.xpose.msra.mxu0 %v4065
        %4222 = vmatprep.subr.bf16.mxu0 %v4068
        %4223 = vmatpush1.bf16.xpose.msra.mxu0 %v4067
        %4224 = vmatprep.subr.bf16.mxu0 %v4070
        %4225 = vmatpush1.bf16.xpose.msra.mxu0 %v4069
        %4226 = vmatprep.subr.bf16.mxu0 %v4072
        %4227 = vmatpush1.bf16.xpose.msra.mxu0 %v4071
        %4228 = vmatprep.subr.bf16.mxu0 %v4074
        %4229 = vmatpush1.bf16.xpose.msra.mxu0 %v4073
        %4230 = vmatprep.subr.bf16.mxu0 %v4076
        %4231 = vmatpush1.bf16.xpose.msra.mxu0 %v4075
        %4232 = vmatprep.subr.bf16.mxu0 %v4078
        %4233 = vmatpush1.bf16.xpose.msra.mxu0 %v4077
        %4234 = vmatprep.subr.bf16.mxu0 %v4080
        %4235 = vmatpush1.bf16.xpose.msra.mxu0 %v4079
        %4236 = vmatprep.subr.bf16.mxu0 %v4082
        %4237 = vmatpush1.bf16.xpose.msra.mxu0 %v4081
        %4238 = vmatprep.mubr.bf16.mxu0 %v3954
        %4239 = vmatmul.mubr.bf16.gmra.mrb[0].mxu0 %v3953
        %v4240 = vpop.f32.mrb[0].mxu0
        %v4241 = vadd.f32 0.0, %v4240
        %v4242 = vpop.f32.mrb[0].mxu0
        %v4243 = vadd.f32 0.0, %v4242
        %v4244 = vpop.f32.mrb[0].mxu0
        %v4245 = vpop.f32.mrb[0].mxu0
        %4246 = vdwg.mxu0
        %v4247 = vunpack.c.l.bf16 %v302
        %v4248 = vunpack.c.h.bf16 %v302
        %v4249 = vunpack.c.l.bf16 %v303
        %v4250 = vunpack.c.h.bf16 %v303
        %v4251 = vunpack.c.l.bf16 %v304
        %v4252 = vunpack.c.h.bf16 %v304
        %v4253 = vunpack.c.l.bf16 %v305
        %v4254 = vunpack.c.h.bf16 %v305
        %v4255 = vadd.f32 %v4247, %v4118
        %v4256 = vadd.f32 %v4248, %v4120
        %v4257 = vadd.f32 %v4249, %v4159
        %v4258 = vadd.f32 %v4250, %v4161
        %v4259 = vadd.f32 %v4251, %v4200
        %v4260 = vadd.f32 %v4252, %v4202
        %v4261 = vadd.f32 %v4253, %v4241
        %v4262 = vadd.f32 %v4254, %v4243
        %4263 = vst [vmem:[%s300] sm:$0xff] %v4255
        %4264 = vst [vmem:[%s300 + $0x8] sm:$0xff] %v4256
        %4265 = vst [vmem:[%s300 + $0x10] sm:$0xff] %v4257
        %4266 = vst [vmem:[%s300 + $0x18] sm:$0xff] %v4258
        %4267 = vst [vmem:[%s300 + $0x20] sm:$0xff] %v4259
        %4268 = vst [vmem:[%s300 + $0x28] sm:$0xff] %v4260
        %4269 = vst [vmem:[%s300 + $0x30] sm:$0xff] %v4261
        %4270 = vst [vmem:[%s300 + $0x38] sm:$0xff] %v4262
        %s4271 = sand.u32 %s142, 1
        %s4272 = scalar_lea.sflag [#allocation4], %s4271
        %s4273 = sand.u32 %s142, 1
        %s4274 = smul.addr %s4273, 64
        %s4275 = scalar_lea.vmem [#allocation11], %s4274
        // Predicated region
        $region61: #{tpu_custom_call.1} parent=39 // pred_check
          %p4276 = pneg %p152
        $region62: #{tpu_custom_call.1} parent=39 // pred_check_branch
          %4278 = sbr.rel (%p4276) target = $region64
        $region63: #{tpu_custom_call.1} parent=39 // pred_region
          %s4280 = ssub.s32 1024, 1024
          %4281 = vsyncadd %s4272, %s4280
          %s4282 = smul.addr %s24, 8
          %s4283 = smul.addr %s4282, 128
          %s4284 = scalar_lea.hbm %s5, %s4283
          %s4285 = sshll.u32 %s4275, 4
          %s4286 = int_to_ptr.vmem [resolvable:$true] %s4285
          %4291 = dma.vmem_to_hbm [thread:$0]  %s4286, 1024, %s4284, %s4272, 256, 256, 16
        $region64: #{tpu_custom_call.1} parent=39 // pred_fallthru
          _
      $region40: #{tpu_custom_call.1} parent=5 // pred_fallthru
        _
      %p4292 = scmp.le.s32.totalorder 2, %s19
      // Predicated region
      $region65: #{tpu_custom_call.1} parent=5 // pred_check
        %p4293 = pneg %p4292
      $region66: #{tpu_custom_call.1} parent=5 // pred_check_branch
        %4295 = sbr.rel (%p4293) target = $region68
      $region67: #{tpu_custom_call.1} parent=5 // pred_region
        %s4296 = ssub.s32 %s19, 2
        // Predicated region
        $region69: #{tpu_custom_call.1} parent=67 // pred_check
          %p4297 = pneg %p158
        $region70: #{tpu_custom_call.1} parent=67 // pred_check_branch
          %4299 = sbr.rel (%p4297) target = $region72
        $region71: #{tpu_custom_call.1} parent=67 // pred_region
          %s4300 = sand.u32 %s143, 1
          %s4301 = scalar_lea.sflag [#allocation4], %s4300
          %s4302 = sand.u32 %s143, 1
          %s4303 = smul.addr %s4302, 64
          %s4304 = scalar_lea.vmem [#allocation11], %s4303
          %4305 = dma.done %s4301, 1024
        $region72: #{tpu_custom_call.1} parent=67 // pred_fallthru
          _
      $region68: #{tpu_custom_call.1} parent=5 // pred_fallthru
        _
    $region6: #{tpu_custom_call.1} parent=1 // loop_footer
      %s23 = sadd.s32 1, %s19
    $region7: #{tpu_custom_call.1} parent=1 // loop_footer_branch
      %18 = sbr.rel target = $region3
    $region8: #{tpu_custom_call.1} parent=1 // loop_exit
      _
    %4306 = vsyncpa [#allocation3], 1
    %s4307 = scalar_lea.sflag [#allocation3], 1
    %4308 = vsyncpa %s4307, 1
    %4309 = vsyncpa [#allocation6], 1
    %4310 = vsyncpa [#allocation9], 1
    %4311 = vsyncpa [#allocation4], 1
    %s4312 = scalar_lea.sflag [#allocation4], 1
    %4313 = vsyncpa %s4312, 1

</llo_original>
